<compile_context>
chip_gen: v6e
topology: v6e:2x2x1
jax: 0.10.0
libtpu: 0.0.40
codegen_flags: <defaults>
</compile_context>

<pallas_src>
import functools

import jax
import jax.numpy as jnp
from jax import lax
from jax.experimental import pallas as pl
from jax.experimental.pallas import tpu as pltpu

LANE = 128


def _round_up(v, m):
    return ((v + m - 1) // m) * m


# ----------------------------------------------------------------------------
# Fused kernel: conv1+ReLU -> conv2+ReLU -> flatten+linear, all in VMEM.
# ----------------------------------------------------------------------------
def _fused_convnet_kernel(x_ref, w1_ref, b1_ref, w2_ref, b2_ref,
                          wlp_ref, blp_ref, out_ref, xs_ref, a1_ref, *,
                          cin, ch, k1, k2, w_img, hw, l1, l2):
    nb = x_ref.shape[0]
    lxt = xs_ref.shape[1]
    chw = cin * hw

    # ---- stage NCHW-flat input block into zero-padded VMEM scratch ---------
    # The zero tail keeps all "junk" shifted-window reads finite (they are
    # masked later by zero rows in wlp).  Re-zeroed every grid step so the
    # batch axis is safely "parallel" (no reliance on step 0 running per core).
    xs_ref[:, :chw] = x_ref[...]
    xs_ref[:, chw:] = jnp.zeros((nb, lxt - chw), jnp.float32)

    # ---- conv1 (kxk, VALID, stride 1) + ReLU --------------------------------
    # (ci, ky, kx) outer / co inner: each unaligned shifted window is loaded
    # once and reused for all `ch` output channels; `ch` live accumulators
    # (initialised with the broadcast bias) give VALU ILP.
    acc1 = [jnp.full((nb, l1), b1_ref[co], jnp.float32) for co in range(ch)]
    for ci in range(cin):
        for ky in range(k1):
            for kx in range(k1):
                win = xs_ref[:, pl.ds(ci * hw + ky * w_img + kx, l1)]
                for co in range(ch):
                    wsc = w1_ref[((co * cin + ci) * k1 + ky) * k1 + kx]
                    acc1[co] = acc1[co] + wsc * win
    for co in range(ch):
        a1_ref[co] = jnp.maximum(acc1[co], 0.0)

    # ---- conv2 (kxk, VALID, 1 output channel) + ReLU ------------------------
    # k2 independent partial accumulators instead of one long serial add chain.
    parts = []
    for ky in range(k2):
        p = (jnp.full((nb, l2), b2_ref[0], jnp.float32) if ky == 0
             else jnp.zeros((nb, l2), jnp.float32))
        for ci in range(ch):
            for kx in range(k2):
                wsc = w2_ref[(ci * k2 + ky) * k2 + kx]
                p = p + wsc * a1_ref[ci, :, pl.ds(ky * w_img + kx, l2)]
        parts.append(p)
    acc2 = parts[0]
    for p in parts[1:]:
        acc2 = acc2 + p
    a2 = jnp.maximum(acc2, 0.0)        # (nb, l2); junk cols masked by zero wlp rows

    # ---- flatten + linear: one lane-dense MXU GEMM --------------------------
    # TODO(synk): on v6e/v7x, a bf16 cast of a2/wlp (f32 accumulate) would ~2x
    # MXU throughput; kept f32 here to hold the 1e-4 tolerance vs the reference.
    logits = jnp.dot(a2, wlp_ref[...], preferred_element_type=jnp.float32) + blp_ref[...]
    out_ref[...] = logits.astype(out_ref.dtype)


# ----------------------------------------------------------------------------
# One-time parameter preprocessing (hoisted out of the hot path).
# ----------------------------------------------------------------------------
def prepare_params(params, input_shape):
    w1, b1, w2, b2, wl, bl = params
    h, w = input_shape
    ch, cin, k1, _ = w1.shape
    co2, ch2, k2, _ = w2.shape
    assert co2 == 1 and ch2 == ch
    num_classes, f = wl.shape

    # VALID, stride-1 output sizes.
    h1, w1s = h - k1 + 1, w - k1 + 1
    h2, w2s = h1 - k2 + 1, w1s - k2 + 1
    assert f == h2 * w2s, "linear in_features must match VALID / stride-1 convs"
    hw = h * w

    # Padded flattened-spatial lengths (junk at row ends / tails, masked later).
    l2 = _round_up((h2 - 1) * w + w2s, LANE)                                # 256
    l1 = _round_up((k2 - 1) * w + (k2 - 1) + l2, LANE)                      # 384
    lxt = _round_up((cin - 1) * hw + (k1 - 1) * w + (k1 - 1) + l1, LANE)    # 1024
    kp = _round_up(num_classes, LANE)                                       # 128

    # Junk-masking invariants: valid conv2 outputs only ever read valid conv1
    # columns, and every shifted slice stays inside its (padded) buffer.
    assert (h1 - 1) * w + w1s <= l1
    assert (k2 - 1) * w + (k2 - 1) + l2 <= l1
    assert (cin - 1) * hw + (k1 - 1) * w + (k1 - 1) + l1 <= lxt

    w1f = w1.reshape(-1).astype(jnp.float32)   # (co, ci, ky, kx) flat -> SMEM scalars
    w2f = w2.reshape(-1).astype(jnp.float32)   # (ci, ky, kx) flat
    b1f = b1.astype(jnp.float32)
    b2f = b2.astype(jnp.float32)

    # Linear weight scattered to padded flat positions p = oy*W + ox; all other
    # rows stay zero so junk activation columns never contribute.
    rows = (jnp.arange(h2)[:, None] * w + jnp.arange(w2s)[None, :]).reshape(-1)
    wlp = jnp.zeros((l2, kp), jnp.float32).at[rows, :num_classes].set(
        wl.T.astype(jnp.float32))
    blp = jnp.zeros((1, kp), jnp.float32).at[0, :num_classes].set(
        bl.astype(jnp.float32))

    meta = dict(cin=cin, ch=ch, k1=k1, k2=k2, h=h, w=w, hw=hw,
                l1=l1, l2=l2, lxt=lxt, kp=kp, num_classes=num_classes)
    return (w1f, b1f, w2f, b2f, wlp, blp), meta


# ----------------------------------------------------------------------------
# Forward pass (matches ConvolutionalNet.forward)
# ----------------------------------------------------------------------------
def make_forward(meta, nb_max=256):
    # nb_max=256 keeps the per-step working set a few MiB: safe on v7x (64 MiB
    # physical VMEM) and leaves full double-buffering headroom on v5e/v6e.
    kern = functools.partial(
        _fused_convnet_kernel,
        cin=meta["cin"], ch=meta["ch"], k1=meta["k1"], k2=meta["k2"],
        w_img=meta["w"], hw=meta["hw"], l1=meta["l1"], l2=meta["l2"])

    smem = pl.BlockSpec(memory_space=pltpu.MemorySpace.SMEM)

    @jax.jit
    def forward(x, prepped):
        w1f, b1f, w2f, b2f, wlp, blp = prepped
        n = x.shape[0]
        chw = meta["cin"] * meta["hw"]

        # Pure reshape (metadata only): NCHW stays in its HBM layout.
        x2d = x.reshape(n, chw)

        nb = min(nb_max, _round_up(n, 8))     # batch tile, multiple of 8 sublanes
        n_pad = _round_up(n, nb)
        if n_pad != n:
            x2d = jnp.pad(x2d, ((0, n_pad - n), (0, 0)))
        grid = (n_pad // nb,)

        out_padded = pl.pallas_call(
            kern,
            out_shape=jax.ShapeDtypeStruct((n_pad, meta["kp"]), jnp.float32),
            grid=grid,
            in_specs=[
                pl.BlockSpec((nb, chw), lambda i: (i, 0)),              # input block
                smem, smem, smem, smem,                                 # conv scalars
                pl.BlockSpec((meta["l2"], meta["kp"]), lambda i: (0, 0)),  # wlp: resident
                pl.BlockSpec((1, meta["kp"]), lambda i: (0, 0)),           # blp: resident
            ],
            out_specs=pl.BlockSpec((nb, meta["kp"]), lambda i: (i, 0)),
            scratch_shapes=[
                pltpu.VMEM((nb, meta["lxt"]), jnp.float32),             # padded input
                pltpu.VMEM((meta["ch"], nb, meta["l1"]), jnp.float32),  # conv1 acts
            ],
            compiler_params=pltpu.CompilerParams(
                dimension_semantics=("parallel",),
                vmem_limit_bytes=32 * 1024 * 1024),
        )(x2d, w1f, b1f, w2f, b2f, wlp, blp)

        return out_padded[:n, :meta["num_classes"]]

    return forward


# ----------------------------------------------------------------------------
# Pure-JAX reference (for correctness check only)
# ----------------------------------------------------------------------------
def reference_forward(x, params):
    w1, b1, w2, b2, wl, bl = params
    dn = ("NCHW", "OIHW", "NCHW")
    y1 = lax.conv_general_dilated(x, w1, (1, 1), "VALID", dimension_numbers=dn)
    y1 = jnp.maximum(y1 + b1[None, :, None, None], 0.0)
    y2 = lax.conv_general_dilated(y1, w2, (1, 1), "VALID", dimension_numbers=dn)
    y2 = jnp.maximum(y2 + b2[None, :, None, None], 0.0)
    flat = y2.reshape(y2.shape[0], -1)
    return flat @ wl.T + bl


if __name__ == "__main__":
    # Small deterministic shapes consistent with the module defaults.
    N, CIN, H, W = 2, 3, 16, 16
    CH, K1, K2, NUM_CLASSES = 3, 3, 3, 2
    H1, W1 = H - K1 + 1, W - K1 + 1
    H2, W2 = H1 - K2 + 1, W1 - K2 + 1
    F = 1 * H2 * W2                               # conv2 has 1 output channel

    key = jax.random.PRNGKey(0)
    kx, kw1, kb1, kw2, kb2, kwl, kbl = jax.random.split(key, 7)

    x = jax.random.uniform(kx, (N, CIN, H, W), jnp.float32)

    def uinit(k, shape, fan_in):
        bound = 1.0 / float(fan_in) ** 0.5        # PyTorch-style default init
        return jax.random.uniform(k, shape, jnp.float32, -bound, bound)

    w1 = uinit(kw1, (CH, CIN, K1, K1), CIN * K1 * K1)
    b1 = uinit(kb1, (CH,), CIN * K1 * K1)
    w2 = uinit(kw2, (1, CH, K2, K2), CH * K2 * K2)
    b2 = uinit(kb2, (1,), CH * K2 * K2)
    wl = uinit(kwl, (NUM_CLASSES, F), F)
    bl = uinit(kbl, (NUM_CLASSES,), F)
    params = (w1, b1, w2, b2, wl, bl)

    prepped, meta = prepare_params(params, (H, W))
    forward = make_forward(meta)

    out = forward(x, prepped)
    out = jax.block_until_ready(out)

    ref = reference_forward(x, params)
    assert out.shape == (N, NUM_CLASSES), out.shape
    assert jnp.allclose(out, ref, atol=2e-4, rtol=2e-4), (out, ref)
    print("KERNEL_OK")
</pallas_src>

<mosaic_0001>
module attributes {stable_mosaic.version = 11 : i64} {
  func.func @_fused_convnet_kernel(%arg0: i32, %arg1: memref<8x768xf32, #tpu.memory_space<vmem>>, %arg2: memref<81xf32, #tpu.memory_space<smem>>, %arg3: memref<3xf32, #tpu.memory_space<smem>>, %arg4: memref<27xf32, #tpu.memory_space<smem>>, %arg5: memref<1xf32, #tpu.memory_space<smem>>, %arg6: memref<256x128xf32, #tpu.memory_space<vmem>>, %arg7: memref<1x128xf32, #tpu.memory_space<vmem>>, %arg8: memref<8x128xf32, #tpu.memory_space<vmem>>, %arg9: memref<8x1024xf32, #tpu.memory_space<vmem>>, %arg10: memref<3x8x384xf32, #tpu.memory_space<vmem>>) attributes {dimension_semantics = [#tpu.dimension_semantics<parallel>], iteration_bounds = array<i64: 1>, scalar_prefetch = 0 : i64, scratch_operands = 2 : i64, tpu.core_type = #tpu.core_type<tc>, window_params = [{transform_indices = @transform_0, window_bounds = array<i64: 8, 768>}, {transform_indices = @transform_1, window_bounds = array<i64: 81>}, {transform_indices = @transform_2, window_bounds = array<i64: 3>}, {transform_indices = @transform_3, window_bounds = array<i64: 27>}, {transform_indices = @transform_4, window_bounds = array<i64: 1>}, {pipeline_mode = #tpu.pipeline_mode<synchronous>, transform_indices = @transform_5, window_bounds = array<i64: 256, 128>}, {pipeline_mode = #tpu.pipeline_mode<synchronous>, transform_indices = @transform_6, window_bounds = array<i64: 1, 128>}, {transform_indices = @transform_7, window_bounds = array<i64: 8, 128>}]} {
    %c0 = arith.constant 0 : index
    %c0_0 = arith.constant 0 : index
    %0 = vector.load %arg1[%c0, %c0_0] : memref<8x768xf32, #tpu.memory_space<vmem>>, vector<8x768xf32>
    %c0_1 = arith.constant 0 : index
    %c0_2 = arith.constant 0 : index
    %1 = vector.load %arg9[%c0_1, %c0_2] : memref<8x1024xf32, #tpu.memory_space<vmem>>, vector<8x768xf32>
    tpu.vector_store %arg9[%c0_1, %c0_2], %0 {strides = array<i32>} : memref<8x1024xf32, #tpu.memory_space<vmem>>, vector<8x768xf32>,
    %cst = arith.constant 0.000000e+00 : f32
    %2 = vector.broadcast %cst : f32 to vector<8x256xf32>
    %c0_3 = arith.constant 0 : index
    %c768 = arith.constant 768 : index
    %3 = vector.load %arg9[%c0_3, %c768] : memref<8x1024xf32, #tpu.memory_space<vmem>>, vector<8x256xf32>
    tpu.vector_store %arg9[%c0_3, %c768], %2 {strides = array<i32>} : memref<8x1024xf32, #tpu.memory_space<vmem>>, vector<8x256xf32>,
    %c0_4 = arith.constant 0 : index
    %4 = memref.load %arg3[%c0_4] : memref<3xf32, #tpu.memory_space<smem>>
    %5 = vector.broadcast %4 : f32 to vector<8x384xf32>
    %c1 = arith.constant 1 : index
    %6 = memref.load %arg3[%c1] : memref<3xf32, #tpu.memory_space<smem>>
    %7 = vector.broadcast %6 : f32 to vector<8x384xf32>
    %c2 = arith.constant 2 : index
    %8 = memref.load %arg3[%c2] : memref<3xf32, #tpu.memory_space<smem>>
    %9 = vector.broadcast %8 : f32 to vector<8x384xf32>
    %c0_5 = arith.constant 0 : index
    %c0_6 = arith.constant 0 : index
    %10 = vector.load %arg9[%c0_5, %c0_6] : memref<8x1024xf32, #tpu.memory_space<vmem>>, vector<8x384xf32>
    %c0_7 = arith.constant 0 : index
    %11 = memref.load %arg2[%c0_7] : memref<81xf32, #tpu.memory_space<smem>>
    %12 = vector.broadcast %11 : f32 to vector<8x384xf32>
    %13 = arith.mulf %12, %10 : vector<8x384xf32>
    %14 = arith.addf %5, %13 : vector<8x384xf32>
    %c27 = arith.constant 27 : index
    %15 = memref.load %arg2[%c27] : memref<81xf32, #tpu.memory_space<smem>>
    %16 = vector.broadcast %15 : f32 to vector<8x384xf32>
    %17 = arith.mulf %16, %10 : vector<8x384xf32>
    %18 = arith.addf %7, %17 : vector<8x384xf32>
    %c54 = arith.constant 54 : index
    %19 = memref.load %arg2[%c54] : memref<81xf32, #tpu.memory_space<smem>>
    %20 = vector.broadcast %19 : f32 to vector<8x384xf32>
    %21 = arith.mulf %20, %10 : vector<8x384xf32>
    %22 = arith.addf %9, %21 : vector<8x384xf32>
    %c0_8 = arith.constant 0 : index
    %c1_9 = arith.constant 1 : index
    %23 = vector.load %arg9[%c0_8, %c1_9] : memref<8x1024xf32, #tpu.memory_space<vmem>>, vector<8x384xf32>
    %c1_10 = arith.constant 1 : index
    %24 = memref.load %arg2[%c1_10] : memref<81xf32, #tpu.memory_space<smem>>
    %25 = vector.broadcast %24 : f32 to vector<8x384xf32>
    %26 = arith.mulf %25, %23 : vector<8x384xf32>
    %27 = arith.addf %14, %26 : vector<8x384xf32>
    %c28 = arith.constant 28 : index
    %28 = memref.load %arg2[%c28] : memref<81xf32, #tpu.memory_space<smem>>
    %29 = vector.broadcast %28 : f32 to vector<8x384xf32>
    %30 = arith.mulf %29, %23 : vector<8x384xf32>
    %31 = arith.addf %18, %30 : vector<8x384xf32>
    %c55 = arith.constant 55 : index
    %32 = memref.load %arg2[%c55] : memref<81xf32, #tpu.memory_space<smem>>
    %33 = vector.broadcast %32 : f32 to vector<8x384xf32>
    %34 = arith.mulf %33, %23 : vector<8x384xf32>
    %35 = arith.addf %22, %34 : vector<8x384xf32>
    %c0_11 = arith.constant 0 : index
    %c2_12 = arith.constant 2 : index
    %36 = vector.load %arg9[%c0_11, %c2_12] : memref<8x1024xf32, #tpu.memory_space<vmem>>, vector<8x384xf32>
    %c2_13 = arith.constant 2 : index
    %37 = memref.load %arg2[%c2_13] : memref<81xf32, #tpu.memory_space<smem>>
    %38 = vector.broadcast %37 : f32 to vector<8x384xf32>
    %39 = arith.mulf %38, %36 : vector<8x384xf32>
    %40 = arith.addf %27, %39 : vector<8x384xf32>
    %c29 = arith.constant 29 : index
    %41 = memref.load %arg2[%c29] : memref<81xf32, #tpu.memory_space<smem>>
    %42 = vector.broadcast %41 : f32 to vector<8x384xf32>
    %43 = arith.mulf %42, %36 : vector<8x384xf32>
    %44 = arith.addf %31, %43 : vector<8x384xf32>
    %c56 = arith.constant 56 : index
    %45 = memref.load %arg2[%c56] : memref<81xf32, #tpu.memory_space<smem>>
    %46 = vector.broadcast %45 : f32 to vector<8x384xf32>
    %47 = arith.mulf %46, %36 : vector<8x384xf32>
    %48 = arith.addf %35, %47 : vector<8x384xf32>
    %c0_14 = arith.constant 0 : index
    %c16 = arith.constant 16 : index
    %49 = vector.load %arg9[%c0_14, %c16] : memref<8x1024xf32, #tpu.memory_space<vmem>>, vector<8x384xf32>
    %c3 = arith.constant 3 : index
    %50 = memref.load %arg2[%c3] : memref<81xf32, #tpu.memory_space<smem>>
    %51 = vector.broadcast %50 : f32 to vector<8x384xf32>
    %52 = arith.mulf %51, %49 : vector<8x384xf32>
    %53 = arith.addf %40, %52 : vector<8x384xf32>
    %c30 = arith.constant 30 : index
    %54 = memref.load %arg2[%c30] : memref<81xf32, #tpu.memory_space<smem>>
    %55 = vector.broadcast %54 : f32 to vector<8x384xf32>
    %56 = arith.mulf %55, %49 : vector<8x384xf32>
    %57 = arith.addf %44, %56 : vector<8x384xf32>
    %c57 = arith.constant 57 : index
    %58 = memref.load %arg2[%c57] : memref<81xf32, #tpu.memory_space<smem>>
    %59 = vector.broadcast %58 : f32 to vector<8x384xf32>
    %60 = arith.mulf %59, %49 : vector<8x384xf32>
    %61 = arith.addf %48, %60 : vector<8x384xf32>
    %c0_15 = arith.constant 0 : index
    %c17 = arith.constant 17 : index
    %62 = vector.load %arg9[%c0_15, %c17] : memref<8x1024xf32, #tpu.memory_space<vmem>>, vector<8x384xf32>
    %c4 = arith.constant 4 : index
    %63 = memref.load %arg2[%c4] : memref<81xf32, #tpu.memory_space<smem>>
    %64 = vector.broadcast %63 : f32 to vector<8x384xf32>
    %65 = arith.mulf %64, %62 : vector<8x384xf32>
    %66 = arith.addf %53, %65 : vector<8x384xf32>
    %c31 = arith.constant 31 : index
    %67 = memref.load %arg2[%c31] : memref<81xf32, #tpu.memory_space<smem>>
    %68 = vector.broadcast %67 : f32 to vector<8x384xf32>
    %69 = arith.mulf %68, %62 : vector<8x384xf32>
    %70 = arith.addf %57, %69 : vector<8x384xf32>
    %c58 = arith.constant 58 : index
    %71 = memref.load %arg2[%c58] : memref<81xf32, #tpu.memory_space<smem>>
    %72 = vector.broadcast %71 : f32 to vector<8x384xf32>
    %73 = arith.mulf %72, %62 : vector<8x384xf32>
    %74 = arith.addf %61, %73 : vector<8x384xf32>
    %c0_16 = arith.constant 0 : index
    %c18 = arith.constant 18 : index
    %75 = vector.load %arg9[%c0_16, %c18] : memref<8x1024xf32, #tpu.memory_space<vmem>>, vector<8x384xf32>
    %c5 = arith.constant 5 : index
    %76 = memref.load %arg2[%c5] : memref<81xf32, #tpu.memory_space<smem>>
    %77 = vector.broadcast %76 : f32 to vector<8x384xf32>
    %78 = arith.mulf %77, %75 : vector<8x384xf32>
    %79 = arith.addf %66, %78 : vector<8x384xf32>
    %c32 = arith.constant 32 : index
    %80 = memref.load %arg2[%c32] : memref<81xf32, #tpu.memory_space<smem>>
    %81 = vector.broadcast %80 : f32 to vector<8x384xf32>
    %82 = arith.mulf %81, %75 : vector<8x384xf32>
    %83 = arith.addf %70, %82 : vector<8x384xf32>
    %c59 = arith.constant 59 : index
    %84 = memref.load %arg2[%c59] : memref<81xf32, #tpu.memory_space<smem>>
    %85 = vector.broadcast %84 : f32 to vector<8x384xf32>
    %86 = arith.mulf %85, %75 : vector<8x384xf32>
    %87 = arith.addf %74, %86 : vector<8x384xf32>
    %c0_17 = arith.constant 0 : index
    %c32_18 = arith.constant 32 : index
    %88 = vector.load %arg9[%c0_17, %c32_18] : memref<8x1024xf32, #tpu.memory_space<vmem>>, vector<8x384xf32>
    %c6 = arith.constant 6 : index
    %89 = memref.load %arg2[%c6] : memref<81xf32, #tpu.memory_space<smem>>
    %90 = vector.broadcast %89 : f32 to vector<8x384xf32>
    %91 = arith.mulf %90, %88 : vector<8x384xf32>
    %92 = arith.addf %79, %91 : vector<8x384xf32>
    %c33 = arith.constant 33 : index
    %93 = memref.load %arg2[%c33] : memref<81xf32, #tpu.memory_space<smem>>
    %94 = vector.broadcast %93 : f32 to vector<8x384xf32>
    %95 = arith.mulf %94, %88 : vector<8x384xf32>
    %96 = arith.addf %83, %95 : vector<8x384xf32>
    %c60 = arith.constant 60 : index
    %97 = memref.load %arg2[%c60] : memref<81xf32, #tpu.memory_space<smem>>
    %98 = vector.broadcast %97 : f32 to vector<8x384xf32>
    %99 = arith.mulf %98, %88 : vector<8x384xf32>
    %100 = arith.addf %87, %99 : vector<8x384xf32>
    %c0_19 = arith.constant 0 : index
    %c33_20 = arith.constant 33 : index
    %101 = vector.load %arg9[%c0_19, %c33_20] : memref<8x1024xf32, #tpu.memory_space<vmem>>, vector<8x384xf32>
    %c7 = arith.constant 7 : index
    %102 = memref.load %arg2[%c7] : memref<81xf32, #tpu.memory_space<smem>>
    %103 = vector.broadcast %102 : f32 to vector<8x384xf32>
    %104 = arith.mulf %103, %101 : vector<8x384xf32>
    %105 = arith.addf %92, %104 : vector<8x384xf32>
    %c34 = arith.constant 34 : index
    %106 = memref.load %arg2[%c34] : memref<81xf32, #tpu.memory_space<smem>>
    %107 = vector.broadcast %106 : f32 to vector<8x384xf32>
    %108 = arith.mulf %107, %101 : vector<8x384xf32>
    %109 = arith.addf %96, %108 : vector<8x384xf32>
    %c61 = arith.constant 61 : index
    %110 = memref.load %arg2[%c61] : memref<81xf32, #tpu.memory_space<smem>>
    %111 = vector.broadcast %110 : f32 to vector<8x384xf32>
    %112 = arith.mulf %111, %101 : vector<8x384xf32>
    %113 = arith.addf %100, %112 : vector<8x384xf32>
    %c0_21 = arith.constant 0 : index
    %c34_22 = arith.constant 34 : index
    %114 = vector.load %arg9[%c0_21, %c34_22] : memref<8x1024xf32, #tpu.memory_space<vmem>>, vector<8x384xf32>
    %c8 = arith.constant 8 : index
    %115 = memref.load %arg2[%c8] : memref<81xf32, #tpu.memory_space<smem>>
    %116 = vector.broadcast %115 : f32 to vector<8x384xf32>
    %117 = arith.mulf %116, %114 : vector<8x384xf32>
    %118 = arith.addf %105, %117 : vector<8x384xf32>
    %c35 = arith.constant 35 : index
    %119 = memref.load %arg2[%c35] : memref<81xf32, #tpu.memory_space<smem>>
    %120 = vector.broadcast %119 : f32 to vector<8x384xf32>
    %121 = arith.mulf %120, %114 : vector<8x384xf32>
    %122 = arith.addf %109, %121 : vector<8x384xf32>
    %c62 = arith.constant 62 : index
    %123 = memref.load %arg2[%c62] : memref<81xf32, #tpu.memory_space<smem>>
    %124 = vector.broadcast %123 : f32 to vector<8x384xf32>
    %125 = arith.mulf %124, %114 : vector<8x384xf32>
    %126 = arith.addf %113, %125 : vector<8x384xf32>
    %c0_23 = arith.constant 0 : index
    %c256 = arith.constant 256 : index
    %127 = vector.load %arg9[%c0_23, %c256] : memref<8x1024xf32, #tpu.memory_space<vmem>>, vector<8x384xf32>
    %c9 = arith.constant 9 : index
    %128 = memref.load %arg2[%c9] : memref<81xf32, #tpu.memory_space<smem>>
    %129 = vector.broadcast %128 : f32 to vector<8x384xf32>
    %130 = arith.mulf %129, %127 : vector<8x384xf32>
    %131 = arith.addf %118, %130 : vector<8x384xf32>
    %c36 = arith.constant 36 : index
    %132 = memref.load %arg2[%c36] : memref<81xf32, #tpu.memory_space<smem>>
    %133 = vector.broadcast %132 : f32 to vector<8x384xf32>
    %134 = arith.mulf %133, %127 : vector<8x384xf32>
    %135 = arith.addf %122, %134 : vector<8x384xf32>
    %c63 = arith.constant 63 : index
    %136 = memref.load %arg2[%c63] : memref<81xf32, #tpu.memory_space<smem>>
    %137 = vector.broadcast %136 : f32 to vector<8x384xf32>
    %138 = arith.mulf %137, %127 : vector<8x384xf32>
    %139 = arith.addf %126, %138 : vector<8x384xf32>
    %c0_24 = arith.constant 0 : index
    %c257 = arith.constant 257 : index
    %140 = vector.load %arg9[%c0_24, %c257] : memref<8x1024xf32, #tpu.memory_space<vmem>>, vector<8x384xf32>
    %c10 = arith.constant 10 : index
    %141 = memref.load %arg2[%c10] : memref<81xf32, #tpu.memory_space<smem>>
    %142 = vector.broadcast %141 : f32 to vector<8x384xf32>
    %143 = arith.mulf %142, %140 : vector<8x384xf32>
    %144 = arith.addf %131, %143 : vector<8x384xf32>
    %c37 = arith.constant 37 : index
    %145 = memref.load %arg2[%c37] : memref<81xf32, #tpu.memory_space<smem>>
    %146 = vector.broadcast %145 : f32 to vector<8x384xf32>
    %147 = arith.mulf %146, %140 : vector<8x384xf32>
    %148 = arith.addf %135, %147 : vector<8x384xf32>
    %c64 = arith.constant 64 : index
    %149 = memref.load %arg2[%c64] : memref<81xf32, #tpu.memory_space<smem>>
    %150 = vector.broadcast %149 : f32 to vector<8x384xf32>
    %151 = arith.mulf %150, %140 : vector<8x384xf32>
    %152 = arith.addf %139, %151 : vector<8x384xf32>
    %c0_25 = arith.constant 0 : index
    %c258 = arith.constant 258 : index
    %153 = vector.load %arg9[%c0_25, %c258] : memref<8x1024xf32, #tpu.memory_space<vmem>>, vector<8x384xf32>
    %c11 = arith.constant 11 : index
    %154 = memref.load %arg2[%c11] : memref<81xf32, #tpu.memory_space<smem>>
    %155 = vector.broadcast %154 : f32 to vector<8x384xf32>
    %156 = arith.mulf %155, %153 : vector<8x384xf32>
    %157 = arith.addf %144, %156 : vector<8x384xf32>
    %c38 = arith.constant 38 : index
    %158 = memref.load %arg2[%c38] : memref<81xf32, #tpu.memory_space<smem>>
    %159 = vector.broadcast %158 : f32 to vector<8x384xf32>
    %160 = arith.mulf %159, %153 : vector<8x384xf32>
    %161 = arith.addf %148, %160 : vector<8x384xf32>
    %c65 = arith.constant 65 : index
    %162 = memref.load %arg2[%c65] : memref<81xf32, #tpu.memory_space<smem>>
    %163 = vector.broadcast %162 : f32 to vector<8x384xf32>
    %164 = arith.mulf %163, %153 : vector<8x384xf32>
    %165 = arith.addf %152, %164 : vector<8x384xf32>
    %c0_26 = arith.constant 0 : index
    %c272 = arith.constant 272 : index
    %166 = vector.load %arg9[%c0_26, %c272] : memref<8x1024xf32, #tpu.memory_space<vmem>>, vector<8x384xf32>
    %c12 = arith.constant 12 : index
    %167 = memref.load %arg2[%c12] : memref<81xf32, #tpu.memory_space<smem>>
    %168 = vector.broadcast %167 : f32 to vector<8x384xf32>
    %169 = arith.mulf %168, %166 : vector<8x384xf32>
    %170 = arith.addf %157, %169 : vector<8x384xf32>
    %c39 = arith.constant 39 : index
    %171 = memref.load %arg2[%c39] : memref<81xf32, #tpu.memory_space<smem>>
    %172 = vector.broadcast %171 : f32 to vector<8x384xf32>
    %173 = arith.mulf %172, %166 : vector<8x384xf32>
    %174 = arith.addf %161, %173 : vector<8x384xf32>
    %c66 = arith.constant 66 : index
    %175 = memref.load %arg2[%c66] : memref<81xf32, #tpu.memory_space<smem>>
    %176 = vector.broadcast %175 : f32 to vector<8x384xf32>
    %177 = arith.mulf %176, %166 : vector<8x384xf32>
    %178 = arith.addf %165, %177 : vector<8x384xf32>
    %c0_27 = arith.constant 0 : index
    %c273 = arith.constant 273 : index
    %179 = vector.load %arg9[%c0_27, %c273] : memref<8x1024xf32, #tpu.memory_space<vmem>>, vector<8x384xf32>
    %c13 = arith.constant 13 : index
    %180 = memref.load %arg2[%c13] : memref<81xf32, #tpu.memory_space<smem>>
    %181 = vector.broadcast %180 : f32 to vector<8x384xf32>
    %182 = arith.mulf %181, %179 : vector<8x384xf32>
    %183 = arith.addf %170, %182 : vector<8x384xf32>
    %c40 = arith.constant 40 : index
    %184 = memref.load %arg2[%c40] : memref<81xf32, #tpu.memory_space<smem>>
    %185 = vector.broadcast %184 : f32 to vector<8x384xf32>
    %186 = arith.mulf %185, %179 : vector<8x384xf32>
    %187 = arith.addf %174, %186 : vector<8x384xf32>
    %c67 = arith.constant 67 : index
    %188 = memref.load %arg2[%c67] : memref<81xf32, #tpu.memory_space<smem>>
    %189 = vector.broadcast %188 : f32 to vector<8x384xf32>
    %190 = arith.mulf %189, %179 : vector<8x384xf32>
    %191 = arith.addf %178, %190 : vector<8x384xf32>
    %c0_28 = arith.constant 0 : index
    %c274 = arith.constant 274 : index
    %192 = vector.load %arg9[%c0_28, %c274] : memref<8x1024xf32, #tpu.memory_space<vmem>>, vector<8x384xf32>
    %c14 = arith.constant 14 : index
    %193 = memref.load %arg2[%c14] : memref<81xf32, #tpu.memory_space<smem>>
    %194 = vector.broadcast %193 : f32 to vector<8x384xf32>
    %195 = arith.mulf %194, %192 : vector<8x384xf32>
    %196 = arith.addf %183, %195 : vector<8x384xf32>
    %c41 = arith.constant 41 : index
    %197 = memref.load %arg2[%c41] : memref<81xf32, #tpu.memory_space<smem>>
    %198 = vector.broadcast %197 : f32 to vector<8x384xf32>
    %199 = arith.mulf %198, %192 : vector<8x384xf32>
    %200 = arith.addf %187, %199 : vector<8x384xf32>
    %c68 = arith.constant 68 : index
    %201 = memref.load %arg2[%c68] : memref<81xf32, #tpu.memory_space<smem>>
    %202 = vector.broadcast %201 : f32 to vector<8x384xf32>
    %203 = arith.mulf %202, %192 : vector<8x384xf32>
    %204 = arith.addf %191, %203 : vector<8x384xf32>
    %c0_29 = arith.constant 0 : index
    %c288 = arith.constant 288 : index
    %205 = vector.load %arg9[%c0_29, %c288] : memref<8x1024xf32, #tpu.memory_space<vmem>>, vector<8x384xf32>
    %c15 = arith.constant 15 : index
    %206 = memref.load %arg2[%c15] : memref<81xf32, #tpu.memory_space<smem>>
    %207 = vector.broadcast %206 : f32 to vector<8x384xf32>
    %208 = arith.mulf %207, %205 : vector<8x384xf32>
    %209 = arith.addf %196, %208 : vector<8x384xf32>
    %c42 = arith.constant 42 : index
    %210 = memref.load %arg2[%c42] : memref<81xf32, #tpu.memory_space<smem>>
    %211 = vector.broadcast %210 : f32 to vector<8x384xf32>
    %212 = arith.mulf %211, %205 : vector<8x384xf32>
    %213 = arith.addf %200, %212 : vector<8x384xf32>
    %c69 = arith.constant 69 : index
    %214 = memref.load %arg2[%c69] : memref<81xf32, #tpu.memory_space<smem>>
    %215 = vector.broadcast %214 : f32 to vector<8x384xf32>
    %216 = arith.mulf %215, %205 : vector<8x384xf32>
    %217 = arith.addf %204, %216 : vector<8x384xf32>
    %c0_30 = arith.constant 0 : index
    %c289 = arith.constant 289 : index
    %218 = vector.load %arg9[%c0_30, %c289] : memref<8x1024xf32, #tpu.memory_space<vmem>>, vector<8x384xf32>
    %c16_31 = arith.constant 16 : index
    %219 = memref.load %arg2[%c16_31] : memref<81xf32, #tpu.memory_space<smem>>
    %220 = vector.broadcast %219 : f32 to vector<8x384xf32>
    %221 = arith.mulf %220, %218 : vector<8x384xf32>
    %222 = arith.addf %209, %221 : vector<8x384xf32>
    %c43 = arith.constant 43 : index
    %223 = memref.load %arg2[%c43] : memref<81xf32, #tpu.memory_space<smem>>
    %224 = vector.broadcast %223 : f32 to vector<8x384xf32>
    %225 = arith.mulf %224, %218 : vector<8x384xf32>
    %226 = arith.addf %213, %225 : vector<8x384xf32>
    %c70 = arith.constant 70 : index
    %227 = memref.load %arg2[%c70] : memref<81xf32, #tpu.memory_space<smem>>
    %228 = vector.broadcast %227 : f32 to vector<8x384xf32>
    %229 = arith.mulf %228, %218 : vector<8x384xf32>
    %230 = arith.addf %217, %229 : vector<8x384xf32>
    %c0_32 = arith.constant 0 : index
    %c290 = arith.constant 290 : index
    %231 = vector.load %arg9[%c0_32, %c290] : memref<8x1024xf32, #tpu.memory_space<vmem>>, vector<8x384xf32>
    %c17_33 = arith.constant 17 : index
    %232 = memref.load %arg2[%c17_33] : memref<81xf32, #tpu.memory_space<smem>>
    %233 = vector.broadcast %232 : f32 to vector<8x384xf32>
    %234 = arith.mulf %233, %231 : vector<8x384xf32>
    %235 = arith.addf %222, %234 : vector<8x384xf32>
    %c44 = arith.constant 44 : index
    %236 = memref.load %arg2[%c44] : memref<81xf32, #tpu.memory_space<smem>>
    %237 = vector.broadcast %236 : f32 to vector<8x384xf32>
    %238 = arith.mulf %237, %231 : vector<8x384xf32>
    %239 = arith.addf %226, %238 : vector<8x384xf32>
    %c71 = arith.constant 71 : index
    %240 = memref.load %arg2[%c71] : memref<81xf32, #tpu.memory_space<smem>>
    %241 = vector.broadcast %240 : f32 to vector<8x384xf32>
    %242 = arith.mulf %241, %231 : vector<8x384xf32>
    %243 = arith.addf %230, %242 : vector<8x384xf32>
    %c0_34 = arith.constant 0 : index
    %c512 = arith.constant 512 : index
    %244 = vector.load %arg9[%c0_34, %c512] : memref<8x1024xf32, #tpu.memory_space<vmem>>, vector<8x384xf32>
    %c18_35 = arith.constant 18 : index
    %245 = memref.load %arg2[%c18_35] : memref<81xf32, #tpu.memory_space<smem>>
    %246 = vector.broadcast %245 : f32 to vector<8x384xf32>
    %247 = arith.mulf %246, %244 : vector<8x384xf32>
    %248 = arith.addf %235, %247 : vector<8x384xf32>
    %c45 = arith.constant 45 : index
    %249 = memref.load %arg2[%c45] : memref<81xf32, #tpu.memory_space<smem>>
    %250 = vector.broadcast %249 : f32 to vector<8x384xf32>
    %251 = arith.mulf %250, %244 : vector<8x384xf32>
    %252 = arith.addf %239, %251 : vector<8x384xf32>
    %c72 = arith.constant 72 : index
    %253 = memref.load %arg2[%c72] : memref<81xf32, #tpu.memory_space<smem>>
    %254 = vector.broadcast %253 : f32 to vector<8x384xf32>
    %255 = arith.mulf %254, %244 : vector<8x384xf32>
    %256 = arith.addf %243, %255 : vector<8x384xf32>
    %c0_36 = arith.constant 0 : index
    %c513 = arith.constant 513 : index
    %257 = vector.load %arg9[%c0_36, %c513] : memref<8x1024xf32, #tpu.memory_space<vmem>>, vector<8x384xf32>
    %c19 = arith.constant 19 : index
    %258 = memref.load %arg2[%c19] : memref<81xf32, #tpu.memory_space<smem>>
    %259 = vector.broadcast %258 : f32 to vector<8x384xf32>
    %260 = arith.mulf %259, %257 : vector<8x384xf32>
    %261 = arith.addf %248, %260 : vector<8x384xf32>
    %c46 = arith.constant 46 : index
    %262 = memref.load %arg2[%c46] : memref<81xf32, #tpu.memory_space<smem>>
    %263 = vector.broadcast %262 : f32 to vector<8x384xf32>
    %264 = arith.mulf %263, %257 : vector<8x384xf32>
    %265 = arith.addf %252, %264 : vector<8x384xf32>
    %c73 = arith.constant 73 : index
    %266 = memref.load %arg2[%c73] : memref<81xf32, #tpu.memory_space<smem>>
    %267 = vector.broadcast %266 : f32 to vector<8x384xf32>
    %268 = arith.mulf %267, %257 : vector<8x384xf32>
    %269 = arith.addf %256, %268 : vector<8x384xf32>
    %c0_37 = arith.constant 0 : index
    %c514 = arith.constant 514 : index
    %270 = vector.load %arg9[%c0_37, %c514] : memref<8x1024xf32, #tpu.memory_space<vmem>>, vector<8x384xf32>
    %c20 = arith.constant 20 : index
    %271 = memref.load %arg2[%c20] : memref<81xf32, #tpu.memory_space<smem>>
    %272 = vector.broadcast %271 : f32 to vector<8x384xf32>
    %273 = arith.mulf %272, %270 : vector<8x384xf32>
    %274 = arith.addf %261, %273 : vector<8x384xf32>
    %c47 = arith.constant 47 : index
    %275 = memref.load %arg2[%c47] : memref<81xf32, #tpu.memory_space<smem>>
    %276 = vector.broadcast %275 : f32 to vector<8x384xf32>
    %277 = arith.mulf %276, %270 : vector<8x384xf32>
    %278 = arith.addf %265, %277 : vector<8x384xf32>
    %c74 = arith.constant 74 : index
    %279 = memref.load %arg2[%c74] : memref<81xf32, #tpu.memory_space<smem>>
    %280 = vector.broadcast %279 : f32 to vector<8x384xf32>
    %281 = arith.mulf %280, %270 : vector<8x384xf32>
    %282 = arith.addf %269, %281 : vector<8x384xf32>
    %c0_38 = arith.constant 0 : index
    %c528 = arith.constant 528 : index
    %283 = vector.load %arg9[%c0_38, %c528] : memref<8x1024xf32, #tpu.memory_space<vmem>>, vector<8x384xf32>
    %c21 = arith.constant 21 : index
    %284 = memref.load %arg2[%c21] : memref<81xf32, #tpu.memory_space<smem>>
    %285 = vector.broadcast %284 : f32 to vector<8x384xf32>
    %286 = arith.mulf %285, %283 : vector<8x384xf32>
    %287 = arith.addf %274, %286 : vector<8x384xf32>
    %c48 = arith.constant 48 : index
    %288 = memref.load %arg2[%c48] : memref<81xf32, #tpu.memory_space<smem>>
    %289 = vector.broadcast %288 : f32 to vector<8x384xf32>
    %290 = arith.mulf %289, %283 : vector<8x384xf32>
    %291 = arith.addf %278, %290 : vector<8x384xf32>
    %c75 = arith.constant 75 : index
    %292 = memref.load %arg2[%c75] : memref<81xf32, #tpu.memory_space<smem>>
    %293 = vector.broadcast %292 : f32 to vector<8x384xf32>
    %294 = arith.mulf %293, %283 : vector<8x384xf32>
    %295 = arith.addf %282, %294 : vector<8x384xf32>
    %c0_39 = arith.constant 0 : index
    %c529 = arith.constant 529 : index
    %296 = vector.load %arg9[%c0_39, %c529] : memref<8x1024xf32, #tpu.memory_space<vmem>>, vector<8x384xf32>
    %c22 = arith.constant 22 : index
    %297 = memref.load %arg2[%c22] : memref<81xf32, #tpu.memory_space<smem>>
    %298 = vector.broadcast %297 : f32 to vector<8x384xf32>
    %299 = arith.mulf %298, %296 : vector<8x384xf32>
    %300 = arith.addf %287, %299 : vector<8x384xf32>
    %c49 = arith.constant 49 : index
    %301 = memref.load %arg2[%c49] : memref<81xf32, #tpu.memory_space<smem>>
    %302 = vector.broadcast %301 : f32 to vector<8x384xf32>
    %303 = arith.mulf %302, %296 : vector<8x384xf32>
    %304 = arith.addf %291, %303 : vector<8x384xf32>
    %c76 = arith.constant 76 : index
    %305 = memref.load %arg2[%c76] : memref<81xf32, #tpu.memory_space<smem>>
    %306 = vector.broadcast %305 : f32 to vector<8x384xf32>
    %307 = arith.mulf %306, %296 : vector<8x384xf32>
    %308 = arith.addf %295, %307 : vector<8x384xf32>
    %c0_40 = arith.constant 0 : index
    %c530 = arith.constant 530 : index
    %309 = vector.load %arg9[%c0_40, %c530] : memref<8x1024xf32, #tpu.memory_space<vmem>>, vector<8x384xf32>
    %c23 = arith.constant 23 : index
    %310 = memref.load %arg2[%c23] : memref<81xf32, #tpu.memory_space<smem>>
    %311 = vector.broadcast %310 : f32 to vector<8x384xf32>
    %312 = arith.mulf %311, %309 : vector<8x384xf32>
    %313 = arith.addf %300, %312 : vector<8x384xf32>
    %c50 = arith.constant 50 : index
    %314 = memref.load %arg2[%c50] : memref<81xf32, #tpu.memory_space<smem>>
    %315 = vector.broadcast %314 : f32 to vector<8x384xf32>
    %316 = arith.mulf %315, %309 : vector<8x384xf32>
    %317 = arith.addf %304, %316 : vector<8x384xf32>
    %c77 = arith.constant 77 : index
    %318 = memref.load %arg2[%c77] : memref<81xf32, #tpu.memory_space<smem>>
    %319 = vector.broadcast %318 : f32 to vector<8x384xf32>
    %320 = arith.mulf %319, %309 : vector<8x384xf32>
    %321 = arith.addf %308, %320 : vector<8x384xf32>
    %c0_41 = arith.constant 0 : index
    %c544 = arith.constant 544 : index
    %322 = vector.load %arg9[%c0_41, %c544] : memref<8x1024xf32, #tpu.memory_space<vmem>>, vector<8x384xf32>
    %c24 = arith.constant 24 : index
    %323 = memref.load %arg2[%c24] : memref<81xf32, #tpu.memory_space<smem>>
    %324 = vector.broadcast %323 : f32 to vector<8x384xf32>
    %325 = arith.mulf %324, %322 : vector<8x384xf32>
    %326 = arith.addf %313, %325 : vector<8x384xf32>
    %c51 = arith.constant 51 : index
    %327 = memref.load %arg2[%c51] : memref<81xf32, #tpu.memory_space<smem>>
    %328 = vector.broadcast %327 : f32 to vector<8x384xf32>
    %329 = arith.mulf %328, %322 : vector<8x384xf32>
    %330 = arith.addf %317, %329 : vector<8x384xf32>
    %c78 = arith.constant 78 : index
    %331 = memref.load %arg2[%c78] : memref<81xf32, #tpu.memory_space<smem>>
    %332 = vector.broadcast %331 : f32 to vector<8x384xf32>
    %333 = arith.mulf %332, %322 : vector<8x384xf32>
    %334 = arith.addf %321, %333 : vector<8x384xf32>
    %c0_42 = arith.constant 0 : index
    %c545 = arith.constant 545 : index
    %335 = vector.load %arg9[%c0_42, %c545] : memref<8x1024xf32, #tpu.memory_space<vmem>>, vector<8x384xf32>
    %c25 = arith.constant 25 : index
    %336 = memref.load %arg2[%c25] : memref<81xf32, #tpu.memory_space<smem>>
    %337 = vector.broadcast %336 : f32 to vector<8x384xf32>
    %338 = arith.mulf %337, %335 : vector<8x384xf32>
    %339 = arith.addf %326, %338 : vector<8x384xf32>
    %c52 = arith.constant 52 : index
    %340 = memref.load %arg2[%c52] : memref<81xf32, #tpu.memory_space<smem>>
    %341 = vector.broadcast %340 : f32 to vector<8x384xf32>
    %342 = arith.mulf %341, %335 : vector<8x384xf32>
    %343 = arith.addf %330, %342 : vector<8x384xf32>
    %c79 = arith.constant 79 : index
    %344 = memref.load %arg2[%c79] : memref<81xf32, #tpu.memory_space<smem>>
    %345 = vector.broadcast %344 : f32 to vector<8x384xf32>
    %346 = arith.mulf %345, %335 : vector<8x384xf32>
    %347 = arith.addf %334, %346 : vector<8x384xf32>
    %c0_43 = arith.constant 0 : index
    %c546 = arith.constant 546 : index
    %348 = vector.load %arg9[%c0_43, %c546] : memref<8x1024xf32, #tpu.memory_space<vmem>>, vector<8x384xf32>
    %c26 = arith.constant 26 : index
    %349 = memref.load %arg2[%c26] : memref<81xf32, #tpu.memory_space<smem>>
    %350 = vector.broadcast %349 : f32 to vector<8x384xf32>
    %351 = arith.mulf %350, %348 : vector<8x384xf32>
    %352 = arith.addf %339, %351 : vector<8x384xf32>
    %c53 = arith.constant 53 : index
    %353 = memref.load %arg2[%c53] : memref<81xf32, #tpu.memory_space<smem>>
    %354 = vector.broadcast %353 : f32 to vector<8x384xf32>
    %355 = arith.mulf %354, %348 : vector<8x384xf32>
    %356 = arith.addf %343, %355 : vector<8x384xf32>
    %c80 = arith.constant 80 : index
    %357 = memref.load %arg2[%c80] : memref<81xf32, #tpu.memory_space<smem>>
    %358 = vector.broadcast %357 : f32 to vector<8x384xf32>
    %359 = arith.mulf %358, %348 : vector<8x384xf32>
    %360 = arith.addf %347, %359 : vector<8x384xf32>
    %cst_44 = arith.constant 0.000000e+00 : f32
    %361 = vector.broadcast %cst_44 : f32 to vector<8x384xf32>
    %362 = arith.maximumf %352, %361 : vector<8x384xf32>
    %c0_45 = arith.constant 0 : index
    %c0_46 = arith.constant 0 : index
    %c0_47 = arith.constant 0 : index
    %363 = vector.load %arg10[%c0_45, %c0_46, %c0_47] : memref<3x8x384xf32, #tpu.memory_space<vmem>>, vector<1x8x384xf32>
    %364 = vector.shape_cast %363 : vector<1x8x384xf32> to vector<8x384xf32>
    %365 = vector.shape_cast %362 : vector<8x384xf32> to vector<1x8x384xf32>
    tpu.vector_store %arg10[%c0_45, %c0_46, %c0_47], %365 {strides = array<i32>} : memref<3x8x384xf32, #tpu.memory_space<vmem>>, vector<1x8x384xf32>,
    %cst_48 = arith.constant 0.000000e+00 : f32
    %366 = vector.broadcast %cst_48 : f32 to vector<8x384xf32>
    %367 = arith.maximumf %356, %366 : vector<8x384xf32>
    %c1_49 = arith.constant 1 : index
    %c0_50 = arith.constant 0 : index
    %c0_51 = arith.constant 0 : index
    %368 = vector.load %arg10[%c1_49, %c0_50, %c0_51] : memref<3x8x384xf32, #tpu.memory_space<vmem>>, vector<1x8x384xf32>
    %369 = vector.shape_cast %368 : vector<1x8x384xf32> to vector<8x384xf32>
    %370 = vector.shape_cast %367 : vector<8x384xf32> to vector<1x8x384xf32>
    tpu.vector_store %arg10[%c1_49, %c0_50, %c0_51], %370 {strides = array<i32>} : memref<3x8x384xf32, #tpu.memory_space<vmem>>, vector<1x8x384xf32>,
    %cst_52 = arith.constant 0.000000e+00 : f32
    %371 = vector.broadcast %cst_52 : f32 to vector<8x384xf32>
    %372 = arith.maximumf %360, %371 : vector<8x384xf32>
    %c2_53 = arith.constant 2 : index
    %c0_54 = arith.constant 0 : index
    %c0_55 = arith.constant 0 : index
    %373 = vector.load %arg10[%c2_53, %c0_54, %c0_55] : memref<3x8x384xf32, #tpu.memory_space<vmem>>, vector<1x8x384xf32>
    %374 = vector.shape_cast %373 : vector<1x8x384xf32> to vector<8x384xf32>
    %375 = vector.shape_cast %372 : vector<8x384xf32> to vector<1x8x384xf32>
    tpu.vector_store %arg10[%c2_53, %c0_54, %c0_55], %375 {strides = array<i32>} : memref<3x8x384xf32, #tpu.memory_space<vmem>>, vector<1x8x384xf32>,
    %c0_56 = arith.constant 0 : index
    %376 = memref.load %arg5[%c0_56] : memref<1xf32, #tpu.memory_space<smem>>
    %377 = vector.broadcast %376 : f32 to vector<8x256xf32>
    %c0_57 = arith.constant 0 : index
    %378 = memref.load %arg4[%c0_57] : memref<27xf32, #tpu.memory_space<smem>>
    %c0_58 = arith.constant 0 : index
    %c0_59 = arith.constant 0 : index
    %c0_60 = arith.constant 0 : index
    %379 = vector.load %arg10[%c0_58, %c0_59, %c0_60] : memref<3x8x384xf32, #tpu.memory_space<vmem>>, vector<1x8x256xf32>
    %380 = vector.shape_cast %379 : vector<1x8x256xf32> to vector<8x256xf32>
    %381 = vector.broadcast %378 : f32 to vector<8x256xf32>
    %382 = arith.mulf %381, %380 : vector<8x256xf32>
    %383 = arith.addf %377, %382 : vector<8x256xf32>
    %c1_61 = arith.constant 1 : index
    %384 = memref.load %arg4[%c1_61] : memref<27xf32, #tpu.memory_space<smem>>
    %c0_62 = arith.constant 0 : index
    %c0_63 = arith.constant 0 : index
    %c1_64 = arith.constant 1 : index
    %385 = vector.load %arg10[%c0_62, %c0_63, %c1_64] : memref<3x8x384xf32, #tpu.memory_space<vmem>>, vector<1x8x256xf32>
    %386 = vector.shape_cast %385 : vector<1x8x256xf32> to vector<8x256xf32>
    %387 = vector.broadcast %384 : f32 to vector<8x256xf32>
    %388 = arith.mulf %387, %386 : vector<8x256xf32>
    %389 = arith.addf %383, %388 : vector<8x256xf32>
    %c2_65 = arith.constant 2 : index
    %390 = memref.load %arg4[%c2_65] : memref<27xf32, #tpu.memory_space<smem>>
    %c0_66 = arith.constant 0 : index
    %c0_67 = arith.constant 0 : index
    %c2_68 = arith.constant 2 : index
    %391 = vector.load %arg10[%c0_66, %c0_67, %c2_68] : memref<3x8x384xf32, #tpu.memory_space<vmem>>, vector<1x8x256xf32>
    %392 = vector.shape_cast %391 : vector<1x8x256xf32> to vector<8x256xf32>
    %393 = vector.broadcast %390 : f32 to vector<8x256xf32>
    %394 = arith.mulf %393, %392 : vector<8x256xf32>
    %395 = arith.addf %389, %394 : vector<8x256xf32>
    %c9_69 = arith.constant 9 : index
    %396 = memref.load %arg4[%c9_69] : memref<27xf32, #tpu.memory_space<smem>>
    %c1_70 = arith.constant 1 : index
    %c0_71 = arith.constant 0 : index
    %c0_72 = arith.constant 0 : index
    %397 = vector.load %arg10[%c1_70, %c0_71, %c0_72] : memref<3x8x384xf32, #tpu.memory_space<vmem>>, vector<1x8x256xf32>
    %398 = vector.shape_cast %397 : vector<1x8x256xf32> to vector<8x256xf32>
    %399 = vector.broadcast %396 : f32 to vector<8x256xf32>
    %400 = arith.mulf %399, %398 : vector<8x256xf32>
    %401 = arith.addf %395, %400 : vector<8x256xf32>
    %c10_73 = arith.constant 10 : index
    %402 = memref.load %arg4[%c10_73] : memref<27xf32, #tpu.memory_space<smem>>
    %c1_74 = arith.constant 1 : index
    %c0_75 = arith.constant 0 : index
    %c1_76 = arith.constant 1 : index
    %403 = vector.load %arg10[%c1_74, %c0_75, %c1_76] : memref<3x8x384xf32, #tpu.memory_space<vmem>>, vector<1x8x256xf32>
    %404 = vector.shape_cast %403 : vector<1x8x256xf32> to vector<8x256xf32>
    %405 = vector.broadcast %402 : f32 to vector<8x256xf32>
    %406 = arith.mulf %405, %404 : vector<8x256xf32>
    %407 = arith.addf %401, %406 : vector<8x256xf32>
    %c11_77 = arith.constant 11 : index
    %408 = memref.load %arg4[%c11_77] : memref<27xf32, #tpu.memory_space<smem>>
    %c1_78 = arith.constant 1 : index
    %c0_79 = arith.constant 0 : index
    %c2_80 = arith.constant 2 : index
    %409 = vector.load %arg10[%c1_78, %c0_79, %c2_80] : memref<3x8x384xf32, #tpu.memory_space<vmem>>, vector<1x8x256xf32>
    %410 = vector.shape_cast %409 : vector<1x8x256xf32> to vector<8x256xf32>
    %411 = vector.broadcast %408 : f32 to vector<8x256xf32>
    %412 = arith.mulf %411, %410 : vector<8x256xf32>
    %413 = arith.addf %407, %412 : vector<8x256xf32>
    %c18_81 = arith.constant 18 : index
    %414 = memref.load %arg4[%c18_81] : memref<27xf32, #tpu.memory_space<smem>>
    %c2_82 = arith.constant 2 : index
    %c0_83 = arith.constant 0 : index
    %c0_84 = arith.constant 0 : index
    %415 = vector.load %arg10[%c2_82, %c0_83, %c0_84] : memref<3x8x384xf32, #tpu.memory_space<vmem>>, vector<1x8x256xf32>
    %416 = vector.shape_cast %415 : vector<1x8x256xf32> to vector<8x256xf32>
    %417 = vector.broadcast %414 : f32 to vector<8x256xf32>
    %418 = arith.mulf %417, %416 : vector<8x256xf32>
    %419 = arith.addf %413, %418 : vector<8x256xf32>
    %c19_85 = arith.constant 19 : index
    %420 = memref.load %arg4[%c19_85] : memref<27xf32, #tpu.memory_space<smem>>
    %c2_86 = arith.constant 2 : index
    %c0_87 = arith.constant 0 : index
    %c1_88 = arith.constant 1 : index
    %421 = vector.load %arg10[%c2_86, %c0_87, %c1_88] : memref<3x8x384xf32, #tpu.memory_space<vmem>>, vector<1x8x256xf32>
    %422 = vector.shape_cast %421 : vector<1x8x256xf32> to vector<8x256xf32>
    %423 = vector.broadcast %420 : f32 to vector<8x256xf32>
    %424 = arith.mulf %423, %422 : vector<8x256xf32>
    %425 = arith.addf %419, %424 : vector<8x256xf32>
    %c20_89 = arith.constant 20 : index
    %426 = memref.load %arg4[%c20_89] : memref<27xf32, #tpu.memory_space<smem>>
    %c2_90 = arith.constant 2 : index
    %c0_91 = arith.constant 0 : index
    %c2_92 = arith.constant 2 : index
    %427 = vector.load %arg10[%c2_90, %c0_91, %c2_92] : memref<3x8x384xf32, #tpu.memory_space<vmem>>, vector<1x8x256xf32>
    %428 = vector.shape_cast %427 : vector<1x8x256xf32> to vector<8x256xf32>
    %429 = vector.broadcast %426 : f32 to vector<8x256xf32>
    %430 = arith.mulf %429, %428 : vector<8x256xf32>
    %431 = arith.addf %425, %430 : vector<8x256xf32>
    %cst_93 = arith.constant 0.000000e+00 : f32
    %432 = vector.broadcast %cst_93 : f32 to vector<8x256xf32>
    %c3_94 = arith.constant 3 : index
    %433 = memref.load %arg4[%c3_94] : memref<27xf32, #tpu.memory_space<smem>>
    %c0_95 = arith.constant 0 : index
    %c0_96 = arith.constant 0 : index
    %c16_97 = arith.constant 16 : index
    %434 = vector.load %arg10[%c0_95, %c0_96, %c16_97] : memref<3x8x384xf32, #tpu.memory_space<vmem>>, vector<1x8x256xf32>
    %435 = vector.shape_cast %434 : vector<1x8x256xf32> to vector<8x256xf32>
    %436 = vector.broadcast %433 : f32 to vector<8x256xf32>
    %437 = arith.mulf %436, %435 : vector<8x256xf32>
    %438 = arith.addf %432, %437 : vector<8x256xf32>
    %c4_98 = arith.constant 4 : index
    %439 = memref.load %arg4[%c4_98] : memref<27xf32, #tpu.memory_space<smem>>
    %c0_99 = arith.constant 0 : index
    %c0_100 = arith.constant 0 : index
    %c17_101 = arith.constant 17 : index
    %440 = vector.load %arg10[%c0_99, %c0_100, %c17_101] : memref<3x8x384xf32, #tpu.memory_space<vmem>>, vector<1x8x256xf32>
    %441 = vector.shape_cast %440 : vector<1x8x256xf32> to vector<8x256xf32>
    %442 = vector.broadcast %439 : f32 to vector<8x256xf32>
    %443 = arith.mulf %442, %441 : vector<8x256xf32>
    %444 = arith.addf %438, %443 : vector<8x256xf32>
    %c5_102 = arith.constant 5 : index
    %445 = memref.load %arg4[%c5_102] : memref<27xf32, #tpu.memory_space<smem>>
    %c0_103 = arith.constant 0 : index
    %c0_104 = arith.constant 0 : index
    %c18_105 = arith.constant 18 : index
    %446 = vector.load %arg10[%c0_103, %c0_104, %c18_105] : memref<3x8x384xf32, #tpu.memory_space<vmem>>, vector<1x8x256xf32>
    %447 = vector.shape_cast %446 : vector<1x8x256xf32> to vector<8x256xf32>
    %448 = vector.broadcast %445 : f32 to vector<8x256xf32>
    %449 = arith.mulf %448, %447 : vector<8x256xf32>
    %450 = arith.addf %444, %449 : vector<8x256xf32>
    %c12_106 = arith.constant 12 : index
    %451 = memref.load %arg4[%c12_106] : memref<27xf32, #tpu.memory_space<smem>>
    %c1_107 = arith.constant 1 : index
    %c0_108 = arith.constant 0 : index
    %c16_109 = arith.constant 16 : index
    %452 = vector.load %arg10[%c1_107, %c0_108, %c16_109] : memref<3x8x384xf32, #tpu.memory_space<vmem>>, vector<1x8x256xf32>
    %453 = vector.shape_cast %452 : vector<1x8x256xf32> to vector<8x256xf32>
    %454 = vector.broadcast %451 : f32 to vector<8x256xf32>
    %455 = arith.mulf %454, %453 : vector<8x256xf32>
    %456 = arith.addf %450, %455 : vector<8x256xf32>
    %c13_110 = arith.constant 13 : index
    %457 = memref.load %arg4[%c13_110] : memref<27xf32, #tpu.memory_space<smem>>
    %c1_111 = arith.constant 1 : index
    %c0_112 = arith.constant 0 : index
    %c17_113 = arith.constant 17 : index
    %458 = vector.load %arg10[%c1_111, %c0_112, %c17_113] : memref<3x8x384xf32, #tpu.memory_space<vmem>>, vector<1x8x256xf32>
    %459 = vector.shape_cast %458 : vector<1x8x256xf32> to vector<8x256xf32>
    %460 = vector.broadcast %457 : f32 to vector<8x256xf32>
    %461 = arith.mulf %460, %459 : vector<8x256xf32>
    %462 = arith.addf %456, %461 : vector<8x256xf32>
    %c14_114 = arith.constant 14 : index
    %463 = memref.load %arg4[%c14_114] : memref<27xf32, #tpu.memory_space<smem>>
    %c1_115 = arith.constant 1 : index
    %c0_116 = arith.constant 0 : index
    %c18_117 = arith.constant 18 : index
    %464 = vector.load %arg10[%c1_115, %c0_116, %c18_117] : memref<3x8x384xf32, #tpu.memory_space<vmem>>, vector<1x8x256xf32>
    %465 = vector.shape_cast %464 : vector<1x8x256xf32> to vector<8x256xf32>
    %466 = vector.broadcast %463 : f32 to vector<8x256xf32>
    %467 = arith.mulf %466, %465 : vector<8x256xf32>
    %468 = arith.addf %462, %467 : vector<8x256xf32>
    %c21_118 = arith.constant 21 : index
    %469 = memref.load %arg4[%c21_118] : memref<27xf32, #tpu.memory_space<smem>>
    %c2_119 = arith.constant 2 : index
    %c0_120 = arith.constant 0 : index
    %c16_121 = arith.constant 16 : index
    %470 = vector.load %arg10[%c2_119, %c0_120, %c16_121] : memref<3x8x384xf32, #tpu.memory_space<vmem>>, vector<1x8x256xf32>
    %471 = vector.shape_cast %470 : vector<1x8x256xf32> to vector<8x256xf32>
    %472 = vector.broadcast %469 : f32 to vector<8x256xf32>
    %473 = arith.mulf %472, %471 : vector<8x256xf32>
    %474 = arith.addf %468, %473 : vector<8x256xf32>
    %c22_122 = arith.constant 22 : index
    %475 = memref.load %arg4[%c22_122] : memref<27xf32, #tpu.memory_space<smem>>
    %c2_123 = arith.constant 2 : index
    %c0_124 = arith.constant 0 : index
    %c17_125 = arith.constant 17 : index
    %476 = vector.load %arg10[%c2_123, %c0_124, %c17_125] : memref<3x8x384xf32, #tpu.memory_space<vmem>>, vector<1x8x256xf32>
    %477 = vector.shape_cast %476 : vector<1x8x256xf32> to vector<8x256xf32>
    %478 = vector.broadcast %475 : f32 to vector<8x256xf32>
    %479 = arith.mulf %478, %477 : vector<8x256xf32>
    %480 = arith.addf %474, %479 : vector<8x256xf32>
    %c23_126 = arith.constant 23 : index
    %481 = memref.load %arg4[%c23_126] : memref<27xf32, #tpu.memory_space<smem>>
    %c2_127 = arith.constant 2 : index
    %c0_128 = arith.constant 0 : index
    %c18_129 = arith.constant 18 : index
    %482 = vector.load %arg10[%c2_127, %c0_128, %c18_129] : memref<3x8x384xf32, #tpu.memory_space<vmem>>, vector<1x8x256xf32>
    %483 = vector.shape_cast %482 : vector<1x8x256xf32> to vector<8x256xf32>
    %484 = vector.broadcast %481 : f32 to vector<8x256xf32>
    %485 = arith.mulf %484, %483 : vector<8x256xf32>
    %486 = arith.addf %480, %485 : vector<8x256xf32>
    %cst_130 = arith.constant 0.000000e+00 : f32
    %487 = vector.broadcast %cst_130 : f32 to vector<8x256xf32>
    %c6_131 = arith.constant 6 : index
    %488 = memref.load %arg4[%c6_131] : memref<27xf32, #tpu.memory_space<smem>>
    %c0_132 = arith.constant 0 : index
    %c0_133 = arith.constant 0 : index
    %c32_134 = arith.constant 32 : index
    %489 = vector.load %arg10[%c0_132, %c0_133, %c32_134] : memref<3x8x384xf32, #tpu.memory_space<vmem>>, vector<1x8x256xf32>
    %490 = vector.shape_cast %489 : vector<1x8x256xf32> to vector<8x256xf32>
    %491 = vector.broadcast %488 : f32 to vector<8x256xf32>
    %492 = arith.mulf %491, %490 : vector<8x256xf32>
    %493 = arith.addf %487, %492 : vector<8x256xf32>
    %c7_135 = arith.constant 7 : index
    %494 = memref.load %arg4[%c7_135] : memref<27xf32, #tpu.memory_space<smem>>
    %c0_136 = arith.constant 0 : index
    %c0_137 = arith.constant 0 : index
    %c33_138 = arith.constant 33 : index
    %495 = vector.load %arg10[%c0_136, %c0_137, %c33_138] : memref<3x8x384xf32, #tpu.memory_space<vmem>>, vector<1x8x256xf32>
    %496 = vector.shape_cast %495 : vector<1x8x256xf32> to vector<8x256xf32>
    %497 = vector.broadcast %494 : f32 to vector<8x256xf32>
    %498 = arith.mulf %497, %496 : vector<8x256xf32>
    %499 = arith.addf %493, %498 : vector<8x256xf32>
    %c8_139 = arith.constant 8 : index
    %500 = memref.load %arg4[%c8_139] : memref<27xf32, #tpu.memory_space<smem>>
    %c0_140 = arith.constant 0 : index
    %c0_141 = arith.constant 0 : index
    %c34_142 = arith.constant 34 : index
    %501 = vector.load %arg10[%c0_140, %c0_141, %c34_142] : memref<3x8x384xf32, #tpu.memory_space<vmem>>, vector<1x8x256xf32>
    %502 = vector.shape_cast %501 : vector<1x8x256xf32> to vector<8x256xf32>
    %503 = vector.broadcast %500 : f32 to vector<8x256xf32>
    %504 = arith.mulf %503, %502 : vector<8x256xf32>
    %505 = arith.addf %499, %504 : vector<8x256xf32>
    %c15_143 = arith.constant 15 : index
    %506 = memref.load %arg4[%c15_143] : memref<27xf32, #tpu.memory_space<smem>>
    %c1_144 = arith.constant 1 : index
    %c0_145 = arith.constant 0 : index
    %c32_146 = arith.constant 32 : index
    %507 = vector.load %arg10[%c1_144, %c0_145, %c32_146] : memref<3x8x384xf32, #tpu.memory_space<vmem>>, vector<1x8x256xf32>
    %508 = vector.shape_cast %507 : vector<1x8x256xf32> to vector<8x256xf32>
    %509 = vector.broadcast %506 : f32 to vector<8x256xf32>
    %510 = arith.mulf %509, %508 : vector<8x256xf32>
    %511 = arith.addf %505, %510 : vector<8x256xf32>
    %c16_147 = arith.constant 16 : index
    %512 = memref.load %arg4[%c16_147] : memref<27xf32, #tpu.memory_space<smem>>
    %c1_148 = arith.constant 1 : index
    %c0_149 = arith.constant 0 : index
    %c33_150 = arith.constant 33 : index
    %513 = vector.load %arg10[%c1_148, %c0_149, %c33_150] : memref<3x8x384xf32, #tpu.memory_space<vmem>>, vector<1x8x256xf32>
    %514 = vector.shape_cast %513 : vector<1x8x256xf32> to vector<8x256xf32>
    %515 = vector.broadcast %512 : f32 to vector<8x256xf32>
    %516 = arith.mulf %515, %514 : vector<8x256xf32>
    %517 = arith.addf %511, %516 : vector<8x256xf32>
    %c17_151 = arith.constant 17 : index
    %518 = memref.load %arg4[%c17_151] : memref<27xf32, #tpu.memory_space<smem>>
    %c1_152 = arith.constant 1 : index
    %c0_153 = arith.constant 0 : index
    %c34_154 = arith.constant 34 : index
    %519 = vector.load %arg10[%c1_152, %c0_153, %c34_154] : memref<3x8x384xf32, #tpu.memory_space<vmem>>, vector<1x8x256xf32>
    %520 = vector.shape_cast %519 : vector<1x8x256xf32> to vector<8x256xf32>
    %521 = vector.broadcast %518 : f32 to vector<8x256xf32>
    %522 = arith.mulf %521, %520 : vector<8x256xf32>
    %523 = arith.addf %517, %522 : vector<8x256xf32>
    %c24_155 = arith.constant 24 : index
    %524 = memref.load %arg4[%c24_155] : memref<27xf32, #tpu.memory_space<smem>>
    %c2_156 = arith.constant 2 : index
    %c0_157 = arith.constant 0 : index
    %c32_158 = arith.constant 32 : index
    %525 = vector.load %arg10[%c2_156, %c0_157, %c32_158] : memref<3x8x384xf32, #tpu.memory_space<vmem>>, vector<1x8x256xf32>
    %526 = vector.shape_cast %525 : vector<1x8x256xf32> to vector<8x256xf32>
    %527 = vector.broadcast %524 : f32 to vector<8x256xf32>
    %528 = arith.mulf %527, %526 : vector<8x256xf32>
    %529 = arith.addf %523, %528 : vector<8x256xf32>
    %c25_159 = arith.constant 25 : index
    %530 = memref.load %arg4[%c25_159] : memref<27xf32, #tpu.memory_space<smem>>
    %c2_160 = arith.constant 2 : index
    %c0_161 = arith.constant 0 : index
    %c33_162 = arith.constant 33 : index
    %531 = vector.load %arg10[%c2_160, %c0_161, %c33_162] : memref<3x8x384xf32, #tpu.memory_space<vmem>>, vector<1x8x256xf32>
    %532 = vector.shape_cast %531 : vector<1x8x256xf32> to vector<8x256xf32>
    %533 = vector.broadcast %530 : f32 to vector<8x256xf32>
    %534 = arith.mulf %533, %532 : vector<8x256xf32>
    %535 = arith.addf %529, %534 : vector<8x256xf32>
    %c26_163 = arith.constant 26 : index
    %536 = memref.load %arg4[%c26_163] : memref<27xf32, #tpu.memory_space<smem>>
    %c2_164 = arith.constant 2 : index
    %c0_165 = arith.constant 0 : index
    %c34_166 = arith.constant 34 : index
    %537 = vector.load %arg10[%c2_164, %c0_165, %c34_166] : memref<3x8x384xf32, #tpu.memory_space<vmem>>, vector<1x8x256xf32>
    %538 = vector.shape_cast %537 : vector<1x8x256xf32> to vector<8x256xf32>
    %539 = vector.broadcast %536 : f32 to vector<8x256xf32>
    %540 = arith.mulf %539, %538 : vector<8x256xf32>
    %541 = arith.addf %535, %540 : vector<8x256xf32>
    %542 = arith.addf %431, %486 : vector<8x256xf32>
    %543 = arith.addf %542, %541 : vector<8x256xf32>
    %cst_167 = arith.constant 0.000000e+00 : f32
    %544 = vector.broadcast %cst_167 : f32 to vector<8x256xf32>
    %545 = arith.maximumf %543, %544 : vector<8x256xf32>
    %c0_168 = arith.constant 0 : index
    %c0_169 = arith.constant 0 : index
    %546 = vector.load %arg6[%c0_168, %c0_169] : memref<256x128xf32, #tpu.memory_space<vmem>>, vector<256x128xf32>
    %cst_170 = arith.constant dense<0.000000e+00> : vector<8x128xf32>
    %547 = tpu.matmul %545, %546, %cst_170 {dimension_numbers = #tpu.dot_dimension_numbers<[1], [0], [0], [1], [0, 0, 1, 1], [], []>} : vector<8x256xf32>, vector<256x128xf32>, vector<8x128xf32> -> vector<8x128xf32>
    %c0_171 = arith.constant 0 : index
    %c0_172 = arith.constant 0 : index
    %548 = vector.load %arg7[%c0_171, %c0_172] : memref<1x128xf32, #tpu.memory_space<vmem>>, vector<1x128xf32>
    %549 = vector.broadcast %548 : vector<1x128xf32> to vector<8x128xf32>
    %550 = arith.addf %547, %549 : vector<8x128xf32>
    %c0_173 = arith.constant 0 : index
    %c0_174 = arith.constant 0 : index
    %551 = vector.load %arg8[%c0_173, %c0_174] : memref<8x128xf32, #tpu.memory_space<vmem>>, vector<8x128xf32>
    tpu.vector_store %arg8[%c0_173, %c0_174], %550 {strides = array<i32>} : memref<8x128xf32, #tpu.memory_space<vmem>>, vector<8x128xf32>,
    return
  }
  func.func @transform_0(%arg0: i32) -> (i32, i32) {
    %c0_i32 = arith.constant 0 : i32
    %c0_i32_0 = arith.constant 0 : i32
    return %arg0, %c0_i32 : i32, i32
  }
  func.func @transform_1(%arg0: i32) -> i32 {
    %c0_i32 = arith.constant 0 : i32
    %c0_i32_0 = arith.constant 0 : i32
    return %c0_i32 : i32
  }
  func.func @transform_2(%arg0: i32) -> i32 {
    %c0_i32 = arith.constant 0 : i32
    %c0_i32_0 = arith.constant 0 : i32
    return %c0_i32 : i32
  }
  func.func @transform_3(%arg0: i32) -> i32 {
    %c0_i32 = arith.constant 0 : i32
    %c0_i32_0 = arith.constant 0 : i32
    return %c0_i32 : i32
  }
  func.func @transform_4(%arg0: i32) -> i32 {
    %c0_i32 = arith.constant 0 : i32
    %c0_i32_0 = arith.constant 0 : i32
    return %c0_i32 : i32
  }
  func.func @transform_5(%arg0: i32) -> (i32, i32) {
    %c0_i32 = arith.constant 0 : i32
    %c0_i32_0 = arith.constant 0 : i32
    %c0_i32_1 = arith.constant 0 : i32
    return %c0_i32, %c0_i32_0 : i32, i32
  }
  func.func @transform_6(%arg0: i32) -> (i32, i32) {
    %c0_i32 = arith.constant 0 : i32
    %c0_i32_0 = arith.constant 0 : i32
    %c0_i32_1 = arith.constant 0 : i32
    return %c0_i32, %c0_i32_0 : i32, i32
  }
  func.func @transform_7(%arg0: i32) -> (i32, i32) {
    %c0_i32 = arith.constant 0 : i32
    %c0_i32_0 = arith.constant 0 : i32
    return %arg0, %c0_i32 : i32, i32
  }
}

</mosaic_0001>

<llo_original>
// kernel: forward.1
$region0: #{forward.1}
  #allocation0 [shape = 'u32[]', space=smem, size = 0x4, offset = 0x4, fixed_abs, tag = 'smem constant byte address 0x4 - core index']
  #allocation1 [shape = 'u32[144,128]{1,0:T(1,128)}', space=vmem, size = 0x12000, scoped, tag = 'internal scratch']
  #allocation2 [shape = 'f32[8,1024]{1,0:T(8,128)}', space=vmem, size = 0x8000, scoped, tag = 'scratch operand']
  #allocation3 [shape = 'f32[3,8,384]{2,1,0:T(8,128)}', space=vmem, size = 0x9000, scoped, tag = 'scratch operand']
  #allocation4 [shape = 'f32[1]{0:T(128)S(6)}', space=smem, size = 0x200, scoped, tag = 'scoped memory for forward.1']
  %s0 = inlined_call_operand.vmem [shape: f32[8,768], index: 0, kind: input, shape index: {}]
  %s1 = inlined_call_operand.vmem [shape: f32[81], index: 1, kind: input, shape index: {}]
  %s2 = inlined_call_operand.vmem [shape: f32[3], index: 2, kind: input, shape index: {}]
  %s3 = inlined_call_operand.vmem [shape: f32[27], index: 3, kind: input, shape index: {}]
  %s4 = inlined_call_operand.<no memory space> [shape: f32[1], index: 4, kind: input, shape index: {}]
  %s5 = inlined_call_operand.hbm [shape: f32[256,128], index: 5, kind: input, shape index: {}]
  %s6 = inlined_call_operand.vmem [shape: f32[1,128], index: 6, kind: input, shape index: {}]
  %s7 = inlined_call_operand.vmem [shape: f32[8,128], index: 7, kind: output, shape index: {}]
  %s8 = sld [smem:[#allocation0]]
  $region54: #{forward.1} parent=0
    _
  %s10 = ssub.s32 1, %s8
  %s11 = scalar_select 0, %s10, %s8
  %12 = sst [smem:[#allocation4]] %s4
  $region1: #{forward.1} parent=0
    #allocation5 [shape = 'u8[512]{0}', space=smem, size = 0x200, scoped, tag = 'input window, operand 1, single buffered']
    #allocation6 [shape = 's32[1]{0}', space=sflag, size = 0x4, scoped, tag = 'scoped memory for forward.1']
    #allocation7 [shape = 's32[1]{0}', space=sflag, size = 0x4, scoped, tag = 'scoped memory for forward.1']
    #allocation8 [shape = 'u8[512]{0}', space=smem, size = 0x200, scoped, tag = 'input window, operand 2, single buffered']
    #allocation9 [shape = 's32[1]{0}', space=sflag, size = 0x4, scoped, tag = 'scoped memory for forward.1']
    #allocation10 [shape = 'u8[512]{0}', space=smem, size = 0x200, scoped, tag = 'input window, operand 3, single buffered']
    #allocation11 [shape = 'u8[131072]{0}', space=vmem, size = 0x20000, scoped, tag = 'input window, operand 5, single buffered']
    %13 = vsyncpa [#allocation7], 0
    %14 = vsyncpa [#allocation9], 0
    %15 = vsyncpa [#allocation6], 0
    // Predicated region
    $region2: #{forward.1} parent=1 // pred_check
      _
    $region3: #{forward.1} parent=1 // pred_check_branch
      %17 = sbr.rel (0) target = $region5
    $region4: #{forward.1} parent=1 // pred_region
      _
    $region5: #{forward.1} parent=1 // pred_fallthru
      _
    // Predicated region
    $region6: #{forward.1} parent=1 // pred_check
      _
    $region7: #{forward.1} parent=1 // pred_check_branch
      %19 = sbr.rel (0) target = $region9
    $region8: #{forward.1} parent=1 // pred_region
      %s21 = ssub.s32 16, 16
      %22 = vsyncadd [#allocation7], %s21
      %s24 = sshll.u32 %s1, 4
      %s25 = int_to_ptr.vmem [resolvable:$true] %s24
      %27 = dma.vmem_to_smem %s25, 16, [#allocation5], [#allocation7]
    $region9: #{forward.1} parent=1 // pred_fallthru
      _
    // Predicated region
    $region10: #{forward.1} parent=1 // pred_check
      _
    $region11: #{forward.1} parent=1 // pred_check_branch
      %29 = sbr.rel (0) target = $region13
    $region12: #{forward.1} parent=1 // pred_region
      %s31 = ssub.s32 16, 16
      %32 = vsyncadd [#allocation9], %s31
      %s34 = sshll.u32 %s2, 4
      %s35 = int_to_ptr.vmem [resolvable:$true] %s34
      %37 = dma.vmem_to_smem %s35, 16, [#allocation8], [#allocation9]
    $region13: #{forward.1} parent=1 // pred_fallthru
      _
    // Predicated region
    $region14: #{forward.1} parent=1 // pred_check
      _
    $region15: #{forward.1} parent=1 // pred_check_branch
      %39 = sbr.rel (0) target = $region17
    $region16: #{forward.1} parent=1 // pred_region
      %s41 = ssub.s32 16, 16
      %42 = vsyncadd [#allocation9], %s41
      %s44 = sshll.u32 %s3, 4
      %s45 = int_to_ptr.vmem [resolvable:$true] %s44
      %47 = dma.vmem_to_smem %s45, 16, [#allocation10], [#allocation9]
    $region17: #{forward.1} parent=1 // pred_fallthru
      _
    // Predicated region
    $region18: #{forward.1} parent=1 // pred_check
      _
    $region19: #{forward.1} parent=1 // pred_check_branch
      %49 = sbr.rel (0) target = $region21
    $region20: #{forward.1} parent=1 // pred_region
      _
    $region21: #{forward.1} parent=1 // pred_fallthru
      _
    // Predicated region
    $region22: #{forward.1} parent=1 // pred_check
      _
    $region23: #{forward.1} parent=1 // pred_check_branch
      %51 = sbr.rel (0) target = $region25
    $region24: #{forward.1} parent=1 // pred_region
      %s53 = ssub.s32 4096, 4096
      %54 = vsyncadd [#allocation6], %s53
      %s55 = sshll.u32 [#allocation11], 4
      %s56 = int_to_ptr.vmem [resolvable:$true] %s55
      %61 = dma.hbm_to_vmem [thread:$0]  %s5, 4096, %s56, [#allocation6], 128, 128, 8
    $region25: #{forward.1} parent=1 // pred_fallthru
      _
    // Predicated region
    $region26: #{forward.1} parent=1 // pred_check
      _
    $region27: #{forward.1} parent=1 // pred_check_branch
      %63 = sbr.rel (0) target = $region29
    $region28: #{forward.1} parent=1 // pred_region
      _
    $region29: #{forward.1} parent=1 // pred_fallthru
      _
    // Predicated region
    $region30: #{forward.1} parent=1 // pred_check
      _
    $region31: #{forward.1} parent=1 // pred_check_branch
      %65 = sbr.rel (0) target = $region33
    $region32: #{forward.1} parent=1 // pred_region
      %66 = dma.done [#allocation7], 16
    $region33: #{forward.1} parent=1 // pred_fallthru
      _
    // Predicated region
    $region34: #{forward.1} parent=1 // pred_check
      _
    $region35: #{forward.1} parent=1 // pred_check_branch
      %68 = sbr.rel (0) target = $region37
    $region36: #{forward.1} parent=1 // pred_region
      %69 = dma.done [#allocation9], 16
    $region37: #{forward.1} parent=1 // pred_fallthru
      _
    // Predicated region
    $region38: #{forward.1} parent=1 // pred_check
      _
    $region39: #{forward.1} parent=1 // pred_check_branch
      %71 = sbr.rel (0) target = $region41
    $region40: #{forward.1} parent=1 // pred_region
      %72 = dma.done [#allocation9], 16
    $region41: #{forward.1} parent=1 // pred_fallthru
      _
    // Predicated region
    $region42: #{forward.1} parent=1 // pred_check
      _
    $region43: #{forward.1} parent=1 // pred_check_branch
      %74 = sbr.rel (0) target = $region45
    $region44: #{forward.1} parent=1 // pred_region
      %75 = dma.done [#allocation6], 4096
    $region45: #{forward.1} parent=1 // pred_fallthru
      _
    %76 = sfence
    %v77 = vld [vmem:[%s0] sm:$0xff]
    %v78 = vld [vmem:[%s0 + $0x8] sm:$0xff]
    %v79 = vld [vmem:[%s0 + $0x10] sm:$0xff]
    %v80 = vld [vmem:[%s0 + $0x18] sm:$0xff]
    %v81 = vld [vmem:[%s0 + $0x20] sm:$0xff]
    %v82 = vld [vmem:[%s0 + $0x28] sm:$0xff]
    %83 = vst [vmem:[#allocation2] sm:$0xff] %v77
    %84 = vst [vmem:[#allocation2 + $0x8] sm:$0xff] %v78
    %85 = vst [vmem:[#allocation2 + $0x10] sm:$0xff] %v79
    %86 = vst [vmem:[#allocation2 + $0x18] sm:$0xff] %v80
    %87 = vst [vmem:[#allocation2 + $0x20] sm:$0xff] %v81
    %88 = vst [vmem:[#allocation2 + $0x28] sm:$0xff] %v82
    %89 = vst [vmem:[#allocation2 + $0x30] sm:$0xff] 0.0
    %90 = vst [vmem:[#allocation2 + $0x38] sm:$0xff] 0.0
    %s91 = sld [smem:[#allocation8]]
    %v92 = vstv %s91
    %s93 = sld [smem:[#allocation8 + $0x1]]
    %v94 = vstv %s93
    %s95 = sld [smem:[#allocation8 + $0x2]]
    %v96 = vstv %s95
    %v97 = vld [vmem:[#allocation2] sm:$0xff]
    %v98 = vld [vmem:[#allocation2 + $0x8] sm:$0xff]
    %v99 = vld [vmem:[#allocation2 + $0x10] sm:$0xff]
    %s100 = sld [smem:[#allocation5]]
    %v101 = vstv %s100
    %v102 = vmul.f32 %v101, %v97
    %v103 = vmul.f32 %v101, %v98
    %v104 = vmul.f32 %v101, %v99
    %v105 = vadd.f32 %v92, %v102
    %v106 = vadd.f32 %v92, %v103
    %v107 = vadd.f32 %v92, %v104
    %s108 = sld [smem:[#allocation5 + $0x1b]]
    %v109 = vstv %s108
    %v110 = vmul.f32 %v109, %v97
    %v111 = vmul.f32 %v109, %v98
    %v112 = vmul.f32 %v109, %v99
    %v113 = vadd.f32 %v94, %v110
    %v114 = vadd.f32 %v94, %v111
    %v115 = vadd.f32 %v94, %v112
    %s116 = sld [smem:[#allocation5 + $0x36]]
    %v117 = vstv %s116
    %v118 = vmul.f32 %v117, %v97
    %v119 = vmul.f32 %v117, %v98
    %v120 = vmul.f32 %v117, %v99
    %v121 = vadd.f32 %v96, %v118
    %v122 = vadd.f32 %v96, %v119
    %v123 = vadd.f32 %v96, %v120
    %v124 = vld [vmem:[#allocation2] sm:$0xff]
    %v125 = vld [vmem:[#allocation2 + $0x8] sm:$0xff]
    %v126 = vld [vmem:[#allocation2 + $0x10] sm:$0xff]
    %v127 = vld [vmem:[#allocation2 + $0x18] sm:$0xff]
    %s128 = sld [smem:[#allocation5 + $0x1]]
    %v129 = vstv %s128
    %v130 = vmul.f32 %v129, %v124
    %v131 = vmul.f32 %v129, %v125
    %v132 = vmul.f32 %v129, %v126
    %v133 = vmul.f32 %v129, %v127
    %138 = vrot.lane.b32.xlu0 %v130, 127
    %v139 = vpop.permute.xlu0 %138
    %140 = vrot.lane.b32.xlu0 %v131, 127
    %v141 = vpop.permute.xlu0 %140
    %142 = vrot.lane.b32.xlu0 %v132, 127
    %v143 = vpop.permute.xlu0 %142
    %144 = vrot.lane.b32.xlu0 %v133, 127
    %v145 = vpop.permute.xlu0 %144
    %vm146 = vcmask 1039360
    %v147 = vsel %vm146, %v139, %v141
    %v148 = vsel %vm146, %v141, %v143
    %v149 = vsel %vm146, %v143, %v145
    %v153 = vadd.f32 %v105, %v147
    %v154 = vadd.f32 %v106, %v148
    %v155 = vadd.f32 %v107, %v149
    %s156 = sld [smem:[#allocation5 + $0x1c]]
    %v157 = vstv %s156
    %v158 = vmul.f32 %v157, %v124
    %v159 = vmul.f32 %v157, %v125
    %v160 = vmul.f32 %v157, %v126
    %v161 = vmul.f32 %v157, %v127
    %166 = vrot.lane.b32.xlu0 %v158, 127
    %v167 = vpop.permute.xlu0 %166
    %168 = vrot.lane.b32.xlu0 %v159, 127
    %v169 = vpop.permute.xlu0 %168
    %170 = vrot.lane.b32.xlu0 %v160, 127
    %v171 = vpop.permute.xlu0 %170
    %172 = vrot.lane.b32.xlu0 %v161, 127
    %v173 = vpop.permute.xlu0 %172
    %v174 = vsel %vm146, %v167, %v169
    %v175 = vsel %vm146, %v169, %v171
    %v176 = vsel %vm146, %v171, %v173
    %v180 = vadd.f32 %v113, %v174
    %v181 = vadd.f32 %v114, %v175
    %v182 = vadd.f32 %v115, %v176
    %s183 = sld [smem:[#allocation5 + $0x37]]
    %v184 = vstv %s183
    %v185 = vmul.f32 %v184, %v124
    %v186 = vmul.f32 %v184, %v125
    %v187 = vmul.f32 %v184, %v126
    %v188 = vmul.f32 %v184, %v127
    %193 = vrot.lane.b32.xlu0 %v185, 127
    %v194 = vpop.permute.xlu0 %193
    %195 = vrot.lane.b32.xlu0 %v186, 127
    %v196 = vpop.permute.xlu0 %195
    %197 = vrot.lane.b32.xlu0 %v187, 127
    %v198 = vpop.permute.xlu0 %197
    %199 = vrot.lane.b32.xlu0 %v188, 127
    %v200 = vpop.permute.xlu0 %199
    %v201 = vsel %vm146, %v194, %v196
    %v202 = vsel %vm146, %v196, %v198
    %v203 = vsel %vm146, %v198, %v200
    %v207 = vadd.f32 %v121, %v201
    %v208 = vadd.f32 %v122, %v202
    %v209 = vadd.f32 %v123, %v203
    %s210 = sld [smem:[#allocation5 + $0x2]]
    %v211 = vstv %s210
    %v212 = vmul.f32 %v211, %v124
    %v213 = vmul.f32 %v211, %v125
    %v214 = vmul.f32 %v211, %v126
    %v215 = vmul.f32 %v211, %v127
    %220 = vrot.lane.b32.xlu0 %v212, 126
    %v221 = vpop.permute.xlu0 %220
    %222 = vrot.lane.b32.xlu0 %v213, 126
    %v223 = vpop.permute.xlu0 %222
    %224 = vrot.lane.b32.xlu0 %v214, 126
    %v225 = vpop.permute.xlu0 %224
    %226 = vrot.lane.b32.xlu0 %v215, 126
    %v227 = vpop.permute.xlu0 %226
    %vm228 = vcmask 1031168
    %v229 = vsel %vm228, %v221, %v223
    %v230 = vsel %vm228, %v223, %v225
    %v231 = vsel %vm228, %v225, %v227
    %v235 = vadd.f32 %v153, %v229
    %v236 = vadd.f32 %v154, %v230
    %v237 = vadd.f32 %v155, %v231
    %s238 = sld [smem:[#allocation5 + $0x1d]]
    %v239 = vstv %s238
    %v240 = vmul.f32 %v239, %v124
    %v241 = vmul.f32 %v239, %v125
    %v242 = vmul.f32 %v239, %v126
    %v243 = vmul.f32 %v239, %v127
    %248 = vrot.lane.b32.xlu0 %v240, 126
    %v249 = vpop.permute.xlu0 %248
    %250 = vrot.lane.b32.xlu0 %v241, 126
    %v251 = vpop.permute.xlu0 %250
    %252 = vrot.lane.b32.xlu0 %v242, 126
    %v253 = vpop.permute.xlu0 %252
    %254 = vrot.lane.b32.xlu0 %v243, 126
    %v255 = vpop.permute.xlu0 %254
    %v256 = vsel %vm228, %v249, %v251
    %v257 = vsel %vm228, %v251, %v253
    %v258 = vsel %vm228, %v253, %v255
    %v262 = vadd.f32 %v180, %v256
    %v263 = vadd.f32 %v181, %v257
    %v264 = vadd.f32 %v182, %v258
    %s265 = sld [smem:[#allocation5 + $0x38]]
    %v266 = vstv %s265
    %v267 = vmul.f32 %v266, %v124
    %v268 = vmul.f32 %v266, %v125
    %v269 = vmul.f32 %v266, %v126
    %v270 = vmul.f32 %v266, %v127
    %275 = vrot.lane.b32.xlu0 %v267, 126
    %v276 = vpop.permute.xlu0 %275
    %277 = vrot.lane.b32.xlu0 %v268, 126
    %v278 = vpop.permute.xlu0 %277
    %279 = vrot.lane.b32.xlu0 %v269, 126
    %v280 = vpop.permute.xlu0 %279
    %281 = vrot.lane.b32.xlu0 %v270, 126
    %v282 = vpop.permute.xlu0 %281
    %v283 = vsel %vm228, %v276, %v278
    %v284 = vsel %vm228, %v278, %v280
    %v285 = vsel %vm228, %v280, %v282
    %v289 = vadd.f32 %v207, %v283
    %v290 = vadd.f32 %v208, %v284
    %v291 = vadd.f32 %v209, %v285
    %s292 = sld [smem:[#allocation5 + $0x3]]
    %v293 = vstv %s292
    %v294 = vmul.f32 %v293, %v124
    %v295 = vmul.f32 %v293, %v125
    %v296 = vmul.f32 %v293, %v126
    %v297 = vmul.f32 %v293, %v127
    %302 = vrot.lane.b32.xlu0 %v294, 112
    %v303 = vpop.permute.xlu0 %302
    %304 = vrot.lane.b32.xlu0 %v295, 112
    %v305 = vpop.permute.xlu0 %304
    %306 = vrot.lane.b32.xlu0 %v296, 112
    %v307 = vpop.permute.xlu0 %306
    %308 = vrot.lane.b32.xlu0 %v297, 112
    %v309 = vpop.permute.xlu0 %308
    %vm310 = vcmask 916480
    %v311 = vsel %vm310, %v303, %v305
    %v312 = vsel %vm310, %v305, %v307
    %v313 = vsel %vm310, %v307, %v309
    %v317 = vadd.f32 %v235, %v311
    %v318 = vadd.f32 %v236, %v312
    %v319 = vadd.f32 %v237, %v313
    %s320 = sld [smem:[#allocation5 + $0x1e]]
    %v321 = vstv %s320
    %v322 = vmul.f32 %v321, %v124
    %v323 = vmul.f32 %v321, %v125
    %v324 = vmul.f32 %v321, %v126
    %v325 = vmul.f32 %v321, %v127
    %330 = vrot.lane.b32.xlu0 %v322, 112
    %v331 = vpop.permute.xlu0 %330
    %332 = vrot.lane.b32.xlu0 %v323, 112
    %v333 = vpop.permute.xlu0 %332
    %334 = vrot.lane.b32.xlu0 %v324, 112
    %v335 = vpop.permute.xlu0 %334
    %336 = vrot.lane.b32.xlu0 %v325, 112
    %v337 = vpop.permute.xlu0 %336
    %v338 = vsel %vm310, %v331, %v333
    %v339 = vsel %vm310, %v333, %v335
    %v340 = vsel %vm310, %v335, %v337
    %v344 = vadd.f32 %v262, %v338
    %v345 = vadd.f32 %v263, %v339
    %v346 = vadd.f32 %v264, %v340
    %s347 = sld [smem:[#allocation5 + $0x39]]
    %v348 = vstv %s347
    %v349 = vmul.f32 %v348, %v124
    %v350 = vmul.f32 %v348, %v125
    %v351 = vmul.f32 %v348, %v126
    %v352 = vmul.f32 %v348, %v127
    %357 = vrot.lane.b32.xlu0 %v349, 112
    %v358 = vpop.permute.xlu0 %357
    %359 = vrot.lane.b32.xlu0 %v350, 112
    %v360 = vpop.permute.xlu0 %359
    %361 = vrot.lane.b32.xlu0 %v351, 112
    %v362 = vpop.permute.xlu0 %361
    %363 = vrot.lane.b32.xlu0 %v352, 112
    %v364 = vpop.permute.xlu0 %363
    %v365 = vsel %vm310, %v358, %v360
    %v366 = vsel %vm310, %v360, %v362
    %v367 = vsel %vm310, %v362, %v364
    %v371 = vadd.f32 %v289, %v365
    %v372 = vadd.f32 %v290, %v366
    %v373 = vadd.f32 %v291, %v367
    %s374 = sld [smem:[#allocation5 + $0x4]]
    %v375 = vstv %s374
    %v376 = vmul.f32 %v375, %v124
    %v377 = vmul.f32 %v375, %v125
    %v378 = vmul.f32 %v375, %v126
    %v379 = vmul.f32 %v375, %v127
    %384 = vrot.lane.b32.xlu0 %v376, 111
    %v385 = vpop.permute.xlu0 %384
    %386 = vrot.lane.b32.xlu0 %v377, 111
    %v387 = vpop.permute.xlu0 %386
    %388 = vrot.lane.b32.xlu0 %v378, 111
    %v389 = vpop.permute.xlu0 %388
    %390 = vrot.lane.b32.xlu0 %v379, 111
    %v391 = vpop.permute.xlu0 %390
    %vm392 = vcmask 908288
    %v393 = vsel %vm392, %v385, %v387
    %v394 = vsel %vm392, %v387, %v389
    %v395 = vsel %vm392, %v389, %v391
    %v399 = vadd.f32 %v317, %v393
    %v400 = vadd.f32 %v318, %v394
    %v401 = vadd.f32 %v319, %v395
    %s402 = sld [smem:[#allocation5 + $0x1f]]
    %v403 = vstv %s402
    %v404 = vmul.f32 %v403, %v124
    %v405 = vmul.f32 %v403, %v125
    %v406 = vmul.f32 %v403, %v126
    %v407 = vmul.f32 %v403, %v127
    %412 = vrot.lane.b32.xlu0 %v404, 111
    %v413 = vpop.permute.xlu0 %412
    %414 = vrot.lane.b32.xlu0 %v405, 111
    %v415 = vpop.permute.xlu0 %414
    %416 = vrot.lane.b32.xlu0 %v406, 111
    %v417 = vpop.permute.xlu0 %416
    %418 = vrot.lane.b32.xlu0 %v407, 111
    %v419 = vpop.permute.xlu0 %418
    %v420 = vsel %vm392, %v413, %v415
    %v421 = vsel %vm392, %v415, %v417
    %v422 = vsel %vm392, %v417, %v419
    %v426 = vadd.f32 %v344, %v420
    %v427 = vadd.f32 %v345, %v421
    %v428 = vadd.f32 %v346, %v422
    %s429 = sld [smem:[#allocation5 + $0x3a]]
    %v430 = vstv %s429
    %v431 = vmul.f32 %v430, %v124
    %v432 = vmul.f32 %v430, %v125
    %v433 = vmul.f32 %v430, %v126
    %v434 = vmul.f32 %v430, %v127
    %439 = vrot.lane.b32.xlu0 %v431, 111
    %v440 = vpop.permute.xlu0 %439
    %441 = vrot.lane.b32.xlu0 %v432, 111
    %v442 = vpop.permute.xlu0 %441
    %443 = vrot.lane.b32.xlu0 %v433, 111
    %v444 = vpop.permute.xlu0 %443
    %445 = vrot.lane.b32.xlu0 %v434, 111
    %v446 = vpop.permute.xlu0 %445
    %v447 = vsel %vm392, %v440, %v442
    %v448 = vsel %vm392, %v442, %v444
    %v449 = vsel %vm392, %v444, %v446
    %v453 = vadd.f32 %v371, %v447
    %v454 = vadd.f32 %v372, %v448
    %v455 = vadd.f32 %v373, %v449
    %s456 = sld [smem:[#allocation5 + $0x5]]
    %v457 = vstv %s456
    %v458 = vmul.f32 %v457, %v124
    %v459 = vmul.f32 %v457, %v125
    %v460 = vmul.f32 %v457, %v126
    %v461 = vmul.f32 %v457, %v127
    %466 = vrot.lane.b32.xlu0 %v458, 110
    %v467 = vpop.permute.xlu0 %466
    %468 = vrot.lane.b32.xlu0 %v459, 110
    %v469 = vpop.permute.xlu0 %468
    %470 = vrot.lane.b32.xlu0 %v460, 110
    %v471 = vpop.permute.xlu0 %470
    %472 = vrot.lane.b32.xlu0 %v461, 110
    %v473 = vpop.permute.xlu0 %472
    %vm474 = vcmask 900096
    %v475 = vsel %vm474, %v467, %v469
    %v476 = vsel %vm474, %v469, %v471
    %v477 = vsel %vm474, %v471, %v473
    %v481 = vadd.f32 %v399, %v475
    %v482 = vadd.f32 %v400, %v476
    %v483 = vadd.f32 %v401, %v477
    %s484 = sld [smem:[#allocation5 + $0x20]]
    %v485 = vstv %s484
    %v486 = vmul.f32 %v485, %v124
    %v487 = vmul.f32 %v485, %v125
    %v488 = vmul.f32 %v485, %v126
    %v489 = vmul.f32 %v485, %v127
    %494 = vrot.lane.b32.xlu0 %v486, 110
    %v495 = vpop.permute.xlu0 %494
    %496 = vrot.lane.b32.xlu0 %v487, 110
    %v497 = vpop.permute.xlu0 %496
    %498 = vrot.lane.b32.xlu0 %v488, 110
    %v499 = vpop.permute.xlu0 %498
    %500 = vrot.lane.b32.xlu0 %v489, 110
    %v501 = vpop.permute.xlu0 %500
    %v502 = vsel %vm474, %v495, %v497
    %v503 = vsel %vm474, %v497, %v499
    %v504 = vsel %vm474, %v499, %v501
    %v508 = vadd.f32 %v426, %v502
    %v509 = vadd.f32 %v427, %v503
    %v510 = vadd.f32 %v428, %v504
    %s511 = sld [smem:[#allocation5 + $0x3b]]
    %v512 = vstv %s511
    %v513 = vmul.f32 %v512, %v124
    %v514 = vmul.f32 %v512, %v125
    %v515 = vmul.f32 %v512, %v126
    %v516 = vmul.f32 %v512, %v127
    %521 = vrot.lane.b32.xlu0 %v513, 110
    %v522 = vpop.permute.xlu0 %521
    %523 = vrot.lane.b32.xlu0 %v514, 110
    %v524 = vpop.permute.xlu0 %523
    %525 = vrot.lane.b32.xlu0 %v515, 110
    %v526 = vpop.permute.xlu0 %525
    %527 = vrot.lane.b32.xlu0 %v516, 110
    %v528 = vpop.permute.xlu0 %527
    %v529 = vsel %vm474, %v522, %v524
    %v530 = vsel %vm474, %v524, %v526
    %v531 = vsel %vm474, %v526, %v528
    %v535 = vadd.f32 %v453, %v529
    %v536 = vadd.f32 %v454, %v530
    %v537 = vadd.f32 %v455, %v531
    %s538 = sld [smem:[#allocation5 + $0x6]]
    %v539 = vstv %s538
    %v540 = vmul.f32 %v539, %v124
    %v541 = vmul.f32 %v539, %v125
    %v542 = vmul.f32 %v539, %v126
    %v543 = vmul.f32 %v539, %v127
    %548 = vrot.lane.b32.xlu0 %v540, 96
    %v549 = vpop.permute.xlu0 %548
    %550 = vrot.lane.b32.xlu0 %v541, 96
    %v551 = vpop.permute.xlu0 %550
    %552 = vrot.lane.b32.xlu0 %v542, 96
    %v553 = vpop.permute.xlu0 %552
    %554 = vrot.lane.b32.xlu0 %v543, 96
    %v555 = vpop.permute.xlu0 %554
    %vm556 = vcmask 785408
    %v557 = vsel %vm556, %v549, %v551
    %v558 = vsel %vm556, %v551, %v553
    %v559 = vsel %vm556, %v553, %v555
    %v563 = vadd.f32 %v481, %v557
    %v564 = vadd.f32 %v482, %v558
    %v565 = vadd.f32 %v483, %v559
    %s566 = sld [smem:[#allocation5 + $0x21]]
    %v567 = vstv %s566
    %v568 = vmul.f32 %v567, %v124
    %v569 = vmul.f32 %v567, %v125
    %v570 = vmul.f32 %v567, %v126
    %v571 = vmul.f32 %v567, %v127
    %576 = vrot.lane.b32.xlu0 %v568, 96
    %v577 = vpop.permute.xlu0 %576
    %578 = vrot.lane.b32.xlu0 %v569, 96
    %v579 = vpop.permute.xlu0 %578
    %580 = vrot.lane.b32.xlu0 %v570, 96
    %v581 = vpop.permute.xlu0 %580
    %582 = vrot.lane.b32.xlu0 %v571, 96
    %v583 = vpop.permute.xlu0 %582
    %v584 = vsel %vm556, %v577, %v579
    %v585 = vsel %vm556, %v579, %v581
    %v586 = vsel %vm556, %v581, %v583
    %v590 = vadd.f32 %v508, %v584
    %v591 = vadd.f32 %v509, %v585
    %v592 = vadd.f32 %v510, %v586
    %s593 = sld [smem:[#allocation5 + $0x3c]]
    %v594 = vstv %s593
    %v595 = vmul.f32 %v594, %v124
    %v596 = vmul.f32 %v594, %v125
    %v597 = vmul.f32 %v594, %v126
    %v598 = vmul.f32 %v594, %v127
    %603 = vrot.lane.b32.xlu0 %v595, 96
    %v604 = vpop.permute.xlu0 %603
    %605 = vrot.lane.b32.xlu0 %v596, 96
    %v606 = vpop.permute.xlu0 %605
    %607 = vrot.lane.b32.xlu0 %v597, 96
    %v608 = vpop.permute.xlu0 %607
    %609 = vrot.lane.b32.xlu0 %v598, 96
    %v610 = vpop.permute.xlu0 %609
    %v611 = vsel %vm556, %v604, %v606
    %v612 = vsel %vm556, %v606, %v608
    %v613 = vsel %vm556, %v608, %v610
    %v617 = vadd.f32 %v535, %v611
    %v618 = vadd.f32 %v536, %v612
    %v619 = vadd.f32 %v537, %v613
    %s620 = sld [smem:[#allocation5 + $0x7]]
    %v621 = vstv %s620
    %v622 = vmul.f32 %v621, %v124
    %v623 = vmul.f32 %v621, %v125
    %v624 = vmul.f32 %v621, %v126
    %v625 = vmul.f32 %v621, %v127
    %630 = vrot.lane.b32.xlu0 %v622, 95
    %v631 = vpop.permute.xlu0 %630
    %632 = vrot.lane.b32.xlu0 %v623, 95
    %v633 = vpop.permute.xlu0 %632
    %634 = vrot.lane.b32.xlu0 %v624, 95
    %v635 = vpop.permute.xlu0 %634
    %636 = vrot.lane.b32.xlu0 %v625, 95
    %v637 = vpop.permute.xlu0 %636
    %vm638 = vcmask 777216
    %v639 = vsel %vm638, %v631, %v633
    %v640 = vsel %vm638, %v633, %v635
    %v641 = vsel %vm638, %v635, %v637
    %v645 = vadd.f32 %v563, %v639
    %v646 = vadd.f32 %v564, %v640
    %v647 = vadd.f32 %v565, %v641
    %s648 = sld [smem:[#allocation5 + $0x22]]
    %v649 = vstv %s648
    %v650 = vmul.f32 %v649, %v124
    %v651 = vmul.f32 %v649, %v125
    %v652 = vmul.f32 %v649, %v126
    %v653 = vmul.f32 %v649, %v127
    %658 = vrot.lane.b32.xlu0 %v650, 95
    %v659 = vpop.permute.xlu0 %658
    %660 = vrot.lane.b32.xlu0 %v651, 95
    %v661 = vpop.permute.xlu0 %660
    %662 = vrot.lane.b32.xlu0 %v652, 95
    %v663 = vpop.permute.xlu0 %662
    %664 = vrot.lane.b32.xlu0 %v653, 95
    %v665 = vpop.permute.xlu0 %664
    %v666 = vsel %vm638, %v659, %v661
    %v667 = vsel %vm638, %v661, %v663
    %v668 = vsel %vm638, %v663, %v665
    %v672 = vadd.f32 %v590, %v666
    %v673 = vadd.f32 %v591, %v667
    %v674 = vadd.f32 %v592, %v668
    %s675 = sld [smem:[#allocation5 + $0x3d]]
    %v676 = vstv %s675
    %v677 = vmul.f32 %v676, %v124
    %v678 = vmul.f32 %v676, %v125
    %v679 = vmul.f32 %v676, %v126
    %v680 = vmul.f32 %v676, %v127
    %685 = vrot.lane.b32.xlu0 %v677, 95
    %v686 = vpop.permute.xlu0 %685
    %687 = vrot.lane.b32.xlu0 %v678, 95
    %v688 = vpop.permute.xlu0 %687
    %689 = vrot.lane.b32.xlu0 %v679, 95
    %v690 = vpop.permute.xlu0 %689
    %691 = vrot.lane.b32.xlu0 %v680, 95
    %v692 = vpop.permute.xlu0 %691
    %v693 = vsel %vm638, %v686, %v688
    %v694 = vsel %vm638, %v688, %v690
    %v695 = vsel %vm638, %v690, %v692
    %v699 = vadd.f32 %v617, %v693
    %v700 = vadd.f32 %v618, %v694
    %v701 = vadd.f32 %v619, %v695
    %s702 = sld [smem:[#allocation5 + $0x8]]
    %v703 = vstv %s702
    %v704 = vmul.f32 %v703, %v124
    %v705 = vmul.f32 %v703, %v125
    %v706 = vmul.f32 %v703, %v126
    %v707 = vmul.f32 %v703, %v127
    %712 = vrot.lane.b32.xlu0 %v704, 94
    %v713 = vpop.permute.xlu0 %712
    %714 = vrot.lane.b32.xlu0 %v705, 94
    %v715 = vpop.permute.xlu0 %714
    %716 = vrot.lane.b32.xlu0 %v706, 94
    %v717 = vpop.permute.xlu0 %716
    %718 = vrot.lane.b32.xlu0 %v707, 94
    %v719 = vpop.permute.xlu0 %718
    %vm720 = vcmask 769024
    %v721 = vsel %vm720, %v713, %v715
    %v722 = vsel %vm720, %v715, %v717
    %v723 = vsel %vm720, %v717, %v719
    %v727 = vadd.f32 %v645, %v721
    %v728 = vadd.f32 %v646, %v722
    %v729 = vadd.f32 %v647, %v723
    %s730 = sld [smem:[#allocation5 + $0x23]]
    %v731 = vstv %s730
    %v732 = vmul.f32 %v731, %v124
    %v733 = vmul.f32 %v731, %v125
    %v734 = vmul.f32 %v731, %v126
    %v735 = vmul.f32 %v731, %v127
    %740 = vrot.lane.b32.xlu0 %v732, 94
    %v741 = vpop.permute.xlu0 %740
    %742 = vrot.lane.b32.xlu0 %v733, 94
    %v743 = vpop.permute.xlu0 %742
    %744 = vrot.lane.b32.xlu0 %v734, 94
    %v745 = vpop.permute.xlu0 %744
    %746 = vrot.lane.b32.xlu0 %v735, 94
    %v747 = vpop.permute.xlu0 %746
    %v748 = vsel %vm720, %v741, %v743
    %v749 = vsel %vm720, %v743, %v745
    %v750 = vsel %vm720, %v745, %v747
    %v754 = vadd.f32 %v672, %v748
    %v755 = vadd.f32 %v673, %v749
    %v756 = vadd.f32 %v674, %v750
    %s757 = sld [smem:[#allocation5 + $0x3e]]
    %v758 = vstv %s757
    %v759 = vmul.f32 %v758, %v124
    %v760 = vmul.f32 %v758, %v125
    %v761 = vmul.f32 %v758, %v126
    %v762 = vmul.f32 %v758, %v127
    %767 = vrot.lane.b32.xlu0 %v759, 94
    %v768 = vpop.permute.xlu0 %767
    %769 = vrot.lane.b32.xlu0 %v760, 94
    %v770 = vpop.permute.xlu0 %769
    %771 = vrot.lane.b32.xlu0 %v761, 94
    %v772 = vpop.permute.xlu0 %771
    %773 = vrot.lane.b32.xlu0 %v762, 94
    %v774 = vpop.permute.xlu0 %773
    %v775 = vsel %vm720, %v768, %v770
    %v776 = vsel %vm720, %v770, %v772
    %v777 = vsel %vm720, %v772, %v774
    %v781 = vadd.f32 %v699, %v775
    %v782 = vadd.f32 %v700, %v776
    %v783 = vadd.f32 %v701, %v777
    %v784 = vld [vmem:[#allocation2 + $0x10] sm:$0xff]
    %v785 = vld [vmem:[#allocation2 + $0x18] sm:$0xff]
    %v786 = vld [vmem:[#allocation2 + $0x20] sm:$0xff]
    %s787 = sld [smem:[#allocation5 + $0x9]]
    %v788 = vstv %s787
    %v789 = vmul.f32 %v788, %v784
    %v790 = vmul.f32 %v788, %v785
    %v791 = vmul.f32 %v788, %v786
    %v792 = vadd.f32 %v727, %v789
    %v793 = vadd.f32 %v728, %v790
    %v794 = vadd.f32 %v729, %v791
    %s795 = sld [smem:[#allocation5 + $0x24]]
    %v796 = vstv %s795
    %v797 = vmul.f32 %v796, %v784
    %v798 = vmul.f32 %v796, %v785
    %v799 = vmul.f32 %v796, %v786
    %v800 = vadd.f32 %v754, %v797
    %v801 = vadd.f32 %v755, %v798
    %v802 = vadd.f32 %v756, %v799
    %s803 = sld [smem:[#allocation5 + $0x3f]]
    %v804 = vstv %s803
    %v805 = vmul.f32 %v804, %v784
    %v806 = vmul.f32 %v804, %v785
    %v807 = vmul.f32 %v804, %v786
    %v808 = vadd.f32 %v781, %v805
    %v809 = vadd.f32 %v782, %v806
    %v810 = vadd.f32 %v783, %v807
    %v811 = vld [vmem:[#allocation2 + $0x10] sm:$0xff]
    %v812 = vld [vmem:[#allocation2 + $0x18] sm:$0xff]
    %v813 = vld [vmem:[#allocation2 + $0x20] sm:$0xff]
    %v814 = vld [vmem:[#allocation2 + $0x28] sm:$0xff]
    %s815 = sld [smem:[#allocation5 + $0xa]]
    %v816 = vstv %s815
    %v817 = vmul.f32 %v816, %v811
    %v818 = vmul.f32 %v816, %v812
    %v819 = vmul.f32 %v816, %v813
    %v820 = vmul.f32 %v816, %v814
    %825 = vrot.lane.b32.xlu0 %v817, 127
    %v826 = vpop.permute.xlu0 %825
    %827 = vrot.lane.b32.xlu0 %v818, 127
    %v828 = vpop.permute.xlu0 %827
    %829 = vrot.lane.b32.xlu0 %v819, 127
    %v830 = vpop.permute.xlu0 %829
    %831 = vrot.lane.b32.xlu0 %v820, 127
    %v832 = vpop.permute.xlu0 %831
    %v833 = vsel %vm146, %v826, %v828
    %v834 = vsel %vm146, %v828, %v830
    %v835 = vsel %vm146, %v830, %v832
    %v839 = vadd.f32 %v792, %v833
    %v840 = vadd.f32 %v793, %v834
    %v841 = vadd.f32 %v794, %v835
    %s842 = sld [smem:[#allocation5 + $0x25]]
    %v843 = vstv %s842
    %v844 = vmul.f32 %v843, %v811
    %v845 = vmul.f32 %v843, %v812
    %v846 = vmul.f32 %v843, %v813
    %v847 = vmul.f32 %v843, %v814
    %852 = vrot.lane.b32.xlu0 %v844, 127
    %v853 = vpop.permute.xlu0 %852
    %854 = vrot.lane.b32.xlu0 %v845, 127
    %v855 = vpop.permute.xlu0 %854
    %856 = vrot.lane.b32.xlu0 %v846, 127
    %v857 = vpop.permute.xlu0 %856
    %858 = vrot.lane.b32.xlu0 %v847, 127
    %v859 = vpop.permute.xlu0 %858
    %v860 = vsel %vm146, %v853, %v855
    %v861 = vsel %vm146, %v855, %v857
    %v862 = vsel %vm146, %v857, %v859
    %v866 = vadd.f32 %v800, %v860
    %v867 = vadd.f32 %v801, %v861
    %v868 = vadd.f32 %v802, %v862
    %s869 = sld [smem:[#allocation5 + $0x40]]
    %v870 = vstv %s869
    %v871 = vmul.f32 %v870, %v811
    %v872 = vmul.f32 %v870, %v812
    %v873 = vmul.f32 %v870, %v813
    %v874 = vmul.f32 %v870, %v814
    %879 = vrot.lane.b32.xlu0 %v871, 127
    %v880 = vpop.permute.xlu0 %879
    %881 = vrot.lane.b32.xlu0 %v872, 127
    %v882 = vpop.permute.xlu0 %881
    %883 = vrot.lane.b32.xlu0 %v873, 127
    %v884 = vpop.permute.xlu0 %883
    %885 = vrot.lane.b32.xlu0 %v874, 127
    %v886 = vpop.permute.xlu0 %885
    %v887 = vsel %vm146, %v880, %v882
    %v888 = vsel %vm146, %v882, %v884
    %v889 = vsel %vm146, %v884, %v886
    %v893 = vadd.f32 %v808, %v887
    %v894 = vadd.f32 %v809, %v888
    %v895 = vadd.f32 %v810, %v889
    %s896 = sld [smem:[#allocation5 + $0xb]]
    %v897 = vstv %s896
    %v898 = vmul.f32 %v897, %v811
    %v899 = vmul.f32 %v897, %v812
    %v900 = vmul.f32 %v897, %v813
    %v901 = vmul.f32 %v897, %v814
    %906 = vrot.lane.b32.xlu0 %v898, 126
    %v907 = vpop.permute.xlu0 %906
    %908 = vrot.lane.b32.xlu0 %v899, 126
    %v909 = vpop.permute.xlu0 %908
    %910 = vrot.lane.b32.xlu0 %v900, 126
    %v911 = vpop.permute.xlu0 %910
    %912 = vrot.lane.b32.xlu0 %v901, 126
    %v913 = vpop.permute.xlu0 %912
    %v914 = vsel %vm228, %v907, %v909
    %v915 = vsel %vm228, %v909, %v911
    %v916 = vsel %vm228, %v911, %v913
    %v920 = vadd.f32 %v839, %v914
    %v921 = vadd.f32 %v840, %v915
    %v922 = vadd.f32 %v841, %v916
    %s923 = sld [smem:[#allocation5 + $0x26]]
    %v924 = vstv %s923
    %v925 = vmul.f32 %v924, %v811
    %v926 = vmul.f32 %v924, %v812
    %v927 = vmul.f32 %v924, %v813
    %v928 = vmul.f32 %v924, %v814
    %933 = vrot.lane.b32.xlu0 %v925, 126
    %v934 = vpop.permute.xlu0 %933
    %935 = vrot.lane.b32.xlu0 %v926, 126
    %v936 = vpop.permute.xlu0 %935
    %937 = vrot.lane.b32.xlu0 %v927, 126
    %v938 = vpop.permute.xlu0 %937
    %939 = vrot.lane.b32.xlu0 %v928, 126
    %v940 = vpop.permute.xlu0 %939
    %v941 = vsel %vm228, %v934, %v936
    %v942 = vsel %vm228, %v936, %v938
    %v943 = vsel %vm228, %v938, %v940
    %v947 = vadd.f32 %v866, %v941
    %v948 = vadd.f32 %v867, %v942
    %v949 = vadd.f32 %v868, %v943
    %s950 = sld [smem:[#allocation5 + $0x41]]
    %v951 = vstv %s950
    %v952 = vmul.f32 %v951, %v811
    %v953 = vmul.f32 %v951, %v812
    %v954 = vmul.f32 %v951, %v813
    %v955 = vmul.f32 %v951, %v814
    %960 = vrot.lane.b32.xlu0 %v952, 126
    %v961 = vpop.permute.xlu0 %960
    %962 = vrot.lane.b32.xlu0 %v953, 126
    %v963 = vpop.permute.xlu0 %962
    %964 = vrot.lane.b32.xlu0 %v954, 126
    %v965 = vpop.permute.xlu0 %964
    %966 = vrot.lane.b32.xlu0 %v955, 126
    %v967 = vpop.permute.xlu0 %966
    %v968 = vsel %vm228, %v961, %v963
    %v969 = vsel %vm228, %v963, %v965
    %v970 = vsel %vm228, %v965, %v967
    %v974 = vadd.f32 %v893, %v968
    %v975 = vadd.f32 %v894, %v969
    %v976 = vadd.f32 %v895, %v970
    %s977 = sld [smem:[#allocation5 + $0xc]]
    %v978 = vstv %s977
    %v979 = vmul.f32 %v978, %v811
    %v980 = vmul.f32 %v978, %v812
    %v981 = vmul.f32 %v978, %v813
    %v982 = vmul.f32 %v978, %v814
    %987 = vrot.lane.b32.xlu0 %v979, 112
    %v988 = vpop.permute.xlu0 %987
    %989 = vrot.lane.b32.xlu0 %v980, 112
    %v990 = vpop.permute.xlu0 %989
    %991 = vrot.lane.b32.xlu0 %v981, 112
    %v992 = vpop.permute.xlu0 %991
    %993 = vrot.lane.b32.xlu0 %v982, 112
    %v994 = vpop.permute.xlu0 %993
    %v995 = vsel %vm310, %v988, %v990
    %v996 = vsel %vm310, %v990, %v992
    %v997 = vsel %vm310, %v992, %v994
    %v1001 = vadd.f32 %v920, %v995
    %v1002 = vadd.f32 %v921, %v996
    %v1003 = vadd.f32 %v922, %v997
    %s1004 = sld [smem:[#allocation5 + $0x27]]
    %v1005 = vstv %s1004
    %v1006 = vmul.f32 %v1005, %v811
    %v1007 = vmul.f32 %v1005, %v812
    %v1008 = vmul.f32 %v1005, %v813
    %v1009 = vmul.f32 %v1005, %v814
    %1014 = vrot.lane.b32.xlu0 %v1006, 112
    %v1015 = vpop.permute.xlu0 %1014
    %1016 = vrot.lane.b32.xlu0 %v1007, 112
    %v1017 = vpop.permute.xlu0 %1016
    %1018 = vrot.lane.b32.xlu0 %v1008, 112
    %v1019 = vpop.permute.xlu0 %1018
    %1020 = vrot.lane.b32.xlu0 %v1009, 112
    %v1021 = vpop.permute.xlu0 %1020
    %v1022 = vsel %vm310, %v1015, %v1017
    %v1023 = vsel %vm310, %v1017, %v1019
    %v1024 = vsel %vm310, %v1019, %v1021
    %v1028 = vadd.f32 %v947, %v1022
    %v1029 = vadd.f32 %v948, %v1023
    %v1030 = vadd.f32 %v949, %v1024
    %s1031 = sld [smem:[#allocation5 + $0x42]]
    %v1032 = vstv %s1031
    %v1033 = vmul.f32 %v1032, %v811
    %v1034 = vmul.f32 %v1032, %v812
    %v1035 = vmul.f32 %v1032, %v813
    %v1036 = vmul.f32 %v1032, %v814
    %1041 = vrot.lane.b32.xlu0 %v1033, 112
    %v1042 = vpop.permute.xlu0 %1041
    %1043 = vrot.lane.b32.xlu0 %v1034, 112
    %v1044 = vpop.permute.xlu0 %1043
    %1045 = vrot.lane.b32.xlu0 %v1035, 112
    %v1046 = vpop.permute.xlu0 %1045
    %1047 = vrot.lane.b32.xlu0 %v1036, 112
    %v1048 = vpop.permute.xlu0 %1047
    %v1049 = vsel %vm310, %v1042, %v1044
    %v1050 = vsel %vm310, %v1044, %v1046
    %v1051 = vsel %vm310, %v1046, %v1048
    %v1055 = vadd.f32 %v974, %v1049
    %v1056 = vadd.f32 %v975, %v1050
    %v1057 = vadd.f32 %v976, %v1051
    %s1058 = sld [smem:[#allocation5 + $0xd]]
    %v1059 = vstv %s1058
    %v1060 = vmul.f32 %v1059, %v811
    %v1061 = vmul.f32 %v1059, %v812
    %v1062 = vmul.f32 %v1059, %v813
    %v1063 = vmul.f32 %v1059, %v814
    %1068 = vrot.lane.b32.xlu0 %v1060, 111
    %v1069 = vpop.permute.xlu0 %1068
    %1070 = vrot.lane.b32.xlu0 %v1061, 111
    %v1071 = vpop.permute.xlu0 %1070
    %1072 = vrot.lane.b32.xlu0 %v1062, 111
    %v1073 = vpop.permute.xlu0 %1072
    %1074 = vrot.lane.b32.xlu0 %v1063, 111
    %v1075 = vpop.permute.xlu0 %1074
    %v1076 = vsel %vm392, %v1069, %v1071
    %v1077 = vsel %vm392, %v1071, %v1073
    %v1078 = vsel %vm392, %v1073, %v1075
    %v1082 = vadd.f32 %v1001, %v1076
    %v1083 = vadd.f32 %v1002, %v1077
    %v1084 = vadd.f32 %v1003, %v1078
    %s1085 = sld [smem:[#allocation5 + $0x28]]
    %v1086 = vstv %s1085
    %v1087 = vmul.f32 %v1086, %v811
    %v1088 = vmul.f32 %v1086, %v812
    %v1089 = vmul.f32 %v1086, %v813
    %v1090 = vmul.f32 %v1086, %v814
    %1095 = vrot.lane.b32.xlu0 %v1087, 111
    %v1096 = vpop.permute.xlu0 %1095
    %1097 = vrot.lane.b32.xlu0 %v1088, 111
    %v1098 = vpop.permute.xlu0 %1097
    %1099 = vrot.lane.b32.xlu0 %v1089, 111
    %v1100 = vpop.permute.xlu0 %1099
    %1101 = vrot.lane.b32.xlu0 %v1090, 111
    %v1102 = vpop.permute.xlu0 %1101
    %v1103 = vsel %vm392, %v1096, %v1098
    %v1104 = vsel %vm392, %v1098, %v1100
    %v1105 = vsel %vm392, %v1100, %v1102
    %v1109 = vadd.f32 %v1028, %v1103
    %v1110 = vadd.f32 %v1029, %v1104
    %v1111 = vadd.f32 %v1030, %v1105
    %s1112 = sld [smem:[#allocation5 + $0x43]]
    %v1113 = vstv %s1112
    %v1114 = vmul.f32 %v1113, %v811
    %v1115 = vmul.f32 %v1113, %v812
    %v1116 = vmul.f32 %v1113, %v813
    %v1117 = vmul.f32 %v1113, %v814
    %1122 = vrot.lane.b32.xlu0 %v1114, 111
    %v1123 = vpop.permute.xlu0 %1122
    %1124 = vrot.lane.b32.xlu0 %v1115, 111
    %v1125 = vpop.permute.xlu0 %1124
    %1126 = vrot.lane.b32.xlu0 %v1116, 111
    %v1127 = vpop.permute.xlu0 %1126
    %1128 = vrot.lane.b32.xlu0 %v1117, 111
    %v1129 = vpop.permute.xlu0 %1128
    %v1130 = vsel %vm392, %v1123, %v1125
    %v1131 = vsel %vm392, %v1125, %v1127
    %v1132 = vsel %vm392, %v1127, %v1129
    %v1136 = vadd.f32 %v1055, %v1130
    %v1137 = vadd.f32 %v1056, %v1131
    %v1138 = vadd.f32 %v1057, %v1132
    %s1139 = sld [smem:[#allocation5 + $0xe]]
    %v1140 = vstv %s1139
    %v1141 = vmul.f32 %v1140, %v811
    %v1142 = vmul.f32 %v1140, %v812
    %v1143 = vmul.f32 %v1140, %v813
    %v1144 = vmul.f32 %v1140, %v814
    %1149 = vrot.lane.b32.xlu0 %v1141, 110
    %v1150 = vpop.permute.xlu0 %1149
    %1151 = vrot.lane.b32.xlu0 %v1142, 110
    %v1152 = vpop.permute.xlu0 %1151
    %1153 = vrot.lane.b32.xlu0 %v1143, 110
    %v1154 = vpop.permute.xlu0 %1153
    %1155 = vrot.lane.b32.xlu0 %v1144, 110
    %v1156 = vpop.permute.xlu0 %1155
    %v1157 = vsel %vm474, %v1150, %v1152
    %v1158 = vsel %vm474, %v1152, %v1154
    %v1159 = vsel %vm474, %v1154, %v1156
    %v1163 = vadd.f32 %v1082, %v1157
    %v1164 = vadd.f32 %v1083, %v1158
    %v1165 = vadd.f32 %v1084, %v1159
    %s1166 = sld [smem:[#allocation5 + $0x29]]
    %v1167 = vstv %s1166
    %v1168 = vmul.f32 %v1167, %v811
    %v1169 = vmul.f32 %v1167, %v812
    %v1170 = vmul.f32 %v1167, %v813
    %v1171 = vmul.f32 %v1167, %v814
    %1176 = vrot.lane.b32.xlu0 %v1168, 110
    %v1177 = vpop.permute.xlu0 %1176
    %1178 = vrot.lane.b32.xlu0 %v1169, 110
    %v1179 = vpop.permute.xlu0 %1178
    %1180 = vrot.lane.b32.xlu0 %v1170, 110
    %v1181 = vpop.permute.xlu0 %1180
    %1182 = vrot.lane.b32.xlu0 %v1171, 110
    %v1183 = vpop.permute.xlu0 %1182
    %v1184 = vsel %vm474, %v1177, %v1179
    %v1185 = vsel %vm474, %v1179, %v1181
    %v1186 = vsel %vm474, %v1181, %v1183
    %v1190 = vadd.f32 %v1109, %v1184
    %v1191 = vadd.f32 %v1110, %v1185
    %v1192 = vadd.f32 %v1111, %v1186
    %s1193 = sld [smem:[#allocation5 + $0x44]]
    %v1194 = vstv %s1193
    %v1195 = vmul.f32 %v1194, %v811
    %v1196 = vmul.f32 %v1194, %v812
    %v1197 = vmul.f32 %v1194, %v813
    %v1198 = vmul.f32 %v1194, %v814
    %1203 = vrot.lane.b32.xlu0 %v1195, 110
    %v1204 = vpop.permute.xlu0 %1203
    %1205 = vrot.lane.b32.xlu0 %v1196, 110
    %v1206 = vpop.permute.xlu0 %1205
    %1207 = vrot.lane.b32.xlu0 %v1197, 110
    %v1208 = vpop.permute.xlu0 %1207
    %1209 = vrot.lane.b32.xlu0 %v1198, 110
    %v1210 = vpop.permute.xlu0 %1209
    %v1211 = vsel %vm474, %v1204, %v1206
    %v1212 = vsel %vm474, %v1206, %v1208
    %v1213 = vsel %vm474, %v1208, %v1210
    %v1217 = vadd.f32 %v1136, %v1211
    %v1218 = vadd.f32 %v1137, %v1212
    %v1219 = vadd.f32 %v1138, %v1213
    %s1220 = sld [smem:[#allocation5 + $0xf]]
    %v1221 = vstv %s1220
    %v1222 = vmul.f32 %v1221, %v811
    %v1223 = vmul.f32 %v1221, %v812
    %v1224 = vmul.f32 %v1221, %v813
    %v1225 = vmul.f32 %v1221, %v814
    %1230 = vrot.lane.b32.xlu0 %v1222, 96
    %v1231 = vpop.permute.xlu0 %1230
    %1232 = vrot.lane.b32.xlu0 %v1223, 96
    %v1233 = vpop.permute.xlu0 %1232
    %1234 = vrot.lane.b32.xlu0 %v1224, 96
    %v1235 = vpop.permute.xlu0 %1234
    %1236 = vrot.lane.b32.xlu0 %v1225, 96
    %v1237 = vpop.permute.xlu0 %1236
    %v1238 = vsel %vm556, %v1231, %v1233
    %v1239 = vsel %vm556, %v1233, %v1235
    %v1240 = vsel %vm556, %v1235, %v1237
    %v1244 = vadd.f32 %v1163, %v1238
    %v1245 = vadd.f32 %v1164, %v1239
    %v1246 = vadd.f32 %v1165, %v1240
    %s1247 = sld [smem:[#allocation5 + $0x2a]]
    %v1248 = vstv %s1247
    %v1249 = vmul.f32 %v1248, %v811
    %v1250 = vmul.f32 %v1248, %v812
    %v1251 = vmul.f32 %v1248, %v813
    %v1252 = vmul.f32 %v1248, %v814
    %1257 = vrot.lane.b32.xlu0 %v1249, 96
    %v1258 = vpop.permute.xlu0 %1257
    %1259 = vrot.lane.b32.xlu0 %v1250, 96
    %v1260 = vpop.permute.xlu0 %1259
    %1261 = vrot.lane.b32.xlu0 %v1251, 96
    %v1262 = vpop.permute.xlu0 %1261
    %1263 = vrot.lane.b32.xlu0 %v1252, 96
    %v1264 = vpop.permute.xlu0 %1263
    %v1265 = vsel %vm556, %v1258, %v1260
    %v1266 = vsel %vm556, %v1260, %v1262
    %v1267 = vsel %vm556, %v1262, %v1264
    %v1271 = vadd.f32 %v1190, %v1265
    %v1272 = vadd.f32 %v1191, %v1266
    %v1273 = vadd.f32 %v1192, %v1267
    %s1274 = sld [smem:[#allocation5 + $0x45]]
    %v1275 = vstv %s1274
    %v1276 = vmul.f32 %v1275, %v811
    %v1277 = vmul.f32 %v1275, %v812
    %v1278 = vmul.f32 %v1275, %v813
    %v1279 = vmul.f32 %v1275, %v814
    %1284 = vrot.lane.b32.xlu0 %v1276, 96
    %v1285 = vpop.permute.xlu0 %1284
    %1286 = vrot.lane.b32.xlu0 %v1277, 96
    %v1287 = vpop.permute.xlu0 %1286
    %1288 = vrot.lane.b32.xlu0 %v1278, 96
    %v1289 = vpop.permute.xlu0 %1288
    %1290 = vrot.lane.b32.xlu0 %v1279, 96
    %v1291 = vpop.permute.xlu0 %1290
    %v1292 = vsel %vm556, %v1285, %v1287
    %v1293 = vsel %vm556, %v1287, %v1289
    %v1294 = vsel %vm556, %v1289, %v1291
    %v1298 = vadd.f32 %v1217, %v1292
    %v1299 = vadd.f32 %v1218, %v1293
    %v1300 = vadd.f32 %v1219, %v1294
    %s1301 = sld [smem:[#allocation5 + $0x10]]
    %v1302 = vstv %s1301
    %v1303 = vmul.f32 %v1302, %v811
    %v1304 = vmul.f32 %v1302, %v812
    %v1305 = vmul.f32 %v1302, %v813
    %v1306 = vmul.f32 %v1302, %v814
    %1311 = vrot.lane.b32.xlu0 %v1303, 95
    %v1312 = vpop.permute.xlu0 %1311
    %1313 = vrot.lane.b32.xlu0 %v1304, 95
    %v1314 = vpop.permute.xlu0 %1313
    %1315 = vrot.lane.b32.xlu0 %v1305, 95
    %v1316 = vpop.permute.xlu0 %1315
    %1317 = vrot.lane.b32.xlu0 %v1306, 95
    %v1318 = vpop.permute.xlu0 %1317
    %v1319 = vsel %vm638, %v1312, %v1314
    %v1320 = vsel %vm638, %v1314, %v1316
    %v1321 = vsel %vm638, %v1316, %v1318
    %v1325 = vadd.f32 %v1244, %v1319
    %v1326 = vadd.f32 %v1245, %v1320
    %v1327 = vadd.f32 %v1246, %v1321
    %s1328 = sld [smem:[#allocation5 + $0x2b]]
    %v1329 = vstv %s1328
    %v1330 = vmul.f32 %v1329, %v811
    %v1331 = vmul.f32 %v1329, %v812
    %v1332 = vmul.f32 %v1329, %v813
    %v1333 = vmul.f32 %v1329, %v814
    %1338 = vrot.lane.b32.xlu0 %v1330, 95
    %v1339 = vpop.permute.xlu0 %1338
    %1340 = vrot.lane.b32.xlu0 %v1331, 95
    %v1341 = vpop.permute.xlu0 %1340
    %1342 = vrot.lane.b32.xlu0 %v1332, 95
    %v1343 = vpop.permute.xlu0 %1342
    %1344 = vrot.lane.b32.xlu0 %v1333, 95
    %v1345 = vpop.permute.xlu0 %1344
    %v1346 = vsel %vm638, %v1339, %v1341
    %v1347 = vsel %vm638, %v1341, %v1343
    %v1348 = vsel %vm638, %v1343, %v1345
    %v1352 = vadd.f32 %v1271, %v1346
    %v1353 = vadd.f32 %v1272, %v1347
    %v1354 = vadd.f32 %v1273, %v1348
    %s1355 = sld [smem:[#allocation5 + $0x46]]
    %v1356 = vstv %s1355
    %v1357 = vmul.f32 %v1356, %v811
    %v1358 = vmul.f32 %v1356, %v812
    %v1359 = vmul.f32 %v1356, %v813
    %v1360 = vmul.f32 %v1356, %v814
    %1365 = vrot.lane.b32.xlu0 %v1357, 95
    %v1366 = vpop.permute.xlu0 %1365
    %1367 = vrot.lane.b32.xlu0 %v1358, 95
    %v1368 = vpop.permute.xlu0 %1367
    %1369 = vrot.lane.b32.xlu0 %v1359, 95
    %v1370 = vpop.permute.xlu0 %1369
    %1371 = vrot.lane.b32.xlu0 %v1360, 95
    %v1372 = vpop.permute.xlu0 %1371
    %v1373 = vsel %vm638, %v1366, %v1368
    %v1374 = vsel %vm638, %v1368, %v1370
    %v1375 = vsel %vm638, %v1370, %v1372
    %v1379 = vadd.f32 %v1298, %v1373
    %v1380 = vadd.f32 %v1299, %v1374
    %v1381 = vadd.f32 %v1300, %v1375
    %s1382 = sld [smem:[#allocation5 + $0x11]]
    %v1383 = vstv %s1382
    %v1384 = vmul.f32 %v1383, %v811
    %v1385 = vmul.f32 %v1383, %v812
    %v1386 = vmul.f32 %v1383, %v813
    %v1387 = vmul.f32 %v1383, %v814
    %1392 = vrot.lane.b32.xlu0 %v1384, 94
    %v1393 = vpop.permute.xlu0 %1392
    %1394 = vrot.lane.b32.xlu0 %v1385, 94
    %v1395 = vpop.permute.xlu0 %1394
    %1396 = vrot.lane.b32.xlu0 %v1386, 94
    %v1397 = vpop.permute.xlu0 %1396
    %1398 = vrot.lane.b32.xlu0 %v1387, 94
    %v1399 = vpop.permute.xlu0 %1398
    %v1400 = vsel %vm720, %v1393, %v1395
    %v1401 = vsel %vm720, %v1395, %v1397
    %v1402 = vsel %vm720, %v1397, %v1399
    %v1406 = vadd.f32 %v1325, %v1400
    %v1407 = vadd.f32 %v1326, %v1401
    %v1408 = vadd.f32 %v1327, %v1402
    %s1409 = sld [smem:[#allocation5 + $0x2c]]
    %v1410 = vstv %s1409
    %v1411 = vmul.f32 %v1410, %v811
    %v1412 = vmul.f32 %v1410, %v812
    %v1413 = vmul.f32 %v1410, %v813
    %v1414 = vmul.f32 %v1410, %v814
    %1419 = vrot.lane.b32.xlu0 %v1411, 94
    %v1420 = vpop.permute.xlu0 %1419
    %1421 = vrot.lane.b32.xlu0 %v1412, 94
    %v1422 = vpop.permute.xlu0 %1421
    %1423 = vrot.lane.b32.xlu0 %v1413, 94
    %v1424 = vpop.permute.xlu0 %1423
    %1425 = vrot.lane.b32.xlu0 %v1414, 94
    %v1426 = vpop.permute.xlu0 %1425
    %v1427 = vsel %vm720, %v1420, %v1422
    %v1428 = vsel %vm720, %v1422, %v1424
    %v1429 = vsel %vm720, %v1424, %v1426
    %v1433 = vadd.f32 %v1352, %v1427
    %v1434 = vadd.f32 %v1353, %v1428
    %v1435 = vadd.f32 %v1354, %v1429
    %s1436 = sld [smem:[#allocation5 + $0x47]]
    %v1437 = vstv %s1436
    %v1438 = vmul.f32 %v1437, %v811
    %v1439 = vmul.f32 %v1437, %v812
    %v1440 = vmul.f32 %v1437, %v813
    %v1441 = vmul.f32 %v1437, %v814
    %1446 = vrot.lane.b32.xlu0 %v1438, 94
    %v1447 = vpop.permute.xlu0 %1446
    %1448 = vrot.lane.b32.xlu0 %v1439, 94
    %v1449 = vpop.permute.xlu0 %1448
    %1450 = vrot.lane.b32.xlu0 %v1440, 94
    %v1451 = vpop.permute.xlu0 %1450
    %1452 = vrot.lane.b32.xlu0 %v1441, 94
    %v1453 = vpop.permute.xlu0 %1452
    %v1454 = vsel %vm720, %v1447, %v1449
    %v1455 = vsel %vm720, %v1449, %v1451
    %v1456 = vsel %vm720, %v1451, %v1453
    %v1460 = vadd.f32 %v1379, %v1454
    %v1461 = vadd.f32 %v1380, %v1455
    %v1462 = vadd.f32 %v1381, %v1456
    %v1463 = vld [vmem:[#allocation2 + $0x20] sm:$0xff]
    %v1464 = vld [vmem:[#allocation2 + $0x28] sm:$0xff]
    %v1465 = vld [vmem:[#allocation2 + $0x30] sm:$0xff]
    %s1466 = sld [smem:[#allocation5 + $0x12]]
    %v1467 = vstv %s1466
    %v1468 = vmul.f32 %v1467, %v1463
    %v1469 = vmul.f32 %v1467, %v1464
    %v1470 = vmul.f32 %v1467, %v1465
    %v1471 = vadd.f32 %v1406, %v1468
    %v1472 = vadd.f32 %v1407, %v1469
    %v1473 = vadd.f32 %v1408, %v1470
    %s1474 = sld [smem:[#allocation5 + $0x2d]]
    %v1475 = vstv %s1474
    %v1476 = vmul.f32 %v1475, %v1463
    %v1477 = vmul.f32 %v1475, %v1464
    %v1478 = vmul.f32 %v1475, %v1465
    %v1479 = vadd.f32 %v1433, %v1476
    %v1480 = vadd.f32 %v1434, %v1477
    %v1481 = vadd.f32 %v1435, %v1478
    %s1482 = sld [smem:[#allocation5 + $0x48]]
    %v1483 = vstv %s1482
    %v1484 = vmul.f32 %v1483, %v1463
    %v1485 = vmul.f32 %v1483, %v1464
    %v1486 = vmul.f32 %v1483, %v1465
    %v1487 = vadd.f32 %v1460, %v1484
    %v1488 = vadd.f32 %v1461, %v1485
    %v1489 = vadd.f32 %v1462, %v1486
    %v1490 = vld [vmem:[#allocation2 + $0x20] sm:$0xff]
    %v1491 = vld [vmem:[#allocation2 + $0x28] sm:$0xff]
    %v1492 = vld [vmem:[#allocation2 + $0x30] sm:$0xff]
    %v1493 = vld [vmem:[#allocation2 + $0x38] sm:$0xff]
    %s1494 = sld [smem:[#allocation5 + $0x13]]
    %v1495 = vstv %s1494
    %v1496 = vmul.f32 %v1495, %v1490
    %v1497 = vmul.f32 %v1495, %v1491
    %v1498 = vmul.f32 %v1495, %v1492
    %v1499 = vmul.f32 %v1495, %v1493
    %1504 = vrot.lane.b32.xlu0 %v1496, 127
    %v1505 = vpop.permute.xlu0 %1504
    %1506 = vrot.lane.b32.xlu0 %v1497, 127
    %v1507 = vpop.permute.xlu0 %1506
    %1508 = vrot.lane.b32.xlu0 %v1498, 127
    %v1509 = vpop.permute.xlu0 %1508
    %1510 = vrot.lane.b32.xlu0 %v1499, 127
    %v1511 = vpop.permute.xlu0 %1510
    %v1512 = vsel %vm146, %v1505, %v1507
    %v1513 = vsel %vm146, %v1507, %v1509
    %v1514 = vsel %vm146, %v1509, %v1511
    %v1518 = vadd.f32 %v1471, %v1512
    %v1519 = vadd.f32 %v1472, %v1513
    %v1520 = vadd.f32 %v1473, %v1514
    %s1521 = sld [smem:[#allocation5 + $0x2e]]
    %v1522 = vstv %s1521
    %v1523 = vmul.f32 %v1522, %v1490
    %v1524 = vmul.f32 %v1522, %v1491
    %v1525 = vmul.f32 %v1522, %v1492
    %v1526 = vmul.f32 %v1522, %v1493
    %1531 = vrot.lane.b32.xlu0 %v1523, 127
    %v1532 = vpop.permute.xlu0 %1531
    %1533 = vrot.lane.b32.xlu0 %v1524, 127
    %v1534 = vpop.permute.xlu0 %1533
    %1535 = vrot.lane.b32.xlu0 %v1525, 127
    %v1536 = vpop.permute.xlu0 %1535
    %1537 = vrot.lane.b32.xlu0 %v1526, 127
    %v1538 = vpop.permute.xlu0 %1537
    %v1539 = vsel %vm146, %v1532, %v1534
    %v1540 = vsel %vm146, %v1534, %v1536
    %v1541 = vsel %vm146, %v1536, %v1538
    %v1545 = vadd.f32 %v1479, %v1539
    %v1546 = vadd.f32 %v1480, %v1540
    %v1547 = vadd.f32 %v1481, %v1541
    %s1548 = sld [smem:[#allocation5 + $0x49]]
    %v1549 = vstv %s1548
    %v1550 = vmul.f32 %v1549, %v1490
    %v1551 = vmul.f32 %v1549, %v1491
    %v1552 = vmul.f32 %v1549, %v1492
    %v1553 = vmul.f32 %v1549, %v1493
    %1558 = vrot.lane.b32.xlu0 %v1550, 127
    %v1559 = vpop.permute.xlu0 %1558
    %1560 = vrot.lane.b32.xlu0 %v1551, 127
    %v1561 = vpop.permute.xlu0 %1560
    %1562 = vrot.lane.b32.xlu0 %v1552, 127
    %v1563 = vpop.permute.xlu0 %1562
    %1564 = vrot.lane.b32.xlu0 %v1553, 127
    %v1565 = vpop.permute.xlu0 %1564
    %v1566 = vsel %vm146, %v1559, %v1561
    %v1567 = vsel %vm146, %v1561, %v1563
    %v1568 = vsel %vm146, %v1563, %v1565
    %v1572 = vadd.f32 %v1487, %v1566
    %v1573 = vadd.f32 %v1488, %v1567
    %v1574 = vadd.f32 %v1489, %v1568
    %s1575 = sld [smem:[#allocation5 + $0x14]]
    %v1576 = vstv %s1575
    %v1577 = vmul.f32 %v1576, %v1490
    %v1578 = vmul.f32 %v1576, %v1491
    %v1579 = vmul.f32 %v1576, %v1492
    %v1580 = vmul.f32 %v1576, %v1493
    %1585 = vrot.lane.b32.xlu0 %v1577, 126
    %v1586 = vpop.permute.xlu0 %1585
    %1587 = vrot.lane.b32.xlu0 %v1578, 126
    %v1588 = vpop.permute.xlu0 %1587
    %1589 = vrot.lane.b32.xlu0 %v1579, 126
    %v1590 = vpop.permute.xlu0 %1589
    %1591 = vrot.lane.b32.xlu0 %v1580, 126
    %v1592 = vpop.permute.xlu0 %1591
    %v1593 = vsel %vm228, %v1586, %v1588
    %v1594 = vsel %vm228, %v1588, %v1590
    %v1595 = vsel %vm228, %v1590, %v1592
    %v1599 = vadd.f32 %v1518, %v1593
    %v1600 = vadd.f32 %v1519, %v1594
    %v1601 = vadd.f32 %v1520, %v1595
    %s1602 = sld [smem:[#allocation5 + $0x2f]]
    %v1603 = vstv %s1602
    %v1604 = vmul.f32 %v1603, %v1490
    %v1605 = vmul.f32 %v1603, %v1491
    %v1606 = vmul.f32 %v1603, %v1492
    %v1607 = vmul.f32 %v1603, %v1493
    %1612 = vrot.lane.b32.xlu0 %v1604, 126
    %v1613 = vpop.permute.xlu0 %1612
    %1614 = vrot.lane.b32.xlu0 %v1605, 126
    %v1615 = vpop.permute.xlu0 %1614
    %1616 = vrot.lane.b32.xlu0 %v1606, 126
    %v1617 = vpop.permute.xlu0 %1616
    %1618 = vrot.lane.b32.xlu0 %v1607, 126
    %v1619 = vpop.permute.xlu0 %1618
    %v1620 = vsel %vm228, %v1613, %v1615
    %v1621 = vsel %vm228, %v1615, %v1617
    %v1622 = vsel %vm228, %v1617, %v1619
    %v1626 = vadd.f32 %v1545, %v1620
    %v1627 = vadd.f32 %v1546, %v1621
    %v1628 = vadd.f32 %v1547, %v1622
    %s1629 = sld [smem:[#allocation5 + $0x4a]]
    %v1630 = vstv %s1629
    %v1631 = vmul.f32 %v1630, %v1490
    %v1632 = vmul.f32 %v1630, %v1491
    %v1633 = vmul.f32 %v1630, %v1492
    %v1634 = vmul.f32 %v1630, %v1493
    %1639 = vrot.lane.b32.xlu0 %v1631, 126
    %v1640 = vpop.permute.xlu0 %1639
    %1641 = vrot.lane.b32.xlu0 %v1632, 126
    %v1642 = vpop.permute.xlu0 %1641
    %1643 = vrot.lane.b32.xlu0 %v1633, 126
    %v1644 = vpop.permute.xlu0 %1643
    %1645 = vrot.lane.b32.xlu0 %v1634, 126
    %v1646 = vpop.permute.xlu0 %1645
    %v1647 = vsel %vm228, %v1640, %v1642
    %v1648 = vsel %vm228, %v1642, %v1644
    %v1649 = vsel %vm228, %v1644, %v1646
    %v1653 = vadd.f32 %v1572, %v1647
    %v1654 = vadd.f32 %v1573, %v1648
    %v1655 = vadd.f32 %v1574, %v1649
    %s1656 = sld [smem:[#allocation5 + $0x15]]
    %v1657 = vstv %s1656
    %v1658 = vmul.f32 %v1657, %v1490
    %v1659 = vmul.f32 %v1657, %v1491
    %v1660 = vmul.f32 %v1657, %v1492
    %v1661 = vmul.f32 %v1657, %v1493
    %1666 = vrot.lane.b32.xlu0 %v1658, 112
    %v1667 = vpop.permute.xlu0 %1666
    %1668 = vrot.lane.b32.xlu0 %v1659, 112
    %v1669 = vpop.permute.xlu0 %1668
    %1670 = vrot.lane.b32.xlu0 %v1660, 112
    %v1671 = vpop.permute.xlu0 %1670
    %1672 = vrot.lane.b32.xlu0 %v1661, 112
    %v1673 = vpop.permute.xlu0 %1672
    %v1674 = vsel %vm310, %v1667, %v1669
    %v1675 = vsel %vm310, %v1669, %v1671
    %v1676 = vsel %vm310, %v1671, %v1673
    %v1680 = vadd.f32 %v1599, %v1674
    %v1681 = vadd.f32 %v1600, %v1675
    %v1682 = vadd.f32 %v1601, %v1676
    %s1683 = sld [smem:[#allocation5 + $0x30]]
    %v1684 = vstv %s1683
    %v1685 = vmul.f32 %v1684, %v1490
    %v1686 = vmul.f32 %v1684, %v1491
    %v1687 = vmul.f32 %v1684, %v1492
    %v1688 = vmul.f32 %v1684, %v1493
    %1693 = vrot.lane.b32.xlu0 %v1685, 112
    %v1694 = vpop.permute.xlu0 %1693
    %1695 = vrot.lane.b32.xlu0 %v1686, 112
    %v1696 = vpop.permute.xlu0 %1695
    %1697 = vrot.lane.b32.xlu0 %v1687, 112
    %v1698 = vpop.permute.xlu0 %1697
    %1699 = vrot.lane.b32.xlu0 %v1688, 112
    %v1700 = vpop.permute.xlu0 %1699
    %v1701 = vsel %vm310, %v1694, %v1696
    %v1702 = vsel %vm310, %v1696, %v1698
    %v1703 = vsel %vm310, %v1698, %v1700
    %v1707 = vadd.f32 %v1626, %v1701
    %v1708 = vadd.f32 %v1627, %v1702
    %v1709 = vadd.f32 %v1628, %v1703
    %s1710 = sld [smem:[#allocation5 + $0x4b]]
    %v1711 = vstv %s1710
    %v1712 = vmul.f32 %v1711, %v1490
    %v1713 = vmul.f32 %v1711, %v1491
    %v1714 = vmul.f32 %v1711, %v1492
    %v1715 = vmul.f32 %v1711, %v1493
    %1720 = vrot.lane.b32.xlu0 %v1712, 112
    %v1721 = vpop.permute.xlu0 %1720
    %1722 = vrot.lane.b32.xlu0 %v1713, 112
    %v1723 = vpop.permute.xlu0 %1722
    %1724 = vrot.lane.b32.xlu0 %v1714, 112
    %v1725 = vpop.permute.xlu0 %1724
    %1726 = vrot.lane.b32.xlu0 %v1715, 112
    %v1727 = vpop.permute.xlu0 %1726
    %v1728 = vsel %vm310, %v1721, %v1723
    %v1729 = vsel %vm310, %v1723, %v1725
    %v1730 = vsel %vm310, %v1725, %v1727
    %v1734 = vadd.f32 %v1653, %v1728
    %v1735 = vadd.f32 %v1654, %v1729
    %v1736 = vadd.f32 %v1655, %v1730
    %s1737 = sld [smem:[#allocation5 + $0x16]]
    %v1738 = vstv %s1737
    %v1739 = vmul.f32 %v1738, %v1490
    %v1740 = vmul.f32 %v1738, %v1491
    %v1741 = vmul.f32 %v1738, %v1492
    %v1742 = vmul.f32 %v1738, %v1493
    %1747 = vrot.lane.b32.xlu0 %v1739, 111
    %v1748 = vpop.permute.xlu0 %1747
    %1749 = vrot.lane.b32.xlu0 %v1740, 111
    %v1750 = vpop.permute.xlu0 %1749
    %1751 = vrot.lane.b32.xlu0 %v1741, 111
    %v1752 = vpop.permute.xlu0 %1751
    %1753 = vrot.lane.b32.xlu0 %v1742, 111
    %v1754 = vpop.permute.xlu0 %1753
    %v1755 = vsel %vm392, %v1748, %v1750
    %v1756 = vsel %vm392, %v1750, %v1752
    %v1757 = vsel %vm392, %v1752, %v1754
    %v1761 = vadd.f32 %v1680, %v1755
    %v1762 = vadd.f32 %v1681, %v1756
    %v1763 = vadd.f32 %v1682, %v1757
    %s1764 = sld [smem:[#allocation5 + $0x31]]
    %v1765 = vstv %s1764
    %v1766 = vmul.f32 %v1765, %v1490
    %v1767 = vmul.f32 %v1765, %v1491
    %v1768 = vmul.f32 %v1765, %v1492
    %v1769 = vmul.f32 %v1765, %v1493
    %1774 = vrot.lane.b32.xlu0 %v1766, 111
    %v1775 = vpop.permute.xlu0 %1774
    %1776 = vrot.lane.b32.xlu0 %v1767, 111
    %v1777 = vpop.permute.xlu0 %1776
    %1778 = vrot.lane.b32.xlu0 %v1768, 111
    %v1779 = vpop.permute.xlu0 %1778
    %1780 = vrot.lane.b32.xlu0 %v1769, 111
    %v1781 = vpop.permute.xlu0 %1780
    %v1782 = vsel %vm392, %v1775, %v1777
    %v1783 = vsel %vm392, %v1777, %v1779
    %v1784 = vsel %vm392, %v1779, %v1781
    %v1788 = vadd.f32 %v1707, %v1782
    %v1789 = vadd.f32 %v1708, %v1783
    %v1790 = vadd.f32 %v1709, %v1784
    %s1791 = sld [smem:[#allocation5 + $0x4c]]
    %v1792 = vstv %s1791
    %v1793 = vmul.f32 %v1792, %v1490
    %v1794 = vmul.f32 %v1792, %v1491
    %v1795 = vmul.f32 %v1792, %v1492
    %v1796 = vmul.f32 %v1792, %v1493
    %1801 = vrot.lane.b32.xlu0 %v1793, 111
    %v1802 = vpop.permute.xlu0 %1801
    %1803 = vrot.lane.b32.xlu0 %v1794, 111
    %v1804 = vpop.permute.xlu0 %1803
    %1805 = vrot.lane.b32.xlu0 %v1795, 111
    %v1806 = vpop.permute.xlu0 %1805
    %1807 = vrot.lane.b32.xlu0 %v1796, 111
    %v1808 = vpop.permute.xlu0 %1807
    %v1809 = vsel %vm392, %v1802, %v1804
    %v1810 = vsel %vm392, %v1804, %v1806
    %v1811 = vsel %vm392, %v1806, %v1808
    %v1815 = vadd.f32 %v1734, %v1809
    %v1816 = vadd.f32 %v1735, %v1810
    %v1817 = vadd.f32 %v1736, %v1811
    %s1818 = sld [smem:[#allocation5 + $0x17]]
    %v1819 = vstv %s1818
    %v1820 = vmul.f32 %v1819, %v1490
    %v1821 = vmul.f32 %v1819, %v1491
    %v1822 = vmul.f32 %v1819, %v1492
    %v1823 = vmul.f32 %v1819, %v1493
    %1828 = vrot.lane.b32.xlu0 %v1820, 110
    %v1829 = vpop.permute.xlu0 %1828
    %1830 = vrot.lane.b32.xlu0 %v1821, 110
    %v1831 = vpop.permute.xlu0 %1830
    %1832 = vrot.lane.b32.xlu0 %v1822, 110
    %v1833 = vpop.permute.xlu0 %1832
    %1834 = vrot.lane.b32.xlu0 %v1823, 110
    %v1835 = vpop.permute.xlu0 %1834
    %v1836 = vsel %vm474, %v1829, %v1831
    %v1837 = vsel %vm474, %v1831, %v1833
    %v1838 = vsel %vm474, %v1833, %v1835
    %v1842 = vadd.f32 %v1761, %v1836
    %v1843 = vadd.f32 %v1762, %v1837
    %v1844 = vadd.f32 %v1763, %v1838
    %s1845 = sld [smem:[#allocation5 + $0x32]]
    %v1846 = vstv %s1845
    %v1847 = vmul.f32 %v1846, %v1490
    %v1848 = vmul.f32 %v1846, %v1491
    %v1849 = vmul.f32 %v1846, %v1492
    %v1850 = vmul.f32 %v1846, %v1493
    %1855 = vrot.lane.b32.xlu0 %v1847, 110
    %v1856 = vpop.permute.xlu0 %1855
    %1857 = vrot.lane.b32.xlu0 %v1848, 110
    %v1858 = vpop.permute.xlu0 %1857
    %1859 = vrot.lane.b32.xlu0 %v1849, 110
    %v1860 = vpop.permute.xlu0 %1859
    %1861 = vrot.lane.b32.xlu0 %v1850, 110
    %v1862 = vpop.permute.xlu0 %1861
    %v1863 = vsel %vm474, %v1856, %v1858
    %v1864 = vsel %vm474, %v1858, %v1860
    %v1865 = vsel %vm474, %v1860, %v1862
    %v1869 = vadd.f32 %v1788, %v1863
    %v1870 = vadd.f32 %v1789, %v1864
    %v1871 = vadd.f32 %v1790, %v1865
    %s1872 = sld [smem:[#allocation5 + $0x4d]]
    %v1873 = vstv %s1872
    %v1874 = vmul.f32 %v1873, %v1490
    %v1875 = vmul.f32 %v1873, %v1491
    %v1876 = vmul.f32 %v1873, %v1492
    %v1877 = vmul.f32 %v1873, %v1493
    %1882 = vrot.lane.b32.xlu0 %v1874, 110
    %v1883 = vpop.permute.xlu0 %1882
    %1884 = vrot.lane.b32.xlu0 %v1875, 110
    %v1885 = vpop.permute.xlu0 %1884
    %1886 = vrot.lane.b32.xlu0 %v1876, 110
    %v1887 = vpop.permute.xlu0 %1886
    %1888 = vrot.lane.b32.xlu0 %v1877, 110
    %v1889 = vpop.permute.xlu0 %1888
    %v1890 = vsel %vm474, %v1883, %v1885
    %v1891 = vsel %vm474, %v1885, %v1887
    %v1892 = vsel %vm474, %v1887, %v1889
    %v1896 = vadd.f32 %v1815, %v1890
    %v1897 = vadd.f32 %v1816, %v1891
    %v1898 = vadd.f32 %v1817, %v1892
    %s1899 = sld [smem:[#allocation5 + $0x18]]
    %v1900 = vstv %s1899
    %v1901 = vmul.f32 %v1900, %v1490
    %v1902 = vmul.f32 %v1900, %v1491
    %v1903 = vmul.f32 %v1900, %v1492
    %v1904 = vmul.f32 %v1900, %v1493
    %1909 = vrot.lane.b32.xlu0 %v1901, 96
    %v1910 = vpop.permute.xlu0 %1909
    %1911 = vrot.lane.b32.xlu0 %v1902, 96
    %v1912 = vpop.permute.xlu0 %1911
    %1913 = vrot.lane.b32.xlu0 %v1903, 96
    %v1914 = vpop.permute.xlu0 %1913
    %1915 = vrot.lane.b32.xlu0 %v1904, 96
    %v1916 = vpop.permute.xlu0 %1915
    %v1917 = vsel %vm556, %v1910, %v1912
    %v1918 = vsel %vm556, %v1912, %v1914
    %v1919 = vsel %vm556, %v1914, %v1916
    %v1923 = vadd.f32 %v1842, %v1917
    %v1924 = vadd.f32 %v1843, %v1918
    %v1925 = vadd.f32 %v1844, %v1919
    %s1926 = sld [smem:[#allocation5 + $0x33]]
    %v1927 = vstv %s1926
    %v1928 = vmul.f32 %v1927, %v1490
    %v1929 = vmul.f32 %v1927, %v1491
    %v1930 = vmul.f32 %v1927, %v1492
    %v1931 = vmul.f32 %v1927, %v1493
    %1936 = vrot.lane.b32.xlu0 %v1928, 96
    %v1937 = vpop.permute.xlu0 %1936
    %1938 = vrot.lane.b32.xlu0 %v1929, 96
    %v1939 = vpop.permute.xlu0 %1938
    %1940 = vrot.lane.b32.xlu0 %v1930, 96
    %v1941 = vpop.permute.xlu0 %1940
    %1942 = vrot.lane.b32.xlu0 %v1931, 96
    %v1943 = vpop.permute.xlu0 %1942
    %v1944 = vsel %vm556, %v1937, %v1939
    %v1945 = vsel %vm556, %v1939, %v1941
    %v1946 = vsel %vm556, %v1941, %v1943
    %v1950 = vadd.f32 %v1869, %v1944
    %v1951 = vadd.f32 %v1870, %v1945
    %v1952 = vadd.f32 %v1871, %v1946
    %s1953 = sld [smem:[#allocation5 + $0x4e]]
    %v1954 = vstv %s1953
    %v1955 = vmul.f32 %v1954, %v1490
    %v1956 = vmul.f32 %v1954, %v1491
    %v1957 = vmul.f32 %v1954, %v1492
    %v1958 = vmul.f32 %v1954, %v1493
    %1963 = vrot.lane.b32.xlu0 %v1955, 96
    %v1964 = vpop.permute.xlu0 %1963
    %1965 = vrot.lane.b32.xlu0 %v1956, 96
    %v1966 = vpop.permute.xlu0 %1965
    %1967 = vrot.lane.b32.xlu0 %v1957, 96
    %v1968 = vpop.permute.xlu0 %1967
    %1969 = vrot.lane.b32.xlu0 %v1958, 96
    %v1970 = vpop.permute.xlu0 %1969
    %v1971 = vsel %vm556, %v1964, %v1966
    %v1972 = vsel %vm556, %v1966, %v1968
    %v1973 = vsel %vm556, %v1968, %v1970
    %v1977 = vadd.f32 %v1896, %v1971
    %v1978 = vadd.f32 %v1897, %v1972
    %v1979 = vadd.f32 %v1898, %v1973
    %s1980 = sld [smem:[#allocation5 + $0x19]]
    %v1981 = vstv %s1980
    %v1982 = vmul.f32 %v1981, %v1490
    %v1983 = vmul.f32 %v1981, %v1491
    %v1984 = vmul.f32 %v1981, %v1492
    %v1985 = vmul.f32 %v1981, %v1493
    %1990 = vrot.lane.b32.xlu0 %v1982, 95
    %v1991 = vpop.permute.xlu0 %1990
    %1992 = vrot.lane.b32.xlu0 %v1983, 95
    %v1993 = vpop.permute.xlu0 %1992
    %1994 = vrot.lane.b32.xlu0 %v1984, 95
    %v1995 = vpop.permute.xlu0 %1994
    %1996 = vrot.lane.b32.xlu0 %v1985, 95
    %v1997 = vpop.permute.xlu0 %1996
    %v1998 = vsel %vm638, %v1991, %v1993
    %v1999 = vsel %vm638, %v1993, %v1995
    %v2000 = vsel %vm638, %v1995, %v1997
    %v2004 = vadd.f32 %v1923, %v1998
    %v2005 = vadd.f32 %v1924, %v1999
    %v2006 = vadd.f32 %v1925, %v2000
    %s2007 = sld [smem:[#allocation5 + $0x34]]
    %v2008 = vstv %s2007
    %v2009 = vmul.f32 %v2008, %v1490
    %v2010 = vmul.f32 %v2008, %v1491
    %v2011 = vmul.f32 %v2008, %v1492
    %v2012 = vmul.f32 %v2008, %v1493
    %2017 = vrot.lane.b32.xlu0 %v2009, 95
    %v2018 = vpop.permute.xlu0 %2017
    %2019 = vrot.lane.b32.xlu0 %v2010, 95
    %v2020 = vpop.permute.xlu0 %2019
    %2021 = vrot.lane.b32.xlu0 %v2011, 95
    %v2022 = vpop.permute.xlu0 %2021
    %2023 = vrot.lane.b32.xlu0 %v2012, 95
    %v2024 = vpop.permute.xlu0 %2023
    %v2025 = vsel %vm638, %v2018, %v2020
    %v2026 = vsel %vm638, %v2020, %v2022
    %v2027 = vsel %vm638, %v2022, %v2024
    %v2031 = vadd.f32 %v1950, %v2025
    %v2032 = vadd.f32 %v1951, %v2026
    %v2033 = vadd.f32 %v1952, %v2027
    %s2034 = sld [smem:[#allocation5 + $0x4f]]
    %v2035 = vstv %s2034
    %v2036 = vmul.f32 %v2035, %v1490
    %v2037 = vmul.f32 %v2035, %v1491
    %v2038 = vmul.f32 %v2035, %v1492
    %v2039 = vmul.f32 %v2035, %v1493
    %2044 = vrot.lane.b32.xlu0 %v2036, 95
    %v2045 = vpop.permute.xlu0 %2044
    %2046 = vrot.lane.b32.xlu0 %v2037, 95
    %v2047 = vpop.permute.xlu0 %2046
    %2048 = vrot.lane.b32.xlu0 %v2038, 95
    %v2049 = vpop.permute.xlu0 %2048
    %2050 = vrot.lane.b32.xlu0 %v2039, 95
    %v2051 = vpop.permute.xlu0 %2050
    %v2052 = vsel %vm638, %v2045, %v2047
    %v2053 = vsel %vm638, %v2047, %v2049
    %v2054 = vsel %vm638, %v2049, %v2051
    %v2058 = vadd.f32 %v1977, %v2052
    %v2059 = vadd.f32 %v1978, %v2053
    %v2060 = vadd.f32 %v1979, %v2054
    %s2061 = sld [smem:[#allocation5 + $0x1a]]
    %v2062 = vstv %s2061
    %v2063 = vmul.f32 %v2062, %v1490
    %v2064 = vmul.f32 %v2062, %v1491
    %v2065 = vmul.f32 %v2062, %v1492
    %v2066 = vmul.f32 %v2062, %v1493
    %2071 = vrot.lane.b32.xlu0 %v2063, 94
    %v2072 = vpop.permute.xlu0 %2071
    %2073 = vrot.lane.b32.xlu0 %v2064, 94
    %v2074 = vpop.permute.xlu0 %2073
    %2075 = vrot.lane.b32.xlu0 %v2065, 94
    %v2076 = vpop.permute.xlu0 %2075
    %2077 = vrot.lane.b32.xlu0 %v2066, 94
    %v2078 = vpop.permute.xlu0 %2077
    %v2079 = vsel %vm720, %v2072, %v2074
    %v2080 = vsel %vm720, %v2074, %v2076
    %v2081 = vsel %vm720, %v2076, %v2078
    %v2085 = vadd.f32 %v2004, %v2079
    %v2086 = vadd.f32 %v2005, %v2080
    %v2087 = vadd.f32 %v2006, %v2081
    %s2088 = sld [smem:[#allocation5 + $0x35]]
    %v2089 = vstv %s2088
    %v2090 = vmul.f32 %v2089, %v1490
    %v2091 = vmul.f32 %v2089, %v1491
    %v2092 = vmul.f32 %v2089, %v1492
    %v2093 = vmul.f32 %v2089, %v1493
    %2098 = vrot.lane.b32.xlu0 %v2090, 94
    %v2099 = vpop.permute.xlu0 %2098
    %2100 = vrot.lane.b32.xlu0 %v2091, 94
    %v2101 = vpop.permute.xlu0 %2100
    %2102 = vrot.lane.b32.xlu0 %v2092, 94
    %v2103 = vpop.permute.xlu0 %2102
    %2104 = vrot.lane.b32.xlu0 %v2093, 94
    %v2105 = vpop.permute.xlu0 %2104
    %v2106 = vsel %vm720, %v2099, %v2101
    %v2107 = vsel %vm720, %v2101, %v2103
    %v2108 = vsel %vm720, %v2103, %v2105
    %v2112 = vadd.f32 %v2031, %v2106
    %v2113 = vadd.f32 %v2032, %v2107
    %v2114 = vadd.f32 %v2033, %v2108
    %s2115 = sld [smem:[#allocation5 + $0x50]]
    %v2116 = vstv %s2115
    %v2117 = vmul.f32 %v2116, %v1490
    %v2118 = vmul.f32 %v2116, %v1491
    %v2119 = vmul.f32 %v2116, %v1492
    %v2120 = vmul.f32 %v2116, %v1493
    %2125 = vrot.lane.b32.xlu0 %v2117, 94
    %v2126 = vpop.permute.xlu0 %2125
    %2127 = vrot.lane.b32.xlu0 %v2118, 94
    %v2128 = vpop.permute.xlu0 %2127
    %2129 = vrot.lane.b32.xlu0 %v2119, 94
    %v2130 = vpop.permute.xlu0 %2129
    %2131 = vrot.lane.b32.xlu0 %v2120, 94
    %v2132 = vpop.permute.xlu0 %2131
    %v2133 = vsel %vm720, %v2126, %v2128
    %v2134 = vsel %vm720, %v2128, %v2130
    %v2135 = vsel %vm720, %v2130, %v2132
    %v2139 = vadd.f32 %v2058, %v2133
    %v2140 = vadd.f32 %v2059, %v2134
    %v2141 = vadd.f32 %v2060, %v2135
    %v2142 = vmax.f32 %v2085, 0.0
    %v2143 = vmax.f32 %v2086, 0.0
    %v2144 = vmax.f32 %v2087, 0.0
    %2145 = vst [vmem:[#allocation3] sm:$0xff] %v2142
    %2146 = vst [vmem:[#allocation3 + $0x8] sm:$0xff] %v2143
    %2147 = vst [vmem:[#allocation3 + $0x10] sm:$0xff] %v2144
    %v2148 = vmax.f32 %v2112, 0.0
    %v2149 = vmax.f32 %v2113, 0.0
    %v2150 = vmax.f32 %v2114, 0.0
    %s2151 = scalar_lea.vmem [#allocation3], 24
    %2152 = vst [vmem:[%s2151] sm:$0xff] %v2148
    %2153 = vst [vmem:[%s2151 + $0x8] sm:$0xff] %v2149
    %2154 = vst [vmem:[%s2151 + $0x10] sm:$0xff] %v2150
    %v2155 = vmax.f32 %v2139, 0.0
    %v2156 = vmax.f32 %v2140, 0.0
    %v2157 = vmax.f32 %v2141, 0.0
    %s2158 = scalar_lea.vmem [#allocation3], 48
    %2159 = vst [vmem:[%s2158] sm:$0xff] %v2155
    %2160 = vst [vmem:[%s2158 + $0x8] sm:$0xff] %v2156
    %2161 = vst [vmem:[%s2158 + $0x10] sm:$0xff] %v2157
    %s2162 = sld [smem:[#allocation4]]
    %v2163 = vstv %s2162
    %s2164 = sld [smem:[#allocation10]]
    %v2165 = vld [vmem:[#allocation3] sm:$0xff]
    %v2166 = vld [vmem:[#allocation3 + $0x8] sm:$0xff]
    %v2167 = vstv %s2164
    %v2168 = vmul.f32 %v2167, %v2165
    %v2169 = vmul.f32 %v2167, %v2166
    %v2170 = vadd.f32 %v2163, %v2168
    %v2171 = vadd.f32 %v2163, %v2169
    %s2172 = sld [smem:[#allocation10 + $0x1]]
    %v2173 = vld [vmem:[#allocation3] sm:$0xff]
    %v2174 = vld [vmem:[#allocation3 + $0x8] sm:$0xff]
    %v2175 = vld [vmem:[#allocation3 + $0x10] sm:$0xff]
    %v2176 = vstv %s2172
    %v2177 = vmul.f32 %v2176, %v2173
    %v2178 = vmul.f32 %v2176, %v2174
    %v2179 = vmul.f32 %v2176, %v2175
    %2183 = vrot.lane.b32.xlu0 %v2177, 127
    %v2184 = vpop.permute.xlu0 %2183
    %2185 = vrot.lane.b32.xlu0 %v2178, 127
    %v2186 = vpop.permute.xlu0 %2185
    %2187 = vrot.lane.b32.xlu0 %v2179, 127
    %v2188 = vpop.permute.xlu0 %2187
    %v2189 = vsel %vm146, %v2184, %v2186
    %v2190 = vsel %vm146, %v2186, %v2188
    %v2193 = vadd.f32 %v2170, %v2189
    %v2194 = vadd.f32 %v2171, %v2190
    %s2195 = sld [smem:[#allocation10 + $0x2]]
    %v2196 = vstv %s2195
    %v2197 = vmul.f32 %v2196, %v2173
    %v2198 = vmul.f32 %v2196, %v2174
    %v2199 = vmul.f32 %v2196, %v2175
    %2203 = vrot.lane.b32.xlu0 %v2197, 126
    %v2204 = vpop.permute.xlu0 %2203
    %2205 = vrot.lane.b32.xlu0 %v2198, 126
    %v2206 = vpop.permute.xlu0 %2205
    %2207 = vrot.lane.b32.xlu0 %v2199, 126
    %v2208 = vpop.permute.xlu0 %2207
    %v2209 = vsel %vm228, %v2204, %v2206
    %v2210 = vsel %vm228, %v2206, %v2208
    %v2213 = vadd.f32 %v2193, %v2209
    %v2214 = vadd.f32 %v2194, %v2210
    %s2215 = sld [smem:[#allocation10 + $0x9]]
    %v2216 = vld [vmem:[%s2151] sm:$0xff]
    %v2217 = vld [vmem:[%s2151 + $0x8] sm:$0xff]
    %v2218 = vstv %s2215
    %v2219 = vmul.f32 %v2218, %v2216
    %v2220 = vmul.f32 %v2218, %v2217
    %v2221 = vadd.f32 %v2213, %v2219
    %v2222 = vadd.f32 %v2214, %v2220
    %s2223 = sld [smem:[#allocation10 + $0xa]]
    %v2224 = vld [vmem:[%s2151] sm:$0xff]
    %v2225 = vld [vmem:[%s2151 + $0x8] sm:$0xff]
    %v2226 = vld [vmem:[%s2151 + $0x10] sm:$0xff]
    %v2227 = vstv %s2223
    %v2228 = vmul.f32 %v2227, %v2224
    %v2229 = vmul.f32 %v2227, %v2225
    %v2230 = vmul.f32 %v2227, %v2226
    %2234 = vrot.lane.b32.xlu0 %v2228, 127
    %v2235 = vpop.permute.xlu0 %2234
    %2236 = vrot.lane.b32.xlu0 %v2229, 127
    %v2237 = vpop.permute.xlu0 %2236
    %2238 = vrot.lane.b32.xlu0 %v2230, 127
    %v2239 = vpop.permute.xlu0 %2238
    %v2240 = vsel %vm146, %v2235, %v2237
    %v2241 = vsel %vm146, %v2237, %v2239
    %v2244 = vadd.f32 %v2221, %v2240
    %v2245 = vadd.f32 %v2222, %v2241
    %s2246 = sld [smem:[#allocation10 + $0xb]]
    %v2247 = vstv %s2246
    %v2248 = vmul.f32 %v2247, %v2224
    %v2249 = vmul.f32 %v2247, %v2225
    %v2250 = vmul.f32 %v2247, %v2226
    %2254 = vrot.lane.b32.xlu0 %v2248, 126
    %v2255 = vpop.permute.xlu0 %2254
    %2256 = vrot.lane.b32.xlu0 %v2249, 126
    %v2257 = vpop.permute.xlu0 %2256
    %2258 = vrot.lane.b32.xlu0 %v2250, 126
    %v2259 = vpop.permute.xlu0 %2258
    %v2260 = vsel %vm228, %v2255, %v2257
    %v2261 = vsel %vm228, %v2257, %v2259
    %v2264 = vadd.f32 %v2244, %v2260
    %v2265 = vadd.f32 %v2245, %v2261
    %s2266 = sld [smem:[#allocation10 + $0x12]]
    %v2267 = vld [vmem:[%s2158] sm:$0xff]
    %v2268 = vld [vmem:[%s2158 + $0x8] sm:$0xff]
    %v2269 = vstv %s2266
    %v2270 = vmul.f32 %v2269, %v2267
    %v2271 = vmul.f32 %v2269, %v2268
    %v2272 = vadd.f32 %v2264, %v2270
    %v2273 = vadd.f32 %v2265, %v2271
    %s2274 = sld [smem:[#allocation10 + $0x13]]
    %v2275 = vld [vmem:[%s2158] sm:$0xff]
    %v2276 = vld [vmem:[%s2158 + $0x8] sm:$0xff]
    %v2277 = vld [vmem:[%s2158 + $0x10] sm:$0xff]
    %v2278 = vstv %s2274
    %v2279 = vmul.f32 %v2278, %v2275
    %v2280 = vmul.f32 %v2278, %v2276
    %v2281 = vmul.f32 %v2278, %v2277
    %2285 = vrot.lane.b32.xlu0 %v2279, 127
    %v2286 = vpop.permute.xlu0 %2285
    %2287 = vrot.lane.b32.xlu0 %v2280, 127
    %v2288 = vpop.permute.xlu0 %2287
    %2289 = vrot.lane.b32.xlu0 %v2281, 127
    %v2290 = vpop.permute.xlu0 %2289
    %v2291 = vsel %vm146, %v2286, %v2288
    %v2292 = vsel %vm146, %v2288, %v2290
    %v2295 = vadd.f32 %v2272, %v2291
    %v2296 = vadd.f32 %v2273, %v2292
    %s2297 = sld [smem:[#allocation10 + $0x14]]
    %v2298 = vstv %s2297
    %v2299 = vmul.f32 %v2298, %v2275
    %v2300 = vmul.f32 %v2298, %v2276
    %v2301 = vmul.f32 %v2298, %v2277
    %2305 = vrot.lane.b32.xlu0 %v2299, 126
    %v2306 = vpop.permute.xlu0 %2305
    %2307 = vrot.lane.b32.xlu0 %v2300, 126
    %v2308 = vpop.permute.xlu0 %2307
    %2309 = vrot.lane.b32.xlu0 %v2301, 126
    %v2310 = vpop.permute.xlu0 %2309
    %v2311 = vsel %vm228, %v2306, %v2308
    %v2312 = vsel %vm228, %v2308, %v2310
    %v2315 = vadd.f32 %v2295, %v2311
    %v2316 = vadd.f32 %v2296, %v2312
    %s2317 = sld [smem:[#allocation10 + $0x3]]
    %v2318 = vstv %s2317
    %v2319 = vmul.f32 %v2318, %v2173
    %v2320 = vmul.f32 %v2318, %v2174
    %v2321 = vmul.f32 %v2318, %v2175
    %v2322 = vadd.f32 %v2319, 0.0
    %v2323 = vadd.f32 %v2320, 0.0
    %v2324 = vadd.f32 %v2321, 0.0
    %s2325 = sld [smem:[#allocation10 + $0x4]]
    %v2326 = vstv %s2325
    %v2327 = vmul.f32 %v2326, %v2173
    %v2328 = vmul.f32 %v2326, %v2174
    %v2329 = vmul.f32 %v2326, %v2175
    %2333 = vrot.lane.b32.xlu0 %v2327, 127
    %v2334 = vpop.permute.xlu0 %2333
    %2335 = vrot.lane.b32.xlu0 %v2328, 127
    %v2336 = vpop.permute.xlu0 %2335
    %2337 = vrot.lane.b32.xlu0 %v2329, 127
    %v2338 = vpop.permute.xlu0 %2337
    %v2339 = vsel %vm146, %v2334, %v2336
    %v2340 = vsel %vm146, %v2336, %v2338
    %v2344 = vadd.f32 %v2322, %v2339
    %v2345 = vadd.f32 %v2323, %v2340
    %v2346 = vadd.f32 %v2324, %v2338
    %s2347 = sld [smem:[#allocation10 + $0x5]]
    %v2348 = vstv %s2347
    %v2349 = vmul.f32 %v2348, %v2173
    %v2350 = vmul.f32 %v2348, %v2174
    %v2351 = vmul.f32 %v2348, %v2175
    %2355 = vrot.lane.b32.xlu0 %v2349, 126
    %v2356 = vpop.permute.xlu0 %2355
    %2357 = vrot.lane.b32.xlu0 %v2350, 126
    %v2358 = vpop.permute.xlu0 %2357
    %2359 = vrot.lane.b32.xlu0 %v2351, 126
    %v2360 = vpop.permute.xlu0 %2359
    %v2361 = vsel %vm228, %v2356, %v2358
    %v2362 = vsel %vm228, %v2358, %v2360
    %v2366 = vadd.f32 %v2344, %v2361
    %v2367 = vadd.f32 %v2345, %v2362
    %v2368 = vadd.f32 %v2346, %v2360
    %s2369 = sld [smem:[#allocation10 + $0xc]]
    %v2370 = vstv %s2369
    %v2371 = vmul.f32 %v2370, %v2224
    %v2372 = vmul.f32 %v2370, %v2225
    %v2373 = vmul.f32 %v2370, %v2226
    %v2374 = vadd.f32 %v2366, %v2371
    %v2375 = vadd.f32 %v2367, %v2372
    %v2376 = vadd.f32 %v2368, %v2373
    %s2377 = sld [smem:[#allocation10 + $0xd]]
    %v2378 = vstv %s2377
    %v2379 = vmul.f32 %v2378, %v2224
    %v2380 = vmul.f32 %v2378, %v2225
    %v2381 = vmul.f32 %v2378, %v2226
    %2385 = vrot.lane.b32.xlu0 %v2379, 127
    %v2386 = vpop.permute.xlu0 %2385
    %2387 = vrot.lane.b32.xlu0 %v2380, 127
    %v2388 = vpop.permute.xlu0 %2387
    %2389 = vrot.lane.b32.xlu0 %v2381, 127
    %v2390 = vpop.permute.xlu0 %2389
    %v2391 = vsel %vm146, %v2386, %v2388
    %v2392 = vsel %vm146, %v2388, %v2390
    %v2396 = vadd.f32 %v2374, %v2391
    %v2397 = vadd.f32 %v2375, %v2392
    %v2398 = vadd.f32 %v2376, %v2390
    %s2399 = sld [smem:[#allocation10 + $0xe]]
    %v2400 = vstv %s2399
    %v2401 = vmul.f32 %v2400, %v2224
    %v2402 = vmul.f32 %v2400, %v2225
    %v2403 = vmul.f32 %v2400, %v2226
    %2407 = vrot.lane.b32.xlu0 %v2401, 126
    %v2408 = vpop.permute.xlu0 %2407
    %2409 = vrot.lane.b32.xlu0 %v2402, 126
    %v2410 = vpop.permute.xlu0 %2409
    %2411 = vrot.lane.b32.xlu0 %v2403, 126
    %v2412 = vpop.permute.xlu0 %2411
    %v2413 = vsel %vm228, %v2408, %v2410
    %v2414 = vsel %vm228, %v2410, %v2412
    %v2418 = vadd.f32 %v2396, %v2413
    %v2419 = vadd.f32 %v2397, %v2414
    %v2420 = vadd.f32 %v2398, %v2412
    %s2421 = sld [smem:[#allocation10 + $0x15]]
    %v2422 = vstv %s2421
    %v2423 = vmul.f32 %v2422, %v2275
    %v2424 = vmul.f32 %v2422, %v2276
    %v2425 = vmul.f32 %v2422, %v2277
    %v2426 = vadd.f32 %v2418, %v2423
    %v2427 = vadd.f32 %v2419, %v2424
    %v2428 = vadd.f32 %v2420, %v2425
    %s2429 = sld [smem:[#allocation10 + $0x16]]
    %v2430 = vstv %s2429
    %v2431 = vmul.f32 %v2430, %v2275
    %v2432 = vmul.f32 %v2430, %v2276
    %v2433 = vmul.f32 %v2430, %v2277
    %2437 = vrot.lane.b32.xlu0 %v2431, 127
    %v2438 = vpop.permute.xlu0 %2437
    %2439 = vrot.lane.b32.xlu0 %v2432, 127
    %v2440 = vpop.permute.xlu0 %2439
    %2441 = vrot.lane.b32.xlu0 %v2433, 127
    %v2442 = vpop.permute.xlu0 %2441
    %v2443 = vsel %vm146, %v2438, %v2440
    %v2444 = vsel %vm146, %v2440, %v2442
    %v2448 = vadd.f32 %v2426, %v2443
    %v2449 = vadd.f32 %v2427, %v2444
    %v2450 = vadd.f32 %v2428, %v2442
    %s2451 = sld [smem:[#allocation10 + $0x17]]
    %v2452 = vstv %s2451
    %v2453 = vmul.f32 %v2452, %v2275
    %v2454 = vmul.f32 %v2452, %v2276
    %v2455 = vmul.f32 %v2452, %v2277
    %2459 = vrot.lane.b32.xlu0 %v2453, 126
    %v2460 = vpop.permute.xlu0 %2459
    %2461 = vrot.lane.b32.xlu0 %v2454, 126
    %v2462 = vpop.permute.xlu0 %2461
    %2463 = vrot.lane.b32.xlu0 %v2455, 126
    %v2464 = vpop.permute.xlu0 %2463
    %v2465 = vsel %vm228, %v2460, %v2462
    %v2466 = vsel %vm228, %v2462, %v2464
    %v2470 = vadd.f32 %v2448, %v2465
    %v2471 = vadd.f32 %v2449, %v2466
    %v2472 = vadd.f32 %v2450, %v2464
    %s2473 = sld [smem:[#allocation10 + $0x6]]
    %v2474 = vstv %s2473
    %v2475 = vmul.f32 %v2474, %v2173
    %v2476 = vmul.f32 %v2474, %v2174
    %v2477 = vmul.f32 %v2474, %v2175
    %v2478 = vadd.f32 %v2475, 0.0
    %v2479 = vadd.f32 %v2476, 0.0
    %v2480 = vadd.f32 %v2477, 0.0
    %s2481 = sld [smem:[#allocation10 + $0x7]]
    %v2482 = vstv %s2481
    %v2483 = vmul.f32 %v2482, %v2173
    %v2484 = vmul.f32 %v2482, %v2174
    %v2485 = vmul.f32 %v2482, %v2175
    %2489 = vrot.lane.b32.xlu0 %v2483, 127
    %v2490 = vpop.permute.xlu0 %2489
    %2491 = vrot.lane.b32.xlu0 %v2484, 127
    %v2492 = vpop.permute.xlu0 %2491
    %2493 = vrot.lane.b32.xlu0 %v2485, 127
    %v2494 = vpop.permute.xlu0 %2493
    %v2495 = vsel %vm146, %v2490, %v2492
    %v2496 = vsel %vm146, %v2492, %v2494
    %v2500 = vadd.f32 %v2478, %v2495
    %v2501 = vadd.f32 %v2479, %v2496
    %v2502 = vadd.f32 %v2480, %v2494
    %s2503 = sld [smem:[#allocation10 + $0x8]]
    %v2504 = vstv %s2503
    %v2505 = vmul.f32 %v2504, %v2173
    %v2506 = vmul.f32 %v2504, %v2174
    %v2507 = vmul.f32 %v2504, %v2175
    %2511 = vrot.lane.b32.xlu0 %v2505, 126
    %v2512 = vpop.permute.xlu0 %2511
    %2513 = vrot.lane.b32.xlu0 %v2506, 126
    %v2514 = vpop.permute.xlu0 %2513
    %2515 = vrot.lane.b32.xlu0 %v2507, 126
    %v2516 = vpop.permute.xlu0 %2515
    %v2517 = vsel %vm228, %v2512, %v2514
    %v2518 = vsel %vm228, %v2514, %v2516
    %v2522 = vadd.f32 %v2500, %v2517
    %v2523 = vadd.f32 %v2501, %v2518
    %v2524 = vadd.f32 %v2502, %v2516
    %s2525 = sld [smem:[#allocation10 + $0xf]]
    %v2526 = vstv %s2525
    %v2527 = vmul.f32 %v2526, %v2224
    %v2528 = vmul.f32 %v2526, %v2225
    %v2529 = vmul.f32 %v2526, %v2226
    %v2530 = vadd.f32 %v2522, %v2527
    %v2531 = vadd.f32 %v2523, %v2528
    %v2532 = vadd.f32 %v2524, %v2529
    %s2533 = sld [smem:[#allocation10 + $0x10]]
    %v2534 = vstv %s2533
    %v2535 = vmul.f32 %v2534, %v2224
    %v2536 = vmul.f32 %v2534, %v2225
    %v2537 = vmul.f32 %v2534, %v2226
    %2541 = vrot.lane.b32.xlu0 %v2535, 127
    %v2542 = vpop.permute.xlu0 %2541
    %2543 = vrot.lane.b32.xlu0 %v2536, 127
    %v2544 = vpop.permute.xlu0 %2543
    %2545 = vrot.lane.b32.xlu0 %v2537, 127
    %v2546 = vpop.permute.xlu0 %2545
    %v2547 = vsel %vm146, %v2542, %v2544
    %v2548 = vsel %vm146, %v2544, %v2546
    %v2552 = vadd.f32 %v2530, %v2547
    %v2553 = vadd.f32 %v2531, %v2548
    %v2554 = vadd.f32 %v2532, %v2546
    %s2555 = sld [smem:[#allocation10 + $0x11]]
    %v2556 = vstv %s2555
    %v2557 = vmul.f32 %v2556, %v2224
    %v2558 = vmul.f32 %v2556, %v2225
    %v2559 = vmul.f32 %v2556, %v2226
    %2563 = vrot.lane.b32.xlu0 %v2557, 126
    %v2564 = vpop.permute.xlu0 %2563
    %2565 = vrot.lane.b32.xlu0 %v2558, 126
    %v2566 = vpop.permute.xlu0 %2565
    %2567 = vrot.lane.b32.xlu0 %v2559, 126
    %v2568 = vpop.permute.xlu0 %2567
    %v2569 = vsel %vm228, %v2564, %v2566
    %v2570 = vsel %vm228, %v2566, %v2568
    %v2574 = vadd.f32 %v2552, %v2569
    %v2575 = vadd.f32 %v2553, %v2570
    %v2576 = vadd.f32 %v2554, %v2568
    %s2577 = sld [smem:[#allocation10 + $0x18]]
    %v2578 = vstv %s2577
    %v2579 = vmul.f32 %v2578, %v2275
    %v2580 = vmul.f32 %v2578, %v2276
    %v2581 = vmul.f32 %v2578, %v2277
    %v2582 = vadd.f32 %v2574, %v2579
    %v2583 = vadd.f32 %v2575, %v2580
    %v2584 = vadd.f32 %v2576, %v2581
    %s2585 = sld [smem:[#allocation10 + $0x19]]
    %v2586 = vstv %s2585
    %v2587 = vmul.f32 %v2586, %v2275
    %v2588 = vmul.f32 %v2586, %v2276
    %v2589 = vmul.f32 %v2586, %v2277
    %2593 = vrot.lane.b32.xlu0 %v2587, 127
    %v2594 = vpop.permute.xlu0 %2593
    %2595 = vrot.lane.b32.xlu0 %v2588, 127
    %v2596 = vpop.permute.xlu0 %2595
    %2597 = vrot.lane.b32.xlu0 %v2589, 127
    %v2598 = vpop.permute.xlu0 %2597
    %v2599 = vsel %vm146, %v2594, %v2596
    %v2600 = vsel %vm146, %v2596, %v2598
    %v2604 = vadd.f32 %v2582, %v2599
    %v2605 = vadd.f32 %v2583, %v2600
    %v2606 = vadd.f32 %v2584, %v2598
    %s2607 = sld [smem:[#allocation10 + $0x1a]]
    %v2608 = vstv %s2607
    %v2609 = vmul.f32 %v2608, %v2275
    %v2610 = vmul.f32 %v2608, %v2276
    %v2611 = vmul.f32 %v2608, %v2277
    %2615 = vrot.lane.b32.xlu0 %v2609, 126
    %v2616 = vpop.permute.xlu0 %2615
    %2617 = vrot.lane.b32.xlu0 %v2610, 126
    %v2618 = vpop.permute.xlu0 %2617
    %2619 = vrot.lane.b32.xlu0 %v2611, 126
    %v2620 = vpop.permute.xlu0 %2619
    %v2621 = vsel %vm228, %v2616, %v2618
    %v2622 = vsel %vm228, %v2618, %v2620
    %v2626 = vadd.f32 %v2604, %v2621
    %v2627 = vadd.f32 %v2605, %v2622
    %v2628 = vadd.f32 %v2606, %v2620
    %2632 = vrot.lane.b32.xlu0 %v2470, 112
    %v2633 = vpop.permute.xlu0 %2632
    %2634 = vrot.lane.b32.xlu0 %v2471, 112
    %v2635 = vpop.permute.xlu0 %2634
    %2636 = vrot.lane.b32.xlu0 %v2472, 112
    %v2637 = vpop.permute.xlu0 %2636
    %v2638 = vsel %vm310, %v2633, %v2635
    %v2639 = vsel %vm310, %v2635, %v2637
    %v2642 = vadd.f32 %v2315, %v2638
    %v2643 = vadd.f32 %v2316, %v2639
    %2647 = vrot.lane.b32.xlu0 %v2626, 96
    %v2648 = vpop.permute.xlu0 %2647
    %2649 = vrot.lane.b32.xlu0 %v2627, 96
    %v2650 = vpop.permute.xlu0 %2649
    %2651 = vrot.lane.b32.xlu0 %v2628, 96
    %v2652 = vpop.permute.xlu0 %2651
    %v2653 = vsel %vm556, %v2648, %v2650
    %v2654 = vsel %vm556, %v2650, %v2652
    %v2657 = vadd.f32 %v2642, %v2653
    %v2658 = vadd.f32 %v2643, %v2654
    %v2659 = vmax.f32 %v2657, 0.0
    %v2660 = vmax.f32 %v2658, 0.0
    %v2661 = vld [vmem:[#allocation11] sm:$0xff]
    %v2662 = vld [vmem:[#allocation11 + $0x8] sm:$0xff]
    %v2663 = vld [vmem:[#allocation11 + $0x10] sm:$0xff]
    %v2664 = vld [vmem:[#allocation11 + $0x18] sm:$0xff]
    %v2665 = vld [vmem:[#allocation11 + $0x20] sm:$0xff]
    %v2666 = vld [vmem:[#allocation11 + $0x28] sm:$0xff]
    %v2667 = vld [vmem:[#allocation11 + $0x30] sm:$0xff]
    %v2668 = vld [vmem:[#allocation11 + $0x38] sm:$0xff]
    %v2669 = vld [vmem:[#allocation11 + $0x40] sm:$0xff]
    %v2670 = vld [vmem:[#allocation11 + $0x48] sm:$0xff]
    %v2671 = vld [vmem:[#allocation11 + $0x50] sm:$0xff]
    %v2672 = vld [vmem:[#allocation11 + $0x58] sm:$0xff]
    %v2673 = vld [vmem:[#allocation11 + $0x60] sm:$0xff]
    %v2674 = vld [vmem:[#allocation11 + $0x68] sm:$0xff]
    %v2675 = vld [vmem:[#allocation11 + $0x70] sm:$0xff]
    %v2676 = vld [vmem:[#allocation11 + $0x78] sm:$0xff]
    %v2677 = vld [vmem:[#allocation11 + $0x80] sm:$0xff]
    %v2678 = vld [vmem:[#allocation11 + $0x88] sm:$0xff]
    %v2679 = vld [vmem:[#allocation11 + $0x90] sm:$0xff]
    %v2680 = vld [vmem:[#allocation11 + $0x98] sm:$0xff]
    %v2681 = vld [vmem:[#allocation11 + $0xa0] sm:$0xff]
    %v2682 = vld [vmem:[#allocation11 + $0xa8] sm:$0xff]
    %v2683 = vld [vmem:[#allocation11 + $0xb0] sm:$0xff]
    %v2684 = vld [vmem:[#allocation11 + $0xb8] sm:$0xff]
    %v2685 = vld [vmem:[#allocation11 + $0xc0] sm:$0xff]
    %v2686 = vld [vmem:[#allocation11 + $0xc8] sm:$0xff]
    %v2687 = vld [vmem:[#allocation11 + $0xd0] sm:$0xff]
    %v2688 = vld [vmem:[#allocation11 + $0xd8] sm:$0xff]
    %v2689 = vld [vmem:[#allocation11 + $0xe0] sm:$0xff]
    %v2690 = vld [vmem:[#allocation11 + $0xe8] sm:$0xff]
    %v2691 = vld [vmem:[#allocation11 + $0xf0] sm:$0xff]
    %v2692 = vld [vmem:[#allocation11 + $0xf8] sm:$0xff]
    %v2693 = vld [vmem:[%s6] sm:$0x1]
    %v2695 = vlaneseq
    %v2696 = vshrl.u32 %v2695, 7
    %v2697 = vsub.s32 0, %v2696
    %v2698 = vrot.slane %v2693, %v2697
    %2700 = vmatprep.subr.mxu0 0.0
    %2701 = vmatpush1.msra.mxu0 %v2676
    %2702 = vmatprep.subr.mxu0 0.0
    %2703 = vmatpush1.msra.mxu0 %v2675
    %2704 = vmatprep.subr.mxu0 0.0
    %2705 = vmatpush1.msra.mxu0 %v2674
    %2706 = vmatprep.subr.mxu0 0.0
    %2707 = vmatpush1.msra.mxu0 %v2673
    %2708 = vmatprep.subr.mxu0 0.0
    %2709 = vmatpush1.msra.mxu0 %v2672
    %2710 = vmatprep.subr.mxu0 0.0
    %2711 = vmatpush1.msra.mxu0 %v2671
    %2712 = vmatprep.subr.mxu0 0.0
    %2713 = vmatpush1.msra.mxu0 %v2670
    %2714 = vmatprep.subr.mxu0 0.0
    %2715 = vmatpush1.msra.mxu0 %v2669
    %2716 = vmatprep.subr.mxu0 0.0
    %2717 = vmatpush1.msra.mxu0 %v2668
    %2718 = vmatprep.subr.mxu0 0.0
    %2719 = vmatpush1.msra.mxu0 %v2667
    %2720 = vmatprep.subr.mxu0 0.0
    %2721 = vmatpush1.msra.mxu0 %v2666
    %2722 = vmatprep.subr.mxu0 0.0
    %2723 = vmatpush1.msra.mxu0 %v2665
    %2724 = vmatprep.subr.mxu0 0.0
    %2725 = vmatpush1.msra.mxu0 %v2664
    %2726 = vmatprep.subr.mxu0 0.0
    %2727 = vmatpush1.msra.mxu0 %v2663
    %2728 = vmatprep.subr.mxu0 0.0
    %2729 = vmatpush1.msra.mxu0 %v2662
    %2730 = vmatprep.subr.mxu0 0.0
    %2731 = vmatpush1.msra.mxu0 %v2661
    %2732 = vmatprep.subr.mxu0 0.0
    %2733 = vmatpush2.msra.mxu0 %v2692
    %2734 = vmatprep.subr.mxu0 0.0
    %2735 = vmatpush2.msra.mxu0 %v2691
    %2736 = vmatprep.subr.mxu0 0.0
    %2737 = vmatpush2.msra.mxu0 %v2690
    %2738 = vmatprep.subr.mxu0 0.0
    %2739 = vmatpush2.msra.mxu0 %v2689
    %2740 = vmatprep.subr.mxu0 0.0
    %2741 = vmatpush2.msra.mxu0 %v2688
    %2742 = vmatprep.subr.mxu0 0.0
    %2743 = vmatpush2.msra.mxu0 %v2687
    %2744 = vmatprep.subr.mxu0 0.0
    %2745 = vmatpush2.msra.mxu0 %v2686
    %2746 = vmatprep.subr.mxu0 0.0
    %2747 = vmatpush2.msra.mxu0 %v2685
    %2748 = vmatprep.subr.mxu0 0.0
    %2749 = vmatpush2.msra.mxu0 %v2684
    %2750 = vmatprep.subr.mxu0 0.0
    %2751 = vmatpush2.msra.mxu0 %v2683
    %2752 = vmatprep.subr.mxu0 0.0
    %2753 = vmatpush2.msra.mxu0 %v2682
    %2754 = vmatprep.subr.mxu0 0.0
    %2755 = vmatpush2.msra.mxu0 %v2681
    %2756 = vmatprep.subr.mxu0 0.0
    %2757 = vmatpush2.msra.mxu0 %v2680
    %2758 = vmatprep.subr.mxu0 0.0
    %2759 = vmatpush2.msra.mxu0 %v2679
    %2760 = vmatprep.subr.mxu0 0.0
    %2761 = vmatpush2.msra.mxu0 %v2678
    %2762 = vmatprep.subr.mxu0 0.0
    %2763 = vmatpush2.msra.mxu0 %v2677
    %2764 = vmatprep.mubr.f32.mxu0 %v2660
    %2765 = vmatmul.mubr.f32.gmra.mxu0 %v2659
    %v2766 = vpop.f32.mrf.mxu0
    %v2767 = vadd.f32 %v2698, %v2766
    %v2768 = vpop.f32.mrf.mxu0
    %2769 = vdwg.mxu0
    %2770 = vst [vmem:[%s7] sm:$0xff] %v2767
    // Predicated region
    $region46: #{forward.1} parent=1 // pred_check
      _
    $region47: #{forward.1} parent=1 // pred_check_branch
      %2772 = sbr.rel (0) target = $region49
    $region48: #{forward.1} parent=1 // pred_region
      _
    $region49: #{forward.1} parent=1 // pred_fallthru
      _
    // Predicated region
    $region50: #{forward.1} parent=1 // pred_check
      _
    $region51: #{forward.1} parent=1 // pred_check_branch
      %2774 = sbr.rel (0) target = $region53
    $region52: #{forward.1} parent=1 // pred_region
      _
    $region53: #{forward.1} parent=1 // pred_fallthru
      _
    %2775 = vsyncpa [#allocation6], 1
    %2776 = vsyncpa [#allocation7], 1
    %2777 = vsyncpa [#allocation9], 1

</llo_original>
